<compile_context>
chip_gen: v7x
topology: tpu7x:2x2x1
jax: 0.10.0
libtpu: 0.0.40
codegen_flags: <defaults>
</compile_context>

<pallas_src>
import functools

import jax
import jax.numpy as jnp
import numpy as np
from jax.experimental import pallas as pl
from jax.experimental.pallas import tpu as pltpu


def _inverted_residual_kernel(*refs, expand, stride, th, th_in, wp, w_out,
                              c_out, residual, zero_bottom, n_tiles):
    """One grid step == one (image, row-tile) pair, NHWC layout.

    expand=True refs : xw, w1, b1, dw, bdw, w3, b3, out, y1_scratch
    expand=False refs: xw, dw, bdw, w3, b3, out
    """
    if expand:
        (xw_ref, w1_ref, b1_ref, dw_ref, bdw_ref, w3_ref, b3_ref,
         o_ref, y1_ref) = refs
    else:
        xw_ref, dw_ref, bdw_ref, w3_ref, b3_ref, o_ref = refs

    r = pl.program_id(1)
    x = xw_ref[...].astype(jnp.float32)              # (th_in, wp, cin)

    if expand:
        cin = x.shape[-1]
        chid = w1_ref.shape[-1]
        # 1x1 expand conv + folded BN + ReLU: one MXU matmul for the tile.
        xf = x.reshape(th_in * wp, cin)
        y1 = jnp.dot(xf, w1_ref[...], preferred_element_type=jnp.float32)
        y1 = jnp.maximum(y1 + b1_ref[...], 0.0)
        y1_ref[...] = y1.reshape(th_in, wp, chid)
        # The depthwise conv zero-pads *its own* input (= y1), not x. Border
        # positions of this tile that correspond to conv padding must be
        # zeroed (x was 0 there, but bias + ReLU made y1 != 0).
        y1_ref[:, 0:1, :] = jnp.zeros((th_in, 1, chid), jnp.float32)
        y1_ref[:, wp - 1:wp, :] = jnp.zeros((th_in, 1, chid), jnp.float32)

        @pl.when(r == 0)
        def _():
            y1_ref[0:1, :, :] = jnp.zeros((1, wp, chid), jnp.float32)

        if zero_bottom:
            @pl.when(r == n_tiles - 1)
            def _():
                y1_ref[th_in - 1:th_in, :, :] = jnp.zeros((1, wp, chid),
                                                          jnp.float32)
        src = y1_ref[...]
    else:
        chid = x.shape[-1]
        src = x                                      # x already zero-padded

    # 3x3 depthwise conv (+ folded BN + ReLU): 9 VPU multiply-adds.
    dwv = dw_ref[...]                                # (9, chid)
    acc = jnp.zeros((th, w_out, chid), jnp.float32)
    for kh in range(3):
        for kw in range(3):
            patch = src[kh:kh + stride * (th - 1) + 1:stride,
                        kw:kw + stride * (w_out - 1) + 1:stride, :]
            acc = acc + patch * dwv[kh * 3 + kw:kh * 3 + kw + 1]
    y2 = jnp.maximum(acc + bdw_ref[...], 0.0)        # (th, w_out, chid)

    # 1x1 projection conv + folded BN: one MXU matmul for the tile.
    y2f = y2.reshape(th * w_out, chid)
    y3 = jnp.dot(y2f, w3_ref[...], preferred_element_type=jnp.float32)
    y3 = y3 + b3_ref[...]

    if residual:                                     # stride == 1, cin == cout
        xr = x[1:1 + th, 1:1 + w_out, :]
        y3 = y3 + xr.reshape(th * w_out, c_out)

    o_ref[...] = y3.reshape(th, w_out, c_out).astype(o_ref.dtype)


def inverted_residual(x_nchw, params, *, stride, expand_ratio, eps=1e-5,
                      row_tile=8):
    """Forward pass of InvertedResidual (eval-mode BN). Input/output NCHW."""
    n, cin, h, w = x_nchw.shape
    assert stride in (1, 2)
    expand = abs(expand_ratio - 1) >= 0.01
    hidden = int(cin * expand_ratio)
    oup = params["w_proj"].shape[0]
    residual = (stride == 1 and cin == oup)

    def fold(bn):
        gamma, beta, mean, var = bn
        s = gamma / jnp.sqrt(var + eps)
        return s.astype(jnp.float32), (beta - mean * s).astype(jnp.float32)

    if expand:
        s1, b1 = fold(params["bn1"])
        w1 = params["w_exp"].reshape(hidden, cin).T.astype(jnp.float32) * s1[None, :]
        b1 = b1.reshape(1, hidden)
        s2, b2 = fold(params["bn2"])
        dws = params["w_dw"].reshape(hidden, 9).T.astype(jnp.float32) * s2[None, :]
        bdw = b2.reshape(1, hidden)
        s3, b3 = fold(params["bn3"])
        w3 = params["w_proj"].reshape(oup, hidden).T.astype(jnp.float32) * s3[None, :]
        b3 = b3.reshape(1, oup)
        chid = hidden
    else:
        assert hidden == cin
        s1, b1 = fold(params["bn1"])
        dws = params["w_dw"].reshape(cin, 9).T.astype(jnp.float32) * s1[None, :]
        bdw = b1.reshape(1, cin)
        s2, b2 = fold(params["bn2"])
        w3 = params["w_proj"].reshape(oup, cin).T.astype(jnp.float32) * s2[None, :]
        b3 = b2.reshape(1, oup)
        chid = cin

    # NCHW -> NHWC, zero-pad spatial dims for the 3x3 depthwise (padding = 1).
    x_nhwc = jnp.transpose(x_nchw, (0, 2, 3, 1)).astype(jnp.float32)
    x_pad = jnp.pad(x_nhwc, ((0, 0), (1, 1), (1, 1), (0, 0)))
    hp, wp = h + 2, w + 2
    h_out = (h + 2 - 3) // stride + 1
    w_out = (w + 2 - 3) // stride + 1

    # Row tiling: pipeline depth + bounded per-step VMEM.  Each tile carries
    # its depthwise halo via overlapping row windows built wrapper-side.
    th = row_tile if (h_out % row_tile == 0) else h_out
    n_tiles = h_out // th
    th_in = stride * (th - 1) + 3
    windows = jnp.stack(
        [x_pad[:, r * th * stride: r * th * stride + th_in, :, :]
         for r in range(n_tiles)], axis=1)           # (n, n_tiles, th_in, wp, cin)

    # Is the bottom conv-padding row inside the last tile's window?
    zero_bottom = (stride * (h_out - 1) + 2) == (hp - 1)

    kern = functools.partial(
        _inverted_residual_kernel, expand=expand, stride=stride, th=th,
        th_in=th_in, wp=wp, w_out=w_out, c_out=oup, residual=residual,
        zero_bottom=zero_bottom, n_tiles=n_tiles)

    win_spec = pl.BlockSpec((None, None, th_in, wp, cin),
                            lambda i, r: (i, r, 0, 0, 0))
    out_spec = pl.BlockSpec((None, th, w_out, oup), lambda i, r: (i, r, 0, 0))

    def full2d(a):
        return pl.BlockSpec(a.shape, lambda i, r: (0, 0))

    if expand:
        in_specs = [win_spec, full2d(w1), full2d(b1), full2d(dws),
                    full2d(bdw), full2d(w3), full2d(b3)]
        inputs = (windows, w1, b1, dws, bdw, w3, b3)
        scratch = [pltpu.VMEM((th_in, wp, chid), jnp.float32)]
    else:
        in_specs = [win_spec, full2d(dws), full2d(bdw), full2d(w3), full2d(b3)]
        inputs = (windows, dws, bdw, w3, b3)
        scratch = []

    out_nhwc = pl.pallas_call(
        kern,
        out_shape=jax.ShapeDtypeStruct((n, h_out, w_out, oup), jnp.float32),
        grid=(n, n_tiles),
        in_specs=in_specs,
        out_specs=out_spec,
        scratch_shapes=scratch,
        compiler_params=pltpu.CompilerParams(
            dimension_semantics=("parallel", "parallel"),
            vmem_limit_bytes=32 * 1024 * 1024),
    )(*inputs)

    return jnp.transpose(out_nhwc, (0, 3, 1, 2))


def _make_params(key, inp, oup, expand_ratio):
    expand = abs(expand_ratio - 1) >= 0.01
    hidden = int(inp * expand_ratio)
    keys = jax.random.split(key, 6)

    def bn(k, c):
        k1, k2, k3, k4 = jax.random.split(k, 4)
        return (1.0 + 0.1 * jax.random.normal(k1, (c,), jnp.float32),
                0.1 * jax.random.normal(k2, (c,), jnp.float32),
                0.1 * jax.random.normal(k3, (c,), jnp.float32),
                jax.random.uniform(k4, (c,), jnp.float32, 0.5, 1.5))

    if expand:
        return {
            "w_exp": 0.2 * jax.random.normal(keys[0], (hidden, inp, 1, 1), jnp.float32),
            "bn1": bn(keys[1], hidden),
            "w_dw": 0.3 * jax.random.normal(keys[2], (hidden, 1, 3, 3), jnp.float32),
            "bn2": bn(keys[3], hidden),
            "w_proj": 0.2 * jax.random.normal(keys[4], (oup, hidden, 1, 1), jnp.float32),
            "bn3": bn(keys[5], oup),
        }
    return {
        "w_dw": 0.3 * jax.random.normal(keys[0], (inp, 1, 3, 3), jnp.float32),
        "bn1": bn(keys[1], inp),
        "w_proj": 0.2 * jax.random.normal(keys[2], (oup, inp, 1, 1), jnp.float32),
        "bn2": bn(keys[3], oup),
    }


def _reference(x, params, *, stride, expand_ratio, eps=1e-5):
    """Pure-JAX/XLA reference (same math, eval-mode BN)."""
    expand = abs(expand_ratio - 1) >= 0.01

    def bn(y, p):
        gamma, beta, mean, var = p
        s = gamma / jnp.sqrt(var + eps)
        b = beta - mean * s
        return y * s.reshape(1, -1, 1, 1) + b.reshape(1, -1, 1, 1)

    def conv(y, w, s=1, pad=0, groups=1):
        return jax.lax.conv_general_dilated(
            y, w, (s, s), ((pad, pad), (pad, pad)),
            dimension_numbers=("NCHW", "OIHW", "NCHW"),
            feature_group_count=groups)

    if expand:
        y = jax.nn.relu(bn(conv(x, params["w_exp"]), params["bn1"]))
        y = jax.nn.relu(bn(conv(y, params["w_dw"], s=stride, pad=1,
                                groups=params["w_dw"].shape[0]), params["bn2"]))
        y = bn(conv(y, params["w_proj"]), params["bn3"])
    else:
        y = jax.nn.relu(bn(conv(x, params["w_dw"], s=stride, pad=1,
                                groups=params["w_dw"].shape[0]), params["bn1"]))
        y = bn(conv(y, params["w_proj"]), params["bn2"])
    if stride == 1 and x.shape[1] == y.shape[1]:
        y = x + y
    return y


if __name__ == "__main__":
    key = jax.random.PRNGKey(0)
    k1, k2, k3, k4 = jax.random.split(key, 4)

    # Config 1: expanded branch with residual (stride=1, inp==oup),
    # hidden = 32 * 4 = 128 -> lane-dense matmuls / depthwise.
    x1 = jax.random.normal(k1, (2, 32, 16, 16), dtype=jnp.float32)
    p1 = _make_params(k2, 32, 32, 4)
    out1 = jax.block_until_ready(inverted_residual(x1, p1, stride=1,
                                                   expand_ratio=4))
    ref1 = _reference(x1, p1, stride=1, expand_ratio=4)
    np.testing.assert_allclose(np.asarray(out1), np.asarray(ref1),
                               rtol=5e-3, atol=5e-3)

    # Config 2: expand_ratio == 1 branch (depthwise first), stride 2.
    x2 = jax.random.normal(k3, (2, 16, 16, 16), dtype=jnp.float32)
    p2 = _make_params(k4, 16, 24, 1)
    out2 = jax.block_until_ready(inverted_residual(x2, p2, stride=2,
                                                   expand_ratio=1))
    ref2 = _reference(x2, p2, stride=2, expand_ratio=1)
    np.testing.assert_allclose(np.asarray(out2), np.asarray(ref2),
                               rtol=5e-3, atol=5e-3)

    print("KERNEL_OK")
</pallas_src>

<mosaic_0001>
module attributes {stable_mosaic.version = 11 : i64} {
  func.func @_inverted_residual_kernel(%arg0: i32, %arg1: i32, %arg2: memref<1x1x10x18x32xf32, #tpu.memory_space<vmem>>, %arg3: memref<32x128xf32, #tpu.memory_space<vmem>>, %arg4: memref<1x128xf32, #tpu.memory_space<vmem>>, %arg5: memref<9x128xf32, #tpu.memory_space<vmem>>, %arg6: memref<1x128xf32, #tpu.memory_space<vmem>>, %arg7: memref<128x32xf32, #tpu.memory_space<vmem>>, %arg8: memref<1x32xf32, #tpu.memory_space<vmem>>, %arg9: memref<1x8x16x32xf32, #tpu.memory_space<vmem>>, %arg10: memref<10x18x128xf32, #tpu.memory_space<vmem>>) attributes {dimension_semantics = [#tpu.dimension_semantics<parallel>, #tpu.dimension_semantics<parallel>], iteration_bounds = array<i64: 2, 2>, scalar_prefetch = 0 : i64, scratch_operands = 1 : i64, tpu.core_type = #tpu.core_type<tc>, window_params = [{transform_indices = @transform_0, window_bounds = array<i64: 1, 1, 10, 18, 32>}, {pipeline_mode = #tpu.pipeline_mode<synchronous>, transform_indices = @transform_1, window_bounds = array<i64: 32, 128>}, {pipeline_mode = #tpu.pipeline_mode<synchronous>, transform_indices = @transform_2, window_bounds = array<i64: 1, 128>}, {pipeline_mode = #tpu.pipeline_mode<synchronous>, transform_indices = @transform_3, window_bounds = array<i64: 9, 128>}, {pipeline_mode = #tpu.pipeline_mode<synchronous>, transform_indices = @transform_4, window_bounds = array<i64: 1, 128>}, {pipeline_mode = #tpu.pipeline_mode<synchronous>, transform_indices = @transform_5, window_bounds = array<i64: 128, 32>}, {pipeline_mode = #tpu.pipeline_mode<synchronous>, transform_indices = @transform_6, window_bounds = array<i64: 1, 32>}, {transform_indices = @transform_7, window_bounds = array<i64: 1, 8, 16, 32>}]} {
    %c0 = arith.constant 0 : index
    %c0_0 = arith.constant 0 : index
    %c0_1 = arith.constant 0 : index
    %c0_2 = arith.constant 0 : index
    %c0_3 = arith.constant 0 : index
    %0 = vector.load %arg2[%c0, %c0_0, %c0_1, %c0_2, %c0_3] : memref<1x1x10x18x32xf32, #tpu.memory_space<vmem>>, vector<1x1x10x18x32xf32>
    %1 = vector.shape_cast %0 : vector<1x1x10x18x32xf32> to vector<10x18x32xf32>
    %2 = vector.shape_cast %1 : vector<10x18x32xf32> to vector<180x32xf32>
    %c0_4 = arith.constant 0 : index
    %c0_5 = arith.constant 0 : index
    %3 = vector.load %arg3[%c0_4, %c0_5] : memref<32x128xf32, #tpu.memory_space<vmem>>, vector<32x128xf32>
    %cst = arith.constant dense<0.000000e+00> : vector<180x128xf32>
    %4 = tpu.matmul %2, %3, %cst {dimension_numbers = #tpu.dot_dimension_numbers<[1], [0], [0], [1], [0, 0, 1, 1], [], []>} : vector<180x32xf32>, vector<32x128xf32>, vector<180x128xf32> -> vector<180x128xf32>
    %c0_6 = arith.constant 0 : index
    %c0_7 = arith.constant 0 : index
    %5 = vector.load %arg4[%c0_6, %c0_7] : memref<1x128xf32, #tpu.memory_space<vmem>>, vector<1x128xf32>
    %6 = vector.broadcast %5 : vector<1x128xf32> to vector<180x128xf32>
    %7 = arith.addf %4, %6 : vector<180x128xf32>
    %cst_8 = arith.constant 0.000000e+00 : f32
    %8 = vector.broadcast %cst_8 : f32 to vector<180x128xf32>
    %9 = arith.maximumf %7, %8 : vector<180x128xf32>
    %10 = vector.shape_cast %9 : vector<180x128xf32> to vector<10x18x128xf32>
    %c0_9 = arith.constant 0 : index
    %c0_10 = arith.constant 0 : index
    %c0_11 = arith.constant 0 : index
    %11 = vector.load %arg10[%c0_9, %c0_10, %c0_11] : memref<10x18x128xf32, #tpu.memory_space<vmem>>, vector<10x18x128xf32>
    tpu.vector_store %arg10[%c0_9, %c0_10, %c0_11], %10 {strides = array<i32>} : memref<10x18x128xf32, #tpu.memory_space<vmem>>, vector<10x18x128xf32>,
    %cst_12 = arith.constant 0.000000e+00 : f32
    %12 = vector.broadcast %cst_12 : f32 to vector<10x1x128xf32>
    %c0_13 = arith.constant 0 : index
    %c0_14 = arith.constant 0 : index
    %c0_15 = arith.constant 0 : index
    %13 = vector.load %arg10[%c0_13, %c0_14, %c0_15] : memref<10x18x128xf32, #tpu.memory_space<vmem>>, vector<10x1x128xf32>
    tpu.vector_store %arg10[%c0_13, %c0_14, %c0_15], %12 {strides = array<i32>} : memref<10x18x128xf32, #tpu.memory_space<vmem>>, vector<10x1x128xf32>,
    %cst_16 = arith.constant 0.000000e+00 : f32
    %14 = vector.broadcast %cst_16 : f32 to vector<10x1x128xf32>
    %c0_17 = arith.constant 0 : index
    %c17 = arith.constant 17 : index
    %c0_18 = arith.constant 0 : index
    %15 = vector.load %arg10[%c0_17, %c17, %c0_18] : memref<10x18x128xf32, #tpu.memory_space<vmem>>, vector<10x1x128xf32>
    tpu.vector_store %arg10[%c0_17, %c17, %c0_18], %14 {strides = array<i32>} : memref<10x18x128xf32, #tpu.memory_space<vmem>>, vector<10x1x128xf32>,
    %c0_i32 = arith.constant 0 : i32
    %16 = arith.cmpi eq, %arg1, %c0_i32 : i32
    %17 = arith.extui %16 : i1 to i32
    %c0_i32_19 = arith.constant 0 : i32
    %18 = arith.cmpi ne, %17, %c0_i32_19 : i32
    scf.if %18 {
      %cst_39 = arith.constant 0.000000e+00 : f32
      %98 = vector.broadcast %cst_39 : f32 to vector<1x18x128xf32>
      %c0_40 = arith.constant 0 : index
      %c0_41 = arith.constant 0 : index
      %c0_42 = arith.constant 0 : index
      %99 = vector.load %arg10[%c0_40, %c0_41, %c0_42] : memref<10x18x128xf32, #tpu.memory_space<vmem>>, vector<1x18x128xf32>
      tpu.vector_store %arg10[%c0_40, %c0_41, %c0_42], %98 {strides = array<i32>} : memref<10x18x128xf32, #tpu.memory_space<vmem>>, vector<1x18x128xf32>,
    } else {
    }
    %c1_i32 = arith.constant 1 : i32
    %19 = arith.cmpi eq, %arg1, %c1_i32 : i32
    %20 = arith.extui %19 : i1 to i32
    %c0_i32_20 = arith.constant 0 : i32
    %21 = arith.cmpi ne, %20, %c0_i32_20 : i32
    scf.if %21 {
      %cst_39 = arith.constant 0.000000e+00 : f32
      %98 = vector.broadcast %cst_39 : f32 to vector<1x18x128xf32>
      %c9 = arith.constant 9 : index
      %c0_40 = arith.constant 0 : index
      %c0_41 = arith.constant 0 : index
      %99 = vector.load %arg10[%c9, %c0_40, %c0_41] : memref<10x18x128xf32, #tpu.memory_space<vmem>>, vector<1x18x128xf32>
      tpu.vector_store %arg10[%c9, %c0_40, %c0_41], %98 {strides = array<i32>} : memref<10x18x128xf32, #tpu.memory_space<vmem>>, vector<1x18x128xf32>,
    } else {
    }
    %c0_21 = arith.constant 0 : index
    %c0_22 = arith.constant 0 : index
    %c0_23 = arith.constant 0 : index
    %22 = vector.load %arg10[%c0_21, %c0_22, %c0_23] : memref<10x18x128xf32, #tpu.memory_space<vmem>>, vector<10x18x128xf32>
    %c0_24 = arith.constant 0 : index
    %c0_25 = arith.constant 0 : index
    %23 = vector.load %arg5[%c0_24, %c0_25] : memref<9x128xf32, #tpu.memory_space<vmem>>, vector<9x128xf32>
    %cst_26 = arith.constant 0.000000e+00 : f32
    %24 = vector.broadcast %cst_26 : f32 to vector<8x16x128xf32>
    %25 = vector.extract_strided_slice %22 {offsets = [0, 0, 0], sizes = [8, 16, 128], strides = [1, 1, 1]} : vector<10x18x128xf32> to vector<8x16x128xf32>
    %26 = vector.extract_strided_slice %23 {offsets = [0, 0], sizes = [1, 128], strides = [1, 1]} : vector<9x128xf32> to vector<1x128xf32>
    %27 = vector.shape_cast %26 : vector<1x128xf32> to vector<1x1x128xf32>
    %28 = vector.broadcast %27 : vector<1x1x128xf32> to vector<8x16x128xf32>
    %29 = arith.mulf %25, %28 : vector<8x16x128xf32>
    %30 = arith.addf %24, %29 : vector<8x16x128xf32>
    %31 = vector.extract_strided_slice %22 {offsets = [0, 1, 0], sizes = [8, 16, 128], strides = [1, 1, 1]} : vector<10x18x128xf32> to vector<8x16x128xf32>
    %32 = vector.extract_strided_slice %23 {offsets = [1, 0], sizes = [1, 128], strides = [1, 1]} : vector<9x128xf32> to vector<1x128xf32>
    %33 = vector.shape_cast %32 : vector<1x128xf32> to vector<1x1x128xf32>
    %34 = vector.broadcast %33 : vector<1x1x128xf32> to vector<8x16x128xf32>
    %35 = arith.mulf %31, %34 : vector<8x16x128xf32>
    %36 = arith.addf %30, %35 : vector<8x16x128xf32>
    %37 = vector.extract_strided_slice %22 {offsets = [0, 2, 0], sizes = [8, 16, 128], strides = [1, 1, 1]} : vector<10x18x128xf32> to vector<8x16x128xf32>
    %38 = vector.extract_strided_slice %23 {offsets = [2, 0], sizes = [1, 128], strides = [1, 1]} : vector<9x128xf32> to vector<1x128xf32>
    %39 = vector.shape_cast %38 : vector<1x128xf32> to vector<1x1x128xf32>
    %40 = vector.broadcast %39 : vector<1x1x128xf32> to vector<8x16x128xf32>
    %41 = arith.mulf %37, %40 : vector<8x16x128xf32>
    %42 = arith.addf %36, %41 : vector<8x16x128xf32>
    %43 = vector.extract_strided_slice %22 {offsets = [1, 0, 0], sizes = [8, 16, 128], strides = [1, 1, 1]} : vector<10x18x128xf32> to vector<8x16x128xf32>
    %44 = vector.extract_strided_slice %23 {offsets = [3, 0], sizes = [1, 128], strides = [1, 1]} : vector<9x128xf32> to vector<1x128xf32>
    %45 = vector.shape_cast %44 : vector<1x128xf32> to vector<1x1x128xf32>
    %46 = vector.broadcast %45 : vector<1x1x128xf32> to vector<8x16x128xf32>
    %47 = arith.mulf %43, %46 : vector<8x16x128xf32>
    %48 = arith.addf %42, %47 : vector<8x16x128xf32>
    %49 = vector.extract_strided_slice %22 {offsets = [1, 1, 0], sizes = [8, 16, 128], strides = [1, 1, 1]} : vector<10x18x128xf32> to vector<8x16x128xf32>
    %50 = vector.extract_strided_slice %23 {offsets = [4, 0], sizes = [1, 128], strides = [1, 1]} : vector<9x128xf32> to vector<1x128xf32>
    %51 = vector.shape_cast %50 : vector<1x128xf32> to vector<1x1x128xf32>
    %52 = vector.broadcast %51 : vector<1x1x128xf32> to vector<8x16x128xf32>
    %53 = arith.mulf %49, %52 : vector<8x16x128xf32>
    %54 = arith.addf %48, %53 : vector<8x16x128xf32>
    %55 = vector.extract_strided_slice %22 {offsets = [1, 2, 0], sizes = [8, 16, 128], strides = [1, 1, 1]} : vector<10x18x128xf32> to vector<8x16x128xf32>
    %56 = vector.extract_strided_slice %23 {offsets = [5, 0], sizes = [1, 128], strides = [1, 1]} : vector<9x128xf32> to vector<1x128xf32>
    %57 = vector.shape_cast %56 : vector<1x128xf32> to vector<1x1x128xf32>
    %58 = vector.broadcast %57 : vector<1x1x128xf32> to vector<8x16x128xf32>
    %59 = arith.mulf %55, %58 : vector<8x16x128xf32>
    %60 = arith.addf %54, %59 : vector<8x16x128xf32>
    %61 = vector.extract_strided_slice %22 {offsets = [2, 0, 0], sizes = [8, 16, 128], strides = [1, 1, 1]} : vector<10x18x128xf32> to vector<8x16x128xf32>
    %62 = vector.extract_strided_slice %23 {offsets = [6, 0], sizes = [1, 128], strides = [1, 1]} : vector<9x128xf32> to vector<1x128xf32>
    %63 = vector.shape_cast %62 : vector<1x128xf32> to vector<1x1x128xf32>
    %64 = vector.broadcast %63 : vector<1x1x128xf32> to vector<8x16x128xf32>
    %65 = arith.mulf %61, %64 : vector<8x16x128xf32>
    %66 = arith.addf %60, %65 : vector<8x16x128xf32>
    %67 = vector.extract_strided_slice %22 {offsets = [2, 1, 0], sizes = [8, 16, 128], strides = [1, 1, 1]} : vector<10x18x128xf32> to vector<8x16x128xf32>
    %68 = vector.extract_strided_slice %23 {offsets = [7, 0], sizes = [1, 128], strides = [1, 1]} : vector<9x128xf32> to vector<1x128xf32>
    %69 = vector.shape_cast %68 : vector<1x128xf32> to vector<1x1x128xf32>
    %70 = vector.broadcast %69 : vector<1x1x128xf32> to vector<8x16x128xf32>
    %71 = arith.mulf %67, %70 : vector<8x16x128xf32>
    %72 = arith.addf %66, %71 : vector<8x16x128xf32>
    %73 = vector.extract_strided_slice %22 {offsets = [2, 2, 0], sizes = [8, 16, 128], strides = [1, 1, 1]} : vector<10x18x128xf32> to vector<8x16x128xf32>
    %74 = vector.extract_strided_slice %23 {offsets = [8, 0], sizes = [1, 128], strides = [1, 1]} : vector<9x128xf32> to vector<1x128xf32>
    %75 = vector.shape_cast %74 : vector<1x128xf32> to vector<1x1x128xf32>
    %76 = vector.broadcast %75 : vector<1x1x128xf32> to vector<8x16x128xf32>
    %77 = arith.mulf %73, %76 : vector<8x16x128xf32>
    %78 = arith.addf %72, %77 : vector<8x16x128xf32>
    %c0_27 = arith.constant 0 : index
    %c0_28 = arith.constant 0 : index
    %79 = vector.load %arg6[%c0_27, %c0_28] : memref<1x128xf32, #tpu.memory_space<vmem>>, vector<1x128xf32>
    %80 = vector.shape_cast %79 : vector<1x128xf32> to vector<1x1x128xf32>
    %81 = vector.broadcast %80 : vector<1x1x128xf32> to vector<8x16x128xf32>
    %82 = arith.addf %78, %81 : vector<8x16x128xf32>
    %cst_29 = arith.constant 0.000000e+00 : f32
    %83 = vector.broadcast %cst_29 : f32 to vector<8x16x128xf32>
    %84 = arith.maximumf %82, %83 : vector<8x16x128xf32>
    %85 = vector.shape_cast %84 : vector<8x16x128xf32> to vector<128x128xf32>
    %c0_30 = arith.constant 0 : index
    %c0_31 = arith.constant 0 : index
    %86 = vector.load %arg7[%c0_30, %c0_31] : memref<128x32xf32, #tpu.memory_space<vmem>>, vector<128x32xf32>
    %cst_32 = arith.constant dense<0.000000e+00> : vector<128x32xf32>
    %87 = tpu.matmul %85, %86, %cst_32 {dimension_numbers = #tpu.dot_dimension_numbers<[1], [0], [0], [1], [0, 0, 1, 1], [], []>} : vector<128x128xf32>, vector<128x32xf32>, vector<128x32xf32> -> vector<128x32xf32>
    %c0_33 = arith.constant 0 : index
    %c0_34 = arith.constant 0 : index
    %88 = vector.load %arg8[%c0_33, %c0_34] : memref<1x32xf32, #tpu.memory_space<vmem>>, vector<1x32xf32>
    %89 = vector.broadcast %88 : vector<1x32xf32> to vector<128x32xf32>
    %90 = arith.addf %87, %89 : vector<128x32xf32>
    %91 = vector.extract_strided_slice %1 {offsets = [1, 1, 0], sizes = [8, 16, 32], strides = [1, 1, 1]} : vector<10x18x32xf32> to vector<8x16x32xf32>
    %92 = vector.shape_cast %91 : vector<8x16x32xf32> to vector<128x32xf32>
    %93 = arith.addf %90, %92 : vector<128x32xf32>
    %94 = vector.shape_cast %93 : vector<128x32xf32> to vector<8x16x32xf32>
    %c0_35 = arith.constant 0 : index
    %c0_36 = arith.constant 0 : index
    %c0_37 = arith.constant 0 : index
    %c0_38 = arith.constant 0 : index
    %95 = vector.load %arg9[%c0_35, %c0_36, %c0_37, %c0_38] : memref<1x8x16x32xf32, #tpu.memory_space<vmem>>, vector<1x8x16x32xf32>
    %96 = vector.shape_cast %95 : vector<1x8x16x32xf32> to vector<8x16x32xf32>
    %97 = vector.shape_cast %94 : vector<8x16x32xf32> to vector<1x8x16x32xf32>
    tpu.vector_store %arg9[%c0_35, %c0_36, %c0_37, %c0_38], %97 {strides = array<i32>} : memref<1x8x16x32xf32, #tpu.memory_space<vmem>>, vector<1x8x16x32xf32>,
    return
  }
  func.func @transform_0(%arg0: i32, %arg1: i32) -> (i32, i32, i32, i32, i32) {
    %c0_i32 = arith.constant 0 : i32
    %c0_i32_0 = arith.constant 0 : i32
    %c0_i32_1 = arith.constant 0 : i32
    %c0_i32_2 = arith.constant 0 : i32
    return %arg0, %arg1, %c0_i32, %c0_i32_0, %c0_i32_1 : i32, i32, i32, i32, i32
  }
  func.func @transform_1(%arg0: i32, %arg1: i32) -> (i32, i32) {
    %c0_i32 = arith.constant 0 : i32
    %c0_i32_0 = arith.constant 0 : i32
    %c0_i32_1 = arith.constant 0 : i32
    return %c0_i32, %c0_i32_0 : i32, i32
  }
  func.func @transform_2(%arg0: i32, %arg1: i32) -> (i32, i32) {
    %c0_i32 = arith.constant 0 : i32
    %c0_i32_0 = arith.constant 0 : i32
    %c0_i32_1 = arith.constant 0 : i32
    return %c0_i32, %c0_i32_0 : i32, i32
  }
  func.func @transform_3(%arg0: i32, %arg1: i32) -> (i32, i32) {
    %c0_i32 = arith.constant 0 : i32
    %c0_i32_0 = arith.constant 0 : i32
    %c0_i32_1 = arith.constant 0 : i32
    return %c0_i32, %c0_i32_0 : i32, i32
  }
  func.func @transform_4(%arg0: i32, %arg1: i32) -> (i32, i32) {
    %c0_i32 = arith.constant 0 : i32
    %c0_i32_0 = arith.constant 0 : i32
    %c0_i32_1 = arith.constant 0 : i32
    return %c0_i32, %c0_i32_0 : i32, i32
  }
  func.func @transform_5(%arg0: i32, %arg1: i32) -> (i32, i32) {
    %c0_i32 = arith.constant 0 : i32
    %c0_i32_0 = arith.constant 0 : i32
    %c0_i32_1 = arith.constant 0 : i32
    return %c0_i32, %c0_i32_0 : i32, i32
  }
  func.func @transform_6(%arg0: i32, %arg1: i32) -> (i32, i32) {
    %c0_i32 = arith.constant 0 : i32
    %c0_i32_0 = arith.constant 0 : i32
    %c0_i32_1 = arith.constant 0 : i32
    return %c0_i32, %c0_i32_0 : i32, i32
  }
  func.func @transform_7(%arg0: i32, %arg1: i32) -> (i32, i32, i32, i32) {
    %c0_i32 = arith.constant 0 : i32
    %c0_i32_0 = arith.constant 0 : i32
    %c0_i32_1 = arith.constant 0 : i32
    return %arg0, %arg1, %c0_i32, %c0_i32_0 : i32, i32, i32, i32
  }
}

</mosaic_0001>

<llo_original>
// kernel: tpu_custom_call.1
$region0: #{tpu_custom_call.1}
  #allocation0 [shape = 'u32[]', space=smem, size = 0x4, offset = 0x4, fixed_abs, tag = 'smem constant byte address 0x4 - core index']
  #allocation1 [shape = 'u32[144,128]{1,0:T(1,128)}', space=vmem, size = 0x12000, scoped, tag = 'internal scratch']
  #allocation2 [shape = 'f32[10,18,128]{2,1,0:T(8,128)}', space=vmem, size = 0x1e000, scoped, tag = 'scratch operand']
  %s0 = inlined_call_operand.vmem [shape: f32[2,2,10,18,32], index: 0, kind: input, shape index: {}]
  %s1 = inlined_call_operand.vmem [shape: f32[32,128], index: 1, kind: input, shape index: {}]
  %s2 = inlined_call_operand.vmem [shape: f32[1,128], index: 2, kind: input, shape index: {}]
  %s3 = inlined_call_operand.vmem [shape: f32[9,128], index: 3, kind: input, shape index: {}]
  %s4 = inlined_call_operand.vmem [shape: f32[1,128], index: 4, kind: input, shape index: {}]
  %s5 = inlined_call_operand.vmem [shape: f32[128,32], index: 5, kind: input, shape index: {}]
  %s6 = inlined_call_operand.vmem [shape: f32[1,32], index: 6, kind: input, shape index: {}]
  %s7 = inlined_call_operand.hbm [shape: f32[2,16,16,32], index: 7, kind: output, shape index: {}]
  %s8 = sld [smem:[#allocation0]]
  $region69: #{tpu_custom_call.1} parent=0
    _
  %s10 = ssub.s32 1, %s8
  %s11 = scalar_select 0, %s10, %s8
  $region1: #{tpu_custom_call.1} parent=0
    #allocation3 [shape = 'u8[131072]{0}', space=vmem, size = 0x20000, scoped, tag = 'output window, operand 0']
    #allocation4 [shape = 's32[2]{0}', space=sflag, size = 0x8, scoped, tag = 'scoped memory for tpu_custom_call.1']
    %12 = vsyncpa [#allocation4], 0
    %s13 = scalar_lea.sflag [#allocation4], 1
    %14 = vsyncpa %s13, 0
    loop: start=0, step=1, limit=6
    $region2: #{tpu_custom_call.1} parent=1 // loop_pre_header
      _
    $region3: #{tpu_custom_call.1} parent=1 // loop_header
      %s16 = sphi 0, %s20
      %p17 = scmp.ge.s32.totalorder %s16, 6
      %s23 = sphi 0, %s35
      %s24 = sphi 0, %s31
      %s25 = sphi 0, %s23
      %s26 = sphi 0, %s24
      %s27 = sphi 0, %s25
      %s28 = sphi 0, %s26
      %s40 = sphi 0, %s42
      %s43 = sphi 0, %s40
      %s44 = sphi 0, %s43
      %s60 = sphi 0, %s44
      %s64 = sphi 0, %s64
      %s66 = sphi 0, %s64
      %s67 = sphi 0, %s66
      %s81 = sphi 0, %s67
      %s85 = sphi 0, %s85
      %s87 = sphi 0, %s85
      %s88 = sphi 0, %s87
      %s102 = sphi 0, %s88
      %s106 = sphi 0, %s106
      %s108 = sphi 0, %s106
      %s109 = sphi 0, %s108
      %s123 = sphi 0, %s109
      %s127 = sphi 0, %s127
      %s129 = sphi 0, %s127
      %s130 = sphi 0, %s129
      %s144 = sphi 0, %s130
      %s148 = sphi 0, %s148
      %s150 = sphi 0, %s148
      %s151 = sphi 0, %s150
      %s165 = sphi 0, %s151
      %s169 = sphi 0, %s169
      %s171 = sphi 0, %s169
      %s172 = sphi 0, %s171
      %s186 = sphi 0, %s172
      %s194 = sphi 0, %s196
      %s197 = sphi 0, %s194
      %s198 = sphi 0, %s197
      %s214 = sphi 0, %s198
    $region4: #{tpu_custom_call.1} parent=1 // loop_header_branch
      %19 = sbr.rel (%p17) target = $region8
    $region5: #{tpu_custom_call.1} parent=1 // loop_body
      %s21 = ssub.s32 %s16, 1
      %s22 = ssub.s32 %s16, 2
      %s29 = sadd.s32 1, %s24
      %p30 = scmp.ge.s32.totalorder %s29, 2
      %s31 = scalar_select %p30, 0, %s29
      %s32 = sadd.s32 1, %s23
      %s33 = scalar_select %p30, %s32, %s23
      %p34 = scmp.ge.s32.totalorder %s33, 2
      %s35 = scalar_select %p34, 0, %s33
      %s36 = ssub.s32 %s23, %s35
      %s37 = ssub.s32 %s24, %s31
      %s38 = sor.u32 %s36, %s37
      %p39 = scmp.eq.s32.totalorder %s38, 0
      %s41 = sadd.s32 %s40, 1
      %s42 = scalar_select %p39, %s40, %s41
      %p45 = pneg %p39
      %p46 = scmp.eq.s32.totalorder %s16, 3
      %p47 = por %p45, %p46
      %p48 = scmp.ne.s32.totalorder %s40, %s43
      %p49 = scmp.eq.s32.totalorder %s16, 0
      %p50 = por %p48, %p49
      %p51 = scmp.ne.s32.totalorder %s40, %s43
      %p52 = scmp.eq.s32.totalorder %s21, 3
      %p53 = por %p51, %p52
      %p54 = scmp.ne.s32.totalorder %s43, %s44
      %p55 = scmp.eq.s32.totalorder %s21, 0
      %p56 = por %p54, %p55
      %p57 = scmp.ne.s32.totalorder %s43, %s44
      %p58 = scmp.eq.s32.totalorder %s22, 3
      %p59 = por %p57, %p58
      %p61 = scmp.ne.s32.totalorder %s44, %s60
      %p62 = scmp.eq.s32.totalorder %s22, 0
      %p63 = por %p61, %p62
      %s65 = sadd.s32 %s64, 1
      %p68 = scmp.eq.s32.totalorder %s16, 3
      %p69 = scmp.ne.s32.totalorder %s64, %s66
      %p70 = scmp.eq.s32.totalorder %s16, 0
      %p71 = por %p69, %p70
      %p72 = scmp.ne.s32.totalorder %s64, %s66
      %p73 = scmp.eq.s32.totalorder %s21, 3
      %p74 = por %p72, %p73
      %p75 = scmp.ne.s32.totalorder %s66, %s67
      %p76 = scmp.eq.s32.totalorder %s21, 0
      %p77 = por %p75, %p76
      %p78 = scmp.ne.s32.totalorder %s66, %s67
      %p79 = scmp.eq.s32.totalorder %s22, 3
      %p80 = por %p78, %p79
      %p82 = scmp.ne.s32.totalorder %s67, %s81
      %p83 = scmp.eq.s32.totalorder %s22, 0
      %p84 = por %p82, %p83
      %s86 = sadd.s32 %s85, 1
      %p89 = scmp.eq.s32.totalorder %s16, 3
      %p90 = scmp.ne.s32.totalorder %s85, %s87
      %p91 = scmp.eq.s32.totalorder %s16, 0
      %p92 = por %p90, %p91
      %p93 = scmp.ne.s32.totalorder %s85, %s87
      %p94 = scmp.eq.s32.totalorder %s21, 3
      %p95 = por %p93, %p94
      %p96 = scmp.ne.s32.totalorder %s87, %s88
      %p97 = scmp.eq.s32.totalorder %s21, 0
      %p98 = por %p96, %p97
      %p99 = scmp.ne.s32.totalorder %s87, %s88
      %p100 = scmp.eq.s32.totalorder %s22, 3
      %p101 = por %p99, %p100
      %p103 = scmp.ne.s32.totalorder %s88, %s102
      %p104 = scmp.eq.s32.totalorder %s22, 0
      %p105 = por %p103, %p104
      %s107 = sadd.s32 %s106, 1
      %p110 = scmp.eq.s32.totalorder %s16, 3
      %p111 = scmp.ne.s32.totalorder %s106, %s108
      %p112 = scmp.eq.s32.totalorder %s16, 0
      %p113 = por %p111, %p112
      %p114 = scmp.ne.s32.totalorder %s106, %s108
      %p115 = scmp.eq.s32.totalorder %s21, 3
      %p116 = por %p114, %p115
      %p117 = scmp.ne.s32.totalorder %s108, %s109
      %p118 = scmp.eq.s32.totalorder %s21, 0
      %p119 = por %p117, %p118
      %p120 = scmp.ne.s32.totalorder %s108, %s109
      %p121 = scmp.eq.s32.totalorder %s22, 3
      %p122 = por %p120, %p121
      %p124 = scmp.ne.s32.totalorder %s109, %s123
      %p125 = scmp.eq.s32.totalorder %s22, 0
      %p126 = por %p124, %p125
      %s128 = sadd.s32 %s127, 1
      %p131 = scmp.eq.s32.totalorder %s16, 3
      %p132 = scmp.ne.s32.totalorder %s127, %s129
      %p133 = scmp.eq.s32.totalorder %s16, 0
      %p134 = por %p132, %p133
      %p135 = scmp.ne.s32.totalorder %s127, %s129
      %p136 = scmp.eq.s32.totalorder %s21, 3
      %p137 = por %p135, %p136
      %p138 = scmp.ne.s32.totalorder %s129, %s130
      %p139 = scmp.eq.s32.totalorder %s21, 0
      %p140 = por %p138, %p139
      %p141 = scmp.ne.s32.totalorder %s129, %s130
      %p142 = scmp.eq.s32.totalorder %s22, 3
      %p143 = por %p141, %p142
      %p145 = scmp.ne.s32.totalorder %s130, %s144
      %p146 = scmp.eq.s32.totalorder %s22, 0
      %p147 = por %p145, %p146
      %s149 = sadd.s32 %s148, 1
      %p152 = scmp.eq.s32.totalorder %s16, 3
      %p153 = scmp.ne.s32.totalorder %s148, %s150
      %p154 = scmp.eq.s32.totalorder %s16, 0
      %p155 = por %p153, %p154
      %p156 = scmp.ne.s32.totalorder %s148, %s150
      %p157 = scmp.eq.s32.totalorder %s21, 3
      %p158 = por %p156, %p157
      %p159 = scmp.ne.s32.totalorder %s150, %s151
      %p160 = scmp.eq.s32.totalorder %s21, 0
      %p161 = por %p159, %p160
      %p162 = scmp.ne.s32.totalorder %s150, %s151
      %p163 = scmp.eq.s32.totalorder %s22, 3
      %p164 = por %p162, %p163
      %p166 = scmp.ne.s32.totalorder %s151, %s165
      %p167 = scmp.eq.s32.totalorder %s22, 0
      %p168 = por %p166, %p167
      %s170 = sadd.s32 %s169, 1
      %p173 = scmp.eq.s32.totalorder %s16, 3
      %p174 = scmp.ne.s32.totalorder %s169, %s171
      %p175 = scmp.eq.s32.totalorder %s16, 0
      %p176 = por %p174, %p175
      %p177 = scmp.ne.s32.totalorder %s169, %s171
      %p178 = scmp.eq.s32.totalorder %s21, 3
      %p179 = por %p177, %p178
      %p180 = scmp.ne.s32.totalorder %s171, %s172
      %p181 = scmp.eq.s32.totalorder %s21, 0
      %p182 = por %p180, %p181
      %p183 = scmp.ne.s32.totalorder %s171, %s172
      %p184 = scmp.eq.s32.totalorder %s22, 3
      %p185 = por %p183, %p184
      %p187 = scmp.ne.s32.totalorder %s172, %s186
      %p188 = scmp.eq.s32.totalorder %s22, 0
      %p189 = por %p187, %p188
      %s190 = ssub.s32 %s23, %s35
      %s191 = ssub.s32 %s24, %s31
      %s192 = sor.u32 %s190, %s191
      %p193 = scmp.eq.s32.totalorder %s192, 0
      %s195 = sadd.s32 %s194, 1
      %s196 = scalar_select %p193, %s194, %s195
      %p199 = pneg %p193
      %p200 = scmp.eq.s32.totalorder %s16, 3
      %p201 = por %p199, %p200
      %p202 = scmp.ne.s32.totalorder %s194, %s197
      %p203 = scmp.eq.s32.totalorder %s16, 0
      %p204 = por %p202, %p203
      %p205 = scmp.ne.s32.totalorder %s194, %s197
      %p206 = scmp.eq.s32.totalorder %s21, 3
      %p207 = por %p205, %p206
      %p208 = scmp.ne.s32.totalorder %s197, %s198
      %p209 = scmp.eq.s32.totalorder %s21, 0
      %p210 = por %p208, %p209
      %p211 = scmp.ne.s32.totalorder %s197, %s198
      %p212 = scmp.eq.s32.totalorder %s22, 3
      %p213 = por %p211, %p212
      %p215 = scmp.ne.s32.totalorder %s198, %s214
      %p216 = scmp.eq.s32.totalorder %s22, 0
      %p217 = por %p215, %p216
      %p218 = scmp.le.s32.totalorder 1, %s16
      %p219 = scmp.lt.s32.totalorder %s16, 5
      %p220 = pnand %p218, %p219
      %p221 = pneg %p220
      // Predicated region
      $region9: #{tpu_custom_call.1} parent=5 // pred_check
        _
      $region10: #{tpu_custom_call.1} parent=5 // pred_check_branch
        %223 = sbr.rel (%p220) target = $region12
      $region11: #{tpu_custom_call.1} parent=5 // pred_region
        %s224 = ssub.s32 %s16, 1
        // Predicated region
        $region13: #{tpu_custom_call.1} parent=11 // pred_check
          %p225 = pneg %p77
        $region14: #{tpu_custom_call.1} parent=11 // pred_check_branch
          %227 = sbr.rel (%p225) target = $region16
        $region15: #{tpu_custom_call.1} parent=11 // pred_region
          _
        $region16: #{tpu_custom_call.1} parent=11 // pred_fallthru
          _
        // Predicated region
        $region17: #{tpu_custom_call.1} parent=11 // pred_check
          %p228 = pneg %p98
        $region18: #{tpu_custom_call.1} parent=11 // pred_check_branch
          %230 = sbr.rel (%p228) target = $region20
        $region19: #{tpu_custom_call.1} parent=11 // pred_region
          _
        $region20: #{tpu_custom_call.1} parent=11 // pred_fallthru
          _
        // Predicated region
        $region21: #{tpu_custom_call.1} parent=11 // pred_check
          %p231 = pneg %p119
        $region22: #{tpu_custom_call.1} parent=11 // pred_check_branch
          %233 = sbr.rel (%p231) target = $region24
        $region23: #{tpu_custom_call.1} parent=11 // pred_region
          _
        $region24: #{tpu_custom_call.1} parent=11 // pred_fallthru
          _
        // Predicated region
        $region25: #{tpu_custom_call.1} parent=11 // pred_check
          %p234 = pneg %p140
        $region26: #{tpu_custom_call.1} parent=11 // pred_check_branch
          %236 = sbr.rel (%p234) target = $region28
        $region27: #{tpu_custom_call.1} parent=11 // pred_region
          _
        $region28: #{tpu_custom_call.1} parent=11 // pred_fallthru
          _
        // Predicated region
        $region29: #{tpu_custom_call.1} parent=11 // pred_check
          %p237 = pneg %p161
        $region30: #{tpu_custom_call.1} parent=11 // pred_check_branch
          %239 = sbr.rel (%p237) target = $region32
        $region31: #{tpu_custom_call.1} parent=11 // pred_region
          _
        $region32: #{tpu_custom_call.1} parent=11 // pred_fallthru
          _
        // Predicated region
        $region33: #{tpu_custom_call.1} parent=11 // pred_check
          %p240 = pneg %p182
        $region34: #{tpu_custom_call.1} parent=11 // pred_check_branch
          %242 = sbr.rel (%p240) target = $region36
        $region35: #{tpu_custom_call.1} parent=11 // pred_region
          _
        $region36: #{tpu_custom_call.1} parent=11 // pred_fallthru
          _
      $region12: #{tpu_custom_call.1} parent=5 // pred_fallthru
        _
      %p243 = scmp.lt.s32.totalorder %s16, 4
      // Predicated region
      $region37: #{tpu_custom_call.1} parent=5 // pred_check
        %p244 = pneg %p243
      $region38: #{tpu_custom_call.1} parent=5 // pred_check_branch
        %246 = sbr.rel (%p244) target = $region40
      $region39: #{tpu_custom_call.1} parent=5 // pred_region
        // Predicated region
        $region41: #{tpu_custom_call.1} parent=39 // pred_check
          %p247 = pneg %p50
        $region42: #{tpu_custom_call.1} parent=39 // pred_check_branch
          %249 = sbr.rel (%p247) target = $region44
        $region43: #{tpu_custom_call.1} parent=39 // pred_region
          %p250 = scmp.lt.s32.totalorder %s23, 1
          %s251 = scalar_select %p250, %s23, 1
          %p252 = scmp.lt.s32.totalorder %s24, 1
          %s253 = scalar_select %p252, %s24, 1
          %s254 = smul.addr %s253, 30
          %s255 = smul.addr %s251, 60
          %s256 = sadd.s32 %s254, %s255
          %s257 = smul.addr %s256, 8
          %s258 = scalar_lea.vmem %s0, %s257
        $region44: #{tpu_custom_call.1} parent=39 // pred_fallthru
          _
      $region40: #{tpu_custom_call.1} parent=5 // pred_fallthru
        _
      %p259 = scmp.le.s32.totalorder 1, %s16
      %p260 = scmp.lt.s32.totalorder %s16, 5
      %p261 = pnand %p259, %p260
      %p262 = pneg %p261
      // Predicated region
      $region45: #{tpu_custom_call.1} parent=5 // pred_check
        _
      $region46: #{tpu_custom_call.1} parent=5 // pred_check_branch
        %264 = sbr.rel (%p261) target = $region48
      $region47: #{tpu_custom_call.1} parent=5 // pred_region
        %s265 = ssub.s32 %s16, 1
        %p266 = scmp.lt.s32.totalorder %s25, 1
        %s267 = scalar_select %p266, %s25, 1
        %p268 = scmp.lt.s32.totalorder %s26, 1
        %s269 = scalar_select %p268, %s26, 1
        %s270 = smul.addr %s269, 30
        %s271 = smul.addr %s267, 60
        %s272 = sadd.s32 %s270, %s271
        %s273 = smul.addr %s272, 8
        %s274 = scalar_lea.vmem %s0, %s273
        %p275 = pneg %p56
        %p276 = pneg %p53
        %p277 = pneg %p77
        %p278 = pneg %p74
        %p279 = pneg %p98
        %p280 = pneg %p95
        %p281 = pneg %p119
        %p282 = pneg %p116
        %p283 = pneg %p140
        %p284 = pneg %p137
        %p285 = pneg %p161
        %p286 = pneg %p158
        %p287 = pneg %p182
        %p288 = pneg %p179
        %p289 = pneg %p210
        %p290 = pneg %p207
        %s291 = sand.u32 %s197, 1
        %s292 = scalar_lea.sflag [#allocation4], %s291
        %s293 = sand.u32 %s197, 1
        %s294 = smul.addr %s293, 128
        %s295 = scalar_lea.vmem [#allocation3], %s294
        %p296 = scmp.lt.s32.totalorder %s25, 1
        %s297 = scalar_select %p296, %s25, 1
        %p298 = scmp.lt.s32.totalorder %s26, 1
        %s299 = scalar_select %p298, %s26, 1
        %s300 = smul.addr %s299, 30
        %s301 = smul.addr %s297, 60
        %s302 = sadd.s32 %s300, %s301
        %s303 = smul.addr %s302, 8
        %s304 = scalar_lea.vmem %s0, %s303
        %s305 = smul.u32 8, %s26
        %v306 = vld [vmem:[%s304] sm:$0xff]
        %v307 = vld [vmem:[%s304 + $0x8] sm:$0xff]
        %v308 = vld [vmem:[%s304 + $0x10] sm:$0x3]
        %v309 = vld [vmem:[%s304 + $0x18] sm:$0xff]
        %v310 = vld [vmem:[%s304 + $0x20] sm:$0xff]
        %v311 = vld [vmem:[%s304 + $0x28] sm:$0x3]
        %v312 = vld [vmem:[%s304 + $0x30] sm:$0xff]
        %v313 = vld [vmem:[%s304 + $0x38] sm:$0xff]
        %v314 = vld [vmem:[%s304 + $0x40] sm:$0x3]
        %v315 = vld [vmem:[%s304 + $0x48] sm:$0xff]
        %v316 = vld [vmem:[%s304 + $0x50] sm:$0xff]
        %v317 = vld [vmem:[%s304 + $0x58] sm:$0x3]
        %v318 = vld [vmem:[%s304 + $0x60] sm:$0xff]
        %v319 = vld [vmem:[%s304 + $0x68] sm:$0xff]
        %v320 = vld [vmem:[%s304 + $0x70] sm:$0x3]
        %v321 = vld [vmem:[%s304 + $0x78] sm:$0xff]
        %v322 = vld [vmem:[%s304 + $0x80] sm:$0xff]
        %v323 = vld [vmem:[%s304 + $0x88] sm:$0x3]
        %v324 = vld [vmem:[%s304 + $0x90] sm:$0xff]
        %v325 = vld [vmem:[%s304 + $0x98] sm:$0xff]
        %v326 = vld [vmem:[%s304 + $0xa0] sm:$0x3]
        %v327 = vld [vmem:[%s304 + $0xa8] sm:$0xff]
        %v328 = vld [vmem:[%s304 + $0xb0] sm:$0xff]
        %v329 = vld [vmem:[%s304 + $0xb8] sm:$0x3]
        %v330 = vld [vmem:[%s304 + $0xc0] sm:$0xff]
        %v331 = vld [vmem:[%s304 + $0xc8] sm:$0xff]
        %v332 = vld [vmem:[%s304 + $0xd0] sm:$0x3]
        %v333 = vld [vmem:[%s304 + $0xd8] sm:$0xff]
        %v334 = vld [vmem:[%s304 + $0xe0] sm:$0xff]
        %v335 = vld [vmem:[%s304 + $0xe8] sm:$0x3]
        %v366 = vcombine.high %v306, %v306
        %v368 = vunpack.c.l.s4 1983009808
        %v369 = vunpack.c.0.s8 %v368
        %v370 = vlaneseq
        %v371 = vshrl.u32 %v370, 7
        %v372 = vsub.s32 %v369, %v371
        %v373 = vrot.slane %v306, %v372
        %v375 = vunpack.c.l.s4 1983009808
        %v376 = vunpack.c.0.s8 %v375
        %v377 = vlaneseq
        %v378 = vshrl.u32 %v377, 7
        %v379 = vsub.s32 %v376, %v378
        %v380 = vrot.slane %v366, %v379
        %v381 = vcombine.high %v373, %v373
        %v382 = vcombine.high %v380, %v380
        %v383 = vcombine.high %v307, %v307
        %v385 = vunpack.c.l.s4 1983009808
        %v386 = vunpack.c.0.s8 %v385
        %v387 = vlaneseq
        %v388 = vshrl.u32 %v387, 7
        %v389 = vsub.s32 %v386, %v388
        %v390 = vrot.slane %v307, %v389
        %v392 = vunpack.c.l.s4 1983009808
        %v393 = vunpack.c.0.s8 %v392
        %v394 = vlaneseq
        %v395 = vshrl.u32 %v394, 7
        %v396 = vsub.s32 %v393, %v395
        %v397 = vrot.slane %v383, %v396
        %v398 = vcombine.high %v390, %v390
        %v399 = vcombine.high %v397, %v397
        %v401 = vunpack.c.l.s4 1983009808
        %v402 = vunpack.c.0.s8 %v401
        %v403 = vlaneseq
        %v404 = vshrl.u32 %v403, 7
        %v405 = vsub.s32 %v402, %v404
        %v406 = vrot.slane %v308, %v405
        %v407 = vcombine.high %v309, %v309
        %v409 = vunpack.c.l.s4 1983009808
        %v410 = vunpack.c.0.s8 %v409
        %v411 = vlaneseq
        %v412 = vshrl.u32 %v411, 7
        %v413 = vsub.s32 %v410, %v412
        %v414 = vrot.slane %v309, %v413
        %v416 = vunpack.c.l.s4 1983009808
        %v417 = vunpack.c.0.s8 %v416
        %v418 = vlaneseq
        %v419 = vshrl.u32 %v418, 7
        %v420 = vsub.s32 %v417, %v419
        %v421 = vrot.slane %v407, %v420
        %v422 = vcombine.high %v414, %v414
        %v423 = vcombine.high %v421, %v421
        %v424 = vcombine.high %v310, %v310
        %v426 = vunpack.c.l.s4 1983009808
        %v427 = vunpack.c.0.s8 %v426
        %v428 = vlaneseq
        %v429 = vshrl.u32 %v428, 7
        %v430 = vsub.s32 %v427, %v429
        %v431 = vrot.slane %v310, %v430
        %v433 = vunpack.c.l.s4 1983009808
        %v434 = vunpack.c.0.s8 %v433
        %v435 = vlaneseq
        %v436 = vshrl.u32 %v435, 7
        %v437 = vsub.s32 %v434, %v436
        %v438 = vrot.slane %v424, %v437
        %v439 = vcombine.high %v431, %v431
        %v440 = vcombine.high %v438, %v438
        %v442 = vunpack.c.l.s4 1983009808
        %v443 = vunpack.c.0.s8 %v442
        %v444 = vlaneseq
        %v445 = vshrl.u32 %v444, 7
        %v446 = vsub.s32 %v443, %v445
        %v447 = vrot.slane %v311, %v446
        %v448 = vcombine.high %v312, %v312
        %v450 = vunpack.c.l.s4 1983009808
        %v451 = vunpack.c.0.s8 %v450
        %v452 = vlaneseq
        %v453 = vshrl.u32 %v452, 7
        %v454 = vsub.s32 %v451, %v453
        %v455 = vrot.slane %v312, %v454
        %v457 = vunpack.c.l.s4 1983009808
        %v458 = vunpack.c.0.s8 %v457
        %v459 = vlaneseq
        %v460 = vshrl.u32 %v459, 7
        %v461 = vsub.s32 %v458, %v460
        %v462 = vrot.slane %v448, %v461
        %v463 = vcombine.high %v455, %v455
        %v464 = vcombine.high %v462, %v462
        %v465 = vcombine.high %v313, %v313
        %v467 = vunpack.c.l.s4 1983009808
        %v468 = vunpack.c.0.s8 %v467
        %v469 = vlaneseq
        %v470 = vshrl.u32 %v469, 7
        %v471 = vsub.s32 %v468, %v470
        %v472 = vrot.slane %v313, %v471
        %v474 = vunpack.c.l.s4 1983009808
        %v475 = vunpack.c.0.s8 %v474
        %v476 = vlaneseq
        %v477 = vshrl.u32 %v476, 7
        %v478 = vsub.s32 %v475, %v477
        %v479 = vrot.slane %v465, %v478
        %v480 = vcombine.high %v472, %v472
        %v481 = vcombine.high %v479, %v479
        %v483 = vunpack.c.l.s4 1983009808
        %v484 = vunpack.c.0.s8 %v483
        %v485 = vlaneseq
        %v486 = vshrl.u32 %v485, 7
        %v487 = vsub.s32 %v484, %v486
        %v488 = vrot.slane %v314, %v487
        %v489 = vcombine.high %v315, %v315
        %v491 = vunpack.c.l.s4 1983009808
        %v492 = vunpack.c.0.s8 %v491
        %v493 = vlaneseq
        %v494 = vshrl.u32 %v493, 7
        %v495 = vsub.s32 %v492, %v494
        %v496 = vrot.slane %v315, %v495
        %v498 = vunpack.c.l.s4 1983009808
        %v499 = vunpack.c.0.s8 %v498
        %v500 = vlaneseq
        %v501 = vshrl.u32 %v500, 7
        %v502 = vsub.s32 %v499, %v501
        %v503 = vrot.slane %v489, %v502
        %v504 = vcombine.high %v496, %v496
        %v505 = vcombine.high %v503, %v503
        %v506 = vcombine.high %v316, %v316
        %v508 = vunpack.c.l.s4 1983009808
        %v509 = vunpack.c.0.s8 %v508
        %v510 = vlaneseq
        %v511 = vshrl.u32 %v510, 7
        %v512 = vsub.s32 %v509, %v511
        %v513 = vrot.slane %v316, %v512
        %v515 = vunpack.c.l.s4 1983009808
        %v516 = vunpack.c.0.s8 %v515
        %v517 = vlaneseq
        %v518 = vshrl.u32 %v517, 7
        %v519 = vsub.s32 %v516, %v518
        %v520 = vrot.slane %v506, %v519
        %v521 = vcombine.high %v513, %v513
        %v522 = vcombine.high %v520, %v520
        %v524 = vunpack.c.l.s4 1983009808
        %v525 = vunpack.c.0.s8 %v524
        %v526 = vlaneseq
        %v527 = vshrl.u32 %v526, 7
        %v528 = vsub.s32 %v525, %v527
        %v529 = vrot.slane %v317, %v528
        %v530 = vcombine.high %v318, %v318
        %v532 = vunpack.c.l.s4 1983009808
        %v533 = vunpack.c.0.s8 %v532
        %v534 = vlaneseq
        %v535 = vshrl.u32 %v534, 7
        %v536 = vsub.s32 %v533, %v535
        %v537 = vrot.slane %v318, %v536
        %v539 = vunpack.c.l.s4 1983009808
        %v540 = vunpack.c.0.s8 %v539
        %v541 = vlaneseq
        %v542 = vshrl.u32 %v541, 7
        %v543 = vsub.s32 %v540, %v542
        %v544 = vrot.slane %v530, %v543
        %v545 = vcombine.high %v537, %v537
        %v546 = vcombine.high %v544, %v544
        %v547 = vcombine.high %v319, %v319
        %v549 = vunpack.c.l.s4 1983009808
        %v550 = vunpack.c.0.s8 %v549
        %v551 = vlaneseq
        %v552 = vshrl.u32 %v551, 7
        %v553 = vsub.s32 %v550, %v552
        %v554 = vrot.slane %v319, %v553
        %v556 = vunpack.c.l.s4 1983009808
        %v557 = vunpack.c.0.s8 %v556
        %v558 = vlaneseq
        %v559 = vshrl.u32 %v558, 7
        %v560 = vsub.s32 %v557, %v559
        %v561 = vrot.slane %v547, %v560
        %v562 = vcombine.high %v554, %v554
        %v563 = vcombine.high %v561, %v561
        %v565 = vunpack.c.l.s4 1983009808
        %v566 = vunpack.c.0.s8 %v565
        %v567 = vlaneseq
        %v568 = vshrl.u32 %v567, 7
        %v569 = vsub.s32 %v566, %v568
        %v570 = vrot.slane %v320, %v569
        %v571 = vcombine.high %v321, %v321
        %v573 = vunpack.c.l.s4 1983009808
        %v574 = vunpack.c.0.s8 %v573
        %v575 = vlaneseq
        %v576 = vshrl.u32 %v575, 7
        %v577 = vsub.s32 %v574, %v576
        %v578 = vrot.slane %v321, %v577
        %v580 = vunpack.c.l.s4 1983009808
        %v581 = vunpack.c.0.s8 %v580
        %v582 = vlaneseq
        %v583 = vshrl.u32 %v582, 7
        %v584 = vsub.s32 %v581, %v583
        %v585 = vrot.slane %v571, %v584
        %v586 = vcombine.high %v578, %v578
        %v587 = vcombine.high %v585, %v585
        %v588 = vcombine.high %v322, %v322
        %v590 = vunpack.c.l.s4 1983009808
        %v591 = vunpack.c.0.s8 %v590
        %v592 = vlaneseq
        %v593 = vshrl.u32 %v592, 7
        %v594 = vsub.s32 %v591, %v593
        %v595 = vrot.slane %v322, %v594
        %v597 = vunpack.c.l.s4 1983009808
        %v598 = vunpack.c.0.s8 %v597
        %v599 = vlaneseq
        %v600 = vshrl.u32 %v599, 7
        %v601 = vsub.s32 %v598, %v600
        %v602 = vrot.slane %v588, %v601
        %v603 = vcombine.high %v595, %v595
        %v604 = vcombine.high %v602, %v602
        %v606 = vunpack.c.l.s4 1983009808
        %v607 = vunpack.c.0.s8 %v606
        %v608 = vlaneseq
        %v609 = vshrl.u32 %v608, 7
        %v610 = vsub.s32 %v607, %v609
        %v611 = vrot.slane %v323, %v610
        %v612 = vcombine.high %v324, %v324
        %v614 = vunpack.c.l.s4 1983009808
        %v615 = vunpack.c.0.s8 %v614
        %v616 = vlaneseq
        %v617 = vshrl.u32 %v616, 7
        %v618 = vsub.s32 %v615, %v617
        %v619 = vrot.slane %v324, %v618
        %v621 = vunpack.c.l.s4 1983009808
        %v622 = vunpack.c.0.s8 %v621
        %v623 = vlaneseq
        %v624 = vshrl.u32 %v623, 7
        %v625 = vsub.s32 %v622, %v624
        %v626 = vrot.slane %v612, %v625
        %v627 = vcombine.high %v619, %v619
        %v628 = vcombine.high %v626, %v626
        %v629 = vcombine.high %v325, %v325
        %v631 = vunpack.c.l.s4 1983009808
        %v632 = vunpack.c.0.s8 %v631
        %v633 = vlaneseq
        %v634 = vshrl.u32 %v633, 7
        %v635 = vsub.s32 %v632, %v634
        %v636 = vrot.slane %v325, %v635
        %v638 = vunpack.c.l.s4 1983009808
        %v639 = vunpack.c.0.s8 %v638
        %v640 = vlaneseq
        %v641 = vshrl.u32 %v640, 7
        %v642 = vsub.s32 %v639, %v641
        %v643 = vrot.slane %v629, %v642
        %v644 = vcombine.high %v636, %v636
        %v645 = vcombine.high %v643, %v643
        %v647 = vunpack.c.l.s4 1983009808
        %v648 = vunpack.c.0.s8 %v647
        %v649 = vlaneseq
        %v650 = vshrl.u32 %v649, 7
        %v651 = vsub.s32 %v648, %v650
        %v652 = vrot.slane %v326, %v651
        %v653 = vcombine.high %v327, %v327
        %v655 = vunpack.c.l.s4 1983009808
        %v656 = vunpack.c.0.s8 %v655
        %v657 = vlaneseq
        %v658 = vshrl.u32 %v657, 7
        %v659 = vsub.s32 %v656, %v658
        %v660 = vrot.slane %v327, %v659
        %v662 = vunpack.c.l.s4 1983009808
        %v663 = vunpack.c.0.s8 %v662
        %v664 = vlaneseq
        %v665 = vshrl.u32 %v664, 7
        %v666 = vsub.s32 %v663, %v665
        %v667 = vrot.slane %v653, %v666
        %v668 = vcombine.high %v660, %v660
        %v669 = vcombine.high %v667, %v667
        %v670 = vcombine.high %v328, %v328
        %v672 = vunpack.c.l.s4 1983009808
        %v673 = vunpack.c.0.s8 %v672
        %v674 = vlaneseq
        %v675 = vshrl.u32 %v674, 7
        %v676 = vsub.s32 %v673, %v675
        %v677 = vrot.slane %v328, %v676
        %v679 = vunpack.c.l.s4 1983009808
        %v680 = vunpack.c.0.s8 %v679
        %v681 = vlaneseq
        %v682 = vshrl.u32 %v681, 7
        %v683 = vsub.s32 %v680, %v682
        %v684 = vrot.slane %v670, %v683
        %v685 = vcombine.high %v677, %v677
        %v686 = vcombine.high %v684, %v684
        %v688 = vunpack.c.l.s4 1983009808
        %v689 = vunpack.c.0.s8 %v688
        %v690 = vlaneseq
        %v691 = vshrl.u32 %v690, 7
        %v692 = vsub.s32 %v689, %v691
        %v693 = vrot.slane %v329, %v692
        %v694 = vcombine.high %v330, %v330
        %v696 = vunpack.c.l.s4 1983009808
        %v697 = vunpack.c.0.s8 %v696
        %v698 = vlaneseq
        %v699 = vshrl.u32 %v698, 7
        %v700 = vsub.s32 %v697, %v699
        %v701 = vrot.slane %v330, %v700
        %v703 = vunpack.c.l.s4 1983009808
        %v704 = vunpack.c.0.s8 %v703
        %v705 = vlaneseq
        %v706 = vshrl.u32 %v705, 7
        %v707 = vsub.s32 %v704, %v706
        %v708 = vrot.slane %v694, %v707
        %v709 = vcombine.high %v701, %v701
        %v710 = vcombine.high %v708, %v708
        %v711 = vcombine.high %v331, %v331
        %v713 = vunpack.c.l.s4 1983009808
        %v714 = vunpack.c.0.s8 %v713
        %v715 = vlaneseq
        %v716 = vshrl.u32 %v715, 7
        %v717 = vsub.s32 %v714, %v716
        %v718 = vrot.slane %v331, %v717
        %v720 = vunpack.c.l.s4 1983009808
        %v721 = vunpack.c.0.s8 %v720
        %v722 = vlaneseq
        %v723 = vshrl.u32 %v722, 7
        %v724 = vsub.s32 %v721, %v723
        %v725 = vrot.slane %v711, %v724
        %v726 = vcombine.high %v718, %v718
        %v727 = vcombine.high %v725, %v725
        %v729 = vunpack.c.l.s4 1983009808
        %v730 = vunpack.c.0.s8 %v729
        %v731 = vlaneseq
        %v732 = vshrl.u32 %v731, 7
        %v733 = vsub.s32 %v730, %v732
        %v734 = vrot.slane %v332, %v733
        %v735 = vcombine.high %v333, %v333
        %v737 = vunpack.c.l.s4 1983009808
        %v738 = vunpack.c.0.s8 %v737
        %v739 = vlaneseq
        %v740 = vshrl.u32 %v739, 7
        %v741 = vsub.s32 %v738, %v740
        %v742 = vrot.slane %v333, %v741
        %v744 = vunpack.c.l.s4 1983009808
        %v745 = vunpack.c.0.s8 %v744
        %v746 = vlaneseq
        %v747 = vshrl.u32 %v746, 7
        %v748 = vsub.s32 %v745, %v747
        %v749 = vrot.slane %v735, %v748
        %v750 = vcombine.high %v742, %v742
        %v751 = vcombine.high %v749, %v749
        %v752 = vcombine.high %v334, %v334
        %v754 = vunpack.c.l.s4 1983009808
        %v755 = vunpack.c.0.s8 %v754
        %v756 = vlaneseq
        %v757 = vshrl.u32 %v756, 7
        %v758 = vsub.s32 %v755, %v757
        %v759 = vrot.slane %v334, %v758
        %v761 = vunpack.c.l.s4 1983009808
        %v762 = vunpack.c.0.s8 %v761
        %v763 = vlaneseq
        %v764 = vshrl.u32 %v763, 7
        %v765 = vsub.s32 %v762, %v764
        %v766 = vrot.slane %v752, %v765
        %v767 = vcombine.high %v759, %v759
        %v768 = vcombine.high %v766, %v766
        %v770 = vunpack.c.l.s4 1983009808
        %v771 = vunpack.c.0.s8 %v770
        %v772 = vlaneseq
        %v773 = vshrl.u32 %v772, 7
        %v774 = vsub.s32 %v771, %v773
        %v775 = vrot.slane %v335, %v774
        %v776 = vld [vmem:[%s1] sm:$0xff]
        %v777 = vld [vmem:[%s1 + $0x8] sm:$0xff]
        %v778 = vld [vmem:[%s1 + $0x10] sm:$0xff]
        %v779 = vld [vmem:[%s1 + $0x18] sm:$0xff]
        %v780 = vld [vmem:[%s2] sm:$0x1]
        %v782 = vlaneseq
        %v783 = vshrl.u32 %v782, 7
        %v784 = vsub.s32 0, %v783
        %v785 = vrot.slane %v780, %v784
        %v787 = vcombine.low %v373, %v381
        %v788 = vcombine.low %v380, %v382
        %v790 = vunpack.c.l.s4 1983009808
        %v791 = vunpack.c.0.s8 %v790
        %v792 = vlaneseq
        %v793 = vshrl.u32 %v792, 7
        %v794 = vsub.s32 %v791, %v793
        %v795 = vrot.slane %v787, %v794
        %v797 = vunpack.c.l.s4 1983009808
        %v798 = vunpack.c.0.s8 %v797
        %v799 = vlaneseq
        %v800 = vshrl.u32 %v799, 7
        %v801 = vsub.s32 %v798, %v800
        %v802 = vrot.slane %v788, %v801
        %v803 = vcombine.low %v795, %v802
        %v804 = vcombine.low %v390, %v398
        %v805 = vcombine.low %v397, %v399
        %v807 = vunpack.c.l.s4 1983009808
        %v808 = vunpack.c.0.s8 %v807
        %v809 = vlaneseq
        %v810 = vshrl.u32 %v809, 7
        %v811 = vsub.s32 %v808, %v810
        %v812 = vrot.slane %v804, %v811
        %v814 = vunpack.c.l.s4 1983009808
        %v815 = vunpack.c.0.s8 %v814
        %v816 = vlaneseq
        %v817 = vshrl.u32 %v816, 7
        %v818 = vsub.s32 %v815, %v817
        %v819 = vrot.slane %v805, %v818
        %v820 = vcombine.low %v812, %v819
        %v821 = vcombine.low %v406, %v414
        %v822 = vcombine.low %v422, %v421
        %v824 = vunpack.c.l.s4 1983009808
        %v825 = vunpack.c.0.s8 %v824
        %v826 = vlaneseq
        %v827 = vshrl.u32 %v826, 7
        %v828 = vsub.s32 %v825, %v827
        %v829 = vrot.slane %v821, %v828
        %v831 = vunpack.c.l.s4 1983009808
        %v832 = vunpack.c.0.s8 %v831
        %v833 = vlaneseq
        %v834 = vshrl.u32 %v833, 7
        %v835 = vsub.s32 %v832, %v834
        %v836 = vrot.slane %v822, %v835
        %v837 = vcombine.low %v829, %v836
        %v838 = vcombine.low %v423, %v431
        %v839 = vcombine.low %v439, %v438
        %v841 = vunpack.c.l.s4 1983009808
        %v842 = vunpack.c.0.s8 %v841
        %v843 = vlaneseq
        %v844 = vshrl.u32 %v843, 7
        %v845 = vsub.s32 %v842, %v844
        %v846 = vrot.slane %v838, %v845
        %v848 = vunpack.c.l.s4 1983009808
        %v849 = vunpack.c.0.s8 %v848
        %v850 = vlaneseq
        %v851 = vshrl.u32 %v850, 7
        %v852 = vsub.s32 %v849, %v851
        %v853 = vrot.slane %v839, %v852
        %v854 = vcombine.low %v846, %v853
        %v855 = vcombine.low %v440, %v447
        %v856 = vcombine.low %v455, %v463
        %v858 = vunpack.c.l.s4 1983009808
        %v859 = vunpack.c.0.s8 %v858
        %v860 = vlaneseq
        %v861 = vshrl.u32 %v860, 7
        %v862 = vsub.s32 %v859, %v861
        %v863 = vrot.slane %v855, %v862
        %v865 = vunpack.c.l.s4 1983009808
        %v866 = vunpack.c.0.s8 %v865
        %v867 = vlaneseq
        %v868 = vshrl.u32 %v867, 7
        %v869 = vsub.s32 %v866, %v868
        %v870 = vrot.slane %v856, %v869
        %v871 = vcombine.low %v863, %v870
        %v872 = vcombine.low %v462, %v464
        %v873 = vcombine.low %v472, %v480
        %v875 = vunpack.c.l.s4 1983009808
        %v876 = vunpack.c.0.s8 %v875
        %v877 = vlaneseq
        %v878 = vshrl.u32 %v877, 7
        %v879 = vsub.s32 %v876, %v878
        %v880 = vrot.slane %v872, %v879
        %v882 = vunpack.c.l.s4 1983009808
        %v883 = vunpack.c.0.s8 %v882
        %v884 = vlaneseq
        %v885 = vshrl.u32 %v884, 7
        %v886 = vsub.s32 %v883, %v885
        %v887 = vrot.slane %v873, %v886
        %v888 = vcombine.low %v880, %v887
        %v889 = vcombine.low %v479, %v481
        %v890 = vcombine.low %v488, %v496
        %v892 = vunpack.c.l.s4 1983009808
        %v893 = vunpack.c.0.s8 %v892
        %v894 = vlaneseq
        %v895 = vshrl.u32 %v894, 7
        %v896 = vsub.s32 %v893, %v895
        %v897 = vrot.slane %v889, %v896
        %v899 = vunpack.c.l.s4 1983009808
        %v900 = vunpack.c.0.s8 %v899
        %v901 = vlaneseq
        %v902 = vshrl.u32 %v901, 7
        %v903 = vsub.s32 %v900, %v902
        %v904 = vrot.slane %v890, %v903
        %v905 = vcombine.low %v897, %v904
        %v906 = vcombine.low %v504, %v503
        %v907 = vcombine.low %v505, %v513
        %v909 = vunpack.c.l.s4 1983009808
        %v910 = vunpack.c.0.s8 %v909
        %v911 = vlaneseq
        %v912 = vshrl.u32 %v911, 7
        %v913 = vsub.s32 %v910, %v912
        %v914 = vrot.slane %v906, %v913
        %v916 = vunpack.c.l.s4 1983009808
        %v917 = vunpack.c.0.s8 %v916
        %v918 = vlaneseq
        %v919 = vshrl.u32 %v918, 7
        %v920 = vsub.s32 %v917, %v919
        %v921 = vrot.slane %v907, %v920
        %v922 = vcombine.low %v914, %v921
        %v923 = vcombine.low %v521, %v520
        %v924 = vcombine.low %v522, %v529
        %v926 = vunpack.c.l.s4 1983009808
        %v927 = vunpack.c.0.s8 %v926
        %v928 = vlaneseq
        %v929 = vshrl.u32 %v928, 7
        %v930 = vsub.s32 %v927, %v929
        %v931 = vrot.slane %v923, %v930
        %v933 = vunpack.c.l.s4 1983009808
        %v934 = vunpack.c.0.s8 %v933
        %v935 = vlaneseq
        %v936 = vshrl.u32 %v935, 7
        %v937 = vsub.s32 %v934, %v936
        %v938 = vrot.slane %v924, %v937
        %v939 = vcombine.low %v931, %v938
        %v940 = vcombine.low %v537, %v545
        %v941 = vcombine.low %v544, %v546
        %v943 = vunpack.c.l.s4 1983009808
        %v944 = vunpack.c.0.s8 %v943
        %v945 = vlaneseq
        %v946 = vshrl.u32 %v945, 7
        %v947 = vsub.s32 %v944, %v946
        %v948 = vrot.slane %v940, %v947
        %v950 = vunpack.c.l.s4 1983009808
        %v951 = vunpack.c.0.s8 %v950
        %v952 = vlaneseq
        %v953 = vshrl.u32 %v952, 7
        %v954 = vsub.s32 %v951, %v953
        %v955 = vrot.slane %v941, %v954
        %v956 = vcombine.low %v948, %v955
        %v957 = vcombine.low %v554, %v562
        %v958 = vcombine.low %v561, %v563
        %v960 = vunpack.c.l.s4 1983009808
        %v961 = vunpack.c.0.s8 %v960
        %v962 = vlaneseq
        %v963 = vshrl.u32 %v962, 7
        %v964 = vsub.s32 %v961, %v963
        %v965 = vrot.slane %v957, %v964
        %v967 = vunpack.c.l.s4 1983009808
        %v968 = vunpack.c.0.s8 %v967
        %v969 = vlaneseq
        %v970 = vshrl.u32 %v969, 7
        %v971 = vsub.s32 %v968, %v970
        %v972 = vrot.slane %v958, %v971
        %v973 = vcombine.low %v965, %v972
        %v974 = vcombine.low %v570, %v578
        %v975 = vcombine.low %v586, %v585
        %v977 = vunpack.c.l.s4 1983009808
        %v978 = vunpack.c.0.s8 %v977
        %v979 = vlaneseq
        %v980 = vshrl.u32 %v979, 7
        %v981 = vsub.s32 %v978, %v980
        %v982 = vrot.slane %v974, %v981
        %v984 = vunpack.c.l.s4 1983009808
        %v985 = vunpack.c.0.s8 %v984
        %v986 = vlaneseq
        %v987 = vshrl.u32 %v986, 7
        %v988 = vsub.s32 %v985, %v987
        %v989 = vrot.slane %v975, %v988
        %v990 = vcombine.low %v982, %v989
        %v991 = vcombine.low %v587, %v595
        %v992 = vcombine.low %v603, %v602
        %v994 = vunpack.c.l.s4 1983009808
        %v995 = vunpack.c.0.s8 %v994
        %v996 = vlaneseq
        %v997 = vshrl.u32 %v996, 7
        %v998 = vsub.s32 %v995, %v997
        %v999 = vrot.slane %v991, %v998
        %v1001 = vunpack.c.l.s4 1983009808
        %v1002 = vunpack.c.0.s8 %v1001
        %v1003 = vlaneseq
        %v1004 = vshrl.u32 %v1003, 7
        %v1005 = vsub.s32 %v1002, %v1004
        %v1006 = vrot.slane %v992, %v1005
        %v1007 = vcombine.low %v999, %v1006
        %v1008 = vcombine.low %v604, %v611
        %v1009 = vcombine.low %v619, %v627
        %v1011 = vunpack.c.l.s4 1983009808
        %v1012 = vunpack.c.0.s8 %v1011
        %v1013 = vlaneseq
        %v1014 = vshrl.u32 %v1013, 7
        %v1015 = vsub.s32 %v1012, %v1014
        %v1016 = vrot.slane %v1008, %v1015
        %v1018 = vunpack.c.l.s4 1983009808
        %v1019 = vunpack.c.0.s8 %v1018
        %v1020 = vlaneseq
        %v1021 = vshrl.u32 %v1020, 7
        %v1022 = vsub.s32 %v1019, %v1021
        %v1023 = vrot.slane %v1009, %v1022
        %v1024 = vcombine.low %v1016, %v1023
        %v1025 = vcombine.low %v626, %v628
        %v1026 = vcombine.low %v636, %v644
        %v1028 = vunpack.c.l.s4 1983009808
        %v1029 = vunpack.c.0.s8 %v1028
        %v1030 = vlaneseq
        %v1031 = vshrl.u32 %v1030, 7
        %v1032 = vsub.s32 %v1029, %v1031
        %v1033 = vrot.slane %v1025, %v1032
        %v1035 = vunpack.c.l.s4 1983009808
        %v1036 = vunpack.c.0.s8 %v1035
        %v1037 = vlaneseq
        %v1038 = vshrl.u32 %v1037, 7
        %v1039 = vsub.s32 %v1036, %v1038
        %v1040 = vrot.slane %v1026, %v1039
        %v1041 = vcombine.low %v1033, %v1040
        %v1042 = vcombine.low %v643, %v645
        %v1043 = vcombine.low %v652, %v660
        %v1045 = vunpack.c.l.s4 1983009808
        %v1046 = vunpack.c.0.s8 %v1045
        %v1047 = vlaneseq
        %v1048 = vshrl.u32 %v1047, 7
        %v1049 = vsub.s32 %v1046, %v1048
        %v1050 = vrot.slane %v1042, %v1049
        %v1052 = vunpack.c.l.s4 1983009808
        %v1053 = vunpack.c.0.s8 %v1052
        %v1054 = vlaneseq
        %v1055 = vshrl.u32 %v1054, 7
        %v1056 = vsub.s32 %v1053, %v1055
        %v1057 = vrot.slane %v1043, %v1056
        %v1058 = vcombine.low %v1050, %v1057
        %v1059 = vcombine.low %v668, %v667
        %v1060 = vcombine.low %v669, %v677
        %v1062 = vunpack.c.l.s4 1983009808
        %v1063 = vunpack.c.0.s8 %v1062
        %v1064 = vlaneseq
        %v1065 = vshrl.u32 %v1064, 7
        %v1066 = vsub.s32 %v1063, %v1065
        %v1067 = vrot.slane %v1059, %v1066
        %v1069 = vunpack.c.l.s4 1983009808
        %v1070 = vunpack.c.0.s8 %v1069
        %v1071 = vlaneseq
        %v1072 = vshrl.u32 %v1071, 7
        %v1073 = vsub.s32 %v1070, %v1072
        %v1074 = vrot.slane %v1060, %v1073
        %v1075 = vcombine.low %v1067, %v1074
        %v1076 = vcombine.low %v685, %v684
        %v1077 = vcombine.low %v686, %v693
        %v1079 = vunpack.c.l.s4 1983009808
        %v1080 = vunpack.c.0.s8 %v1079
        %v1081 = vlaneseq
        %v1082 = vshrl.u32 %v1081, 7
        %v1083 = vsub.s32 %v1080, %v1082
        %v1084 = vrot.slane %v1076, %v1083
        %v1086 = vunpack.c.l.s4 1983009808
        %v1087 = vunpack.c.0.s8 %v1086
        %v1088 = vlaneseq
        %v1089 = vshrl.u32 %v1088, 7
        %v1090 = vsub.s32 %v1087, %v1089
        %v1091 = vrot.slane %v1077, %v1090
        %v1092 = vcombine.low %v1084, %v1091
        %v1093 = vcombine.low %v701, %v709
        %v1094 = vcombine.low %v708, %v710
        %v1096 = vunpack.c.l.s4 1983009808
        %v1097 = vunpack.c.0.s8 %v1096
        %v1098 = vlaneseq
        %v1099 = vshrl.u32 %v1098, 7
        %v1100 = vsub.s32 %v1097, %v1099
        %v1101 = vrot.slane %v1093, %v1100
        %v1103 = vunpack.c.l.s4 1983009808
        %v1104 = vunpack.c.0.s8 %v1103
        %v1105 = vlaneseq
        %v1106 = vshrl.u32 %v1105, 7
        %v1107 = vsub.s32 %v1104, %v1106
        %v1108 = vrot.slane %v1094, %v1107
        %v1109 = vcombine.low %v1101, %v1108
        %v1110 = vcombine.low %v718, %v726
        %v1111 = vcombine.low %v725, %v727
        %v1113 = vunpack.c.l.s4 1983009808
        %v1114 = vunpack.c.0.s8 %v1113
        %v1115 = vlaneseq
        %v1116 = vshrl.u32 %v1115, 7
        %v1117 = vsub.s32 %v1114, %v1116
        %v1118 = vrot.slane %v1110, %v1117
        %v1120 = vunpack.c.l.s4 1983009808
        %v1121 = vunpack.c.0.s8 %v1120
        %v1122 = vlaneseq
        %v1123 = vshrl.u32 %v1122, 7
        %v1124 = vsub.s32 %v1121, %v1123
        %v1125 = vrot.slane %v1111, %v1124
        %v1126 = vcombine.low %v1118, %v1125
        %v1127 = vcombine.low %v734, %v742
        %v1128 = vcombine.low %v750, %v749
        %v1130 = vunpack.c.l.s4 1983009808
        %v1131 = vunpack.c.0.s8 %v1130
        %v1132 = vlaneseq
        %v1133 = vshrl.u32 %v1132, 7
        %v1134 = vsub.s32 %v1131, %v1133
        %v1135 = vrot.slane %v1127, %v1134
        %v1137 = vunpack.c.l.s4 1983009808
        %v1138 = vunpack.c.0.s8 %v1137
        %v1139 = vlaneseq
        %v1140 = vshrl.u32 %v1139, 7
        %v1141 = vsub.s32 %v1138, %v1140
        %v1142 = vrot.slane %v1128, %v1141
        %v1143 = vcombine.low %v1135, %v1142
        %v1144 = vcombine.low %v751, %v759
        %v1145 = vcombine.low %v767, %v766
        %v1147 = vunpack.c.l.s4 1983009808
        %v1148 = vunpack.c.0.s8 %v1147
        %v1149 = vlaneseq
        %v1150 = vshrl.u32 %v1149, 7
        %v1151 = vsub.s32 %v1148, %v1150
        %v1152 = vrot.slane %v1144, %v1151
        %v1154 = vunpack.c.l.s4 1983009808
        %v1155 = vunpack.c.0.s8 %v1154
        %v1156 = vlaneseq
        %v1157 = vshrl.u32 %v1156, 7
        %v1158 = vsub.s32 %v1155, %v1157
        %v1159 = vrot.slane %v1145, %v1158
        %v1160 = vcombine.low %v1152, %v1159
        %v1161 = vcombine.low %v768, %v775
        %v1163 = vunpack.c.l.s4 1983009808
        %v1164 = vunpack.c.0.s8 %v1163
        %v1165 = vlaneseq
        %v1166 = vshrl.u32 %v1165, 7
        %v1167 = vsub.s32 %v1164, %v1166
        %v1168 = vrot.slane %v1161, %v1167
        %vm1169 = vcmask 261120
        %v1170 = vsel %vm1169, %v803, 0
        %v1172 = vsel %vm1169, %v820, 0
        %v1174 = vsel %vm1169, %v837, 0
        %v1176 = vsel %vm1169, %v854, 0
        %v1178 = vsel %vm1169, %v871, 0
        %v1180 = vsel %vm1169, %v888, 0
        %v1182 = vsel %vm1169, %v905, 0
        %v1184 = vsel %vm1169, %v922, 0
        %v1186 = vsel %vm1169, %v939, 0
        %v1188 = vsel %vm1169, %v956, 0
        %v1190 = vsel %vm1169, %v973, 0
        %v1192 = vsel %vm1169, %v990, 0
        %v1194 = vsel %vm1169, %v1007, 0
        %v1196 = vsel %vm1169, %v1024, 0
        %v1198 = vsel %vm1169, %v1041, 0
        %v1200 = vsel %vm1169, %v1058, 0
        %v1202 = vsel %vm1169, %v1075, 0
        %v1204 = vsel %vm1169, %v1092, 0
        %v1206 = vsel %vm1169, %v1109, 0
        %v1208 = vsel %vm1169, %v1126, 0
        %v1210 = vsel %vm1169, %v1143, 0
        %v1212 = vsel %vm1169, %v1160, 0
        %v1214 = vsel %vm1169, %v1168, 0
        %1216 = vmatprep.subr.mxu0 0.0
        %1217 = vmatpush1.msra.mxu0 %v776
        %1218 = vmatprep.subr.mxu0 0.0
        %1219 = vmatpush1.msra.mxu0 %v777
        %1220 = vmatprep.subr.mxu0 0.0
        %1221 = vmatpush1.msra.mxu0 %v778
        %1222 = vmatprep.subr.mxu0 0.0
        %1223 = vmatpush1.msra.mxu0 %v779
        %1224 = vmatprep.subr.mxu0 0.0
        %1225 = vmatpush1.msra.mxu0 0.0
        %1226 = vmatprep.subr.mxu0 0.0
        %1227 = vmatpush1.msra.mxu0 0.0
        %1228 = vmatprep.subr.mxu0 0.0
        %1229 = vmatpush1.msra.mxu0 0.0
        %1230 = vmatprep.subr.mxu0 0.0
        %1231 = vmatpush1.msra.mxu0 0.0
        %1232 = vmatprep.subr.mxu0 0.0
        %1233 = vmatpush1.msra.mxu0 0.0
        %1234 = vmatprep.subr.mxu0 0.0
        %1235 = vmatpush1.msra.mxu0 0.0
        %1236 = vmatprep.subr.mxu0 0.0
        %1237 = vmatpush1.msra.mxu0 0.0
        %1238 = vmatprep.subr.mxu0 0.0
        %1239 = vmatpush1.msra.mxu0 0.0
        %1240 = vmatprep.subr.mxu0 0.0
        %1241 = vmatpush1.msra.mxu0 0.0
        %1242 = vmatprep.subr.mxu0 0.0
        %1243 = vmatpush1.msra.mxu0 0.0
        %1244 = vmatprep.subr.mxu0 0.0
        %1245 = vmatpush1.msra.mxu0 0.0
        %1246 = vmatprep.subr.mxu0 0.0
        %1247 = vmatpush1.msra.mxu0 0.0
        %1248 = vmatprep.subr.mxu0 0.0
        %1249 = vmatpush1.msra.mxu0 0.0
        %1250 = vmatprep.subr.mxu0 0.0
        %1251 = vmatpush1.msra.mxu0 0.0
        %1252 = vmatprep.subr.mxu0 0.0
        %1253 = vmatpush1.msra.mxu0 0.0
        %1254 = vmatprep.subr.mxu0 0.0
        %1255 = vmatpush1.msra.mxu0 0.0
        %1256 = vmatprep.subr.mxu0 0.0
        %1257 = vmatpush1.msra.mxu0 0.0
        %1258 = vmatprep.subr.mxu0 0.0
        %1259 = vmatpush1.msra.mxu0 0.0
        %1260 = vmatprep.subr.mxu0 0.0
        %1261 = vmatpush1.msra.mxu0 0.0
        %1262 = vmatprep.subr.mxu0 0.0
        %1263 = vmatpush1.msra.mxu0 0.0
        %1264 = vmatprep.subr.mxu0 0.0
        %1265 = vmatpush1.msra.mxu0 0.0
        %1266 = vmatprep.subr.mxu0 0.0
        %1267 = vmatpush1.msra.mxu0 0.0
        %1268 = vmatprep.subr.mxu0 0.0
        %1269 = vmatpush1.msra.mxu0 0.0
        %1270 = vmatprep.subr.mxu0 0.0
        %1271 = vmatpush1.msra.mxu0 0.0
        %1272 = vmatprep.subr.mxu0 0.0
        %1273 = vmatpush1.msra.mxu0 0.0
        %1274 = vmatprep.subr.mxu0 0.0
        %1275 = vmatpush1.msra.mxu0 0.0
        %1276 = vmatprep.subr.mxu0 0.0
        %1277 = vmatpush1.msra.mxu0 0.0
        %1278 = vmatprep.subr.mxu0 0.0
        %1279 = vmatpush1.msra.mxu0 0.0
        %1280 = vmatprep.mubr.f32.mxu0 0.0
        %1281 = vmatmul.mubr.f32.gmra.mrb[0].mxu0 %v1170
        %v1282 = vpop.f32.mrb[0].mxu0
        %v1283 = vadd.f32 %v785, %v1282
        %v1284 = vpop.f32.mrb[0].mxu0
        %1285 = vmatprep.mubr.f32.mxu0 0.0
        %1286 = vmatmul.mubr.f32.gmra.mrb[0].mxu0 %v1172
        %v1287 = vpop.f32.mrb[0].mxu0
        %v1288 = vadd.f32 %v785, %v1287
        %v1289 = vpop.f32.mrb[0].mxu0
        %1290 = vmatprep.mubr.f32.mxu0 0.0
        %1291 = vmatmul.mubr.f32.gmra.mrb[0].mxu0 %v1174
        %v1292 = vpop.f32.mrb[0].mxu0
        %v1293 = vadd.f32 %v785, %v1292
        %v1294 = vpop.f32.mrb[0].mxu0
        %1295 = vmatprep.mubr.f32.mxu0 0.0
        %1296 = vmatmul.mubr.f32.gmra.mrb[0].mxu0 %v1176
        %v1297 = vpop.f32.mrb[0].mxu0
        %v1298 = vadd.f32 %v785, %v1297
        %v1299 = vpop.f32.mrb[0].mxu0
        %1300 = vmatprep.mubr.f32.mxu0 0.0
        %1301 = vmatmul.mubr.f32.gmra.mrb[0].mxu0 %v1178
        %v1302 = vpop.f32.mrb[0].mxu0
        %v1303 = vadd.f32 %v785, %v1302
        %v1304 = vpop.f32.mrb[0].mxu0
        %1305 = vmatprep.mubr.f32.mxu0 0.0
        %1306 = vmatmul.mubr.f32.gmra.mrb[0].mxu0 %v1180
        %v1307 = vpop.f32.mrb[0].mxu0
        %v1308 = vadd.f32 %v785, %v1307
        %v1309 = vpop.f32.mrb[0].mxu0
        %1310 = vmatprep.mubr.f32.mxu0 0.0
        %1311 = vmatmul.mubr.f32.gmra.mrb[0].mxu0 %v1182
        %v1312 = vpop.f32.mrb[0].mxu0
        %v1313 = vadd.f32 %v785, %v1312
        %v1314 = vpop.f32.mrb[0].mxu0
        %1315 = vmatprep.mubr.f32.mxu0 0.0
        %1316 = vmatmul.mubr.f32.gmra.mrb[0].mxu0 %v1184
        %v1317 = vpop.f32.mrb[0].mxu0
        %v1318 = vadd.f32 %v785, %v1317
        %v1319 = vpop.f32.mrb[0].mxu0
        %1320 = vmatprep.mubr.f32.mxu0 0.0
        %1321 = vmatmul.mubr.f32.gmra.mrb[0].mxu0 %v1186
        %v1322 = vpop.f32.mrb[0].mxu0
        %v1323 = vadd.f32 %v785, %v1322
        %v1324 = vpop.f32.mrb[0].mxu0
        %1325 = vmatprep.mubr.f32.mxu0 0.0
        %1326 = vmatmul.mubr.f32.gmra.mrb[0].mxu0 %v1188
        %v1327 = vpop.f32.mrb[0].mxu0
        %v1328 = vadd.f32 %v785, %v1327
        %v1329 = vpop.f32.mrb[0].mxu0
        %1330 = vmatprep.mubr.f32.mxu0 0.0
        %1331 = vmatmul.mubr.f32.gmra.mrb[0].mxu0 %v1190
        %v1332 = vpop.f32.mrb[0].mxu0
        %v1333 = vadd.f32 %v785, %v1332
        %v1334 = vpop.f32.mrb[0].mxu0
        %1335 = vmatprep.mubr.f32.mxu0 0.0
        %1336 = vmatmul.mubr.f32.gmra.mrb[0].mxu0 %v1192
        %v1337 = vpop.f32.mrb[0].mxu0
        %v1338 = vadd.f32 %v785, %v1337
        %v1339 = vpop.f32.mrb[0].mxu0
        %1340 = vmatprep.mubr.f32.mxu0 0.0
        %1341 = vmatmul.mubr.f32.gmra.mrb[0].mxu0 %v1194
        %v1342 = vpop.f32.mrb[0].mxu0
        %v1343 = vadd.f32 %v785, %v1342
        %v1344 = vpop.f32.mrb[0].mxu0
        %1345 = vmatprep.mubr.f32.mxu0 0.0
        %1346 = vmatmul.mubr.f32.gmra.mrb[0].mxu0 %v1196
        %v1347 = vpop.f32.mrb[0].mxu0
        %v1348 = vadd.f32 %v785, %v1347
        %v1349 = vpop.f32.mrb[0].mxu0
        %1350 = vmatprep.mubr.f32.mxu0 0.0
        %1351 = vmatmul.mubr.f32.gmra.mrb[0].mxu0 %v1198
        %v1352 = vpop.f32.mrb[0].mxu0
        %v1353 = vadd.f32 %v785, %v1352
        %v1354 = vpop.f32.mrb[0].mxu0
        %1355 = vmatprep.mubr.f32.mxu0 0.0
        %1356 = vmatmul.mubr.f32.gmra.mrb[0].mxu0 %v1200
        %v1357 = vpop.f32.mrb[0].mxu0
        %v1358 = vadd.f32 %v785, %v1357
        %v1359 = vpop.f32.mrb[0].mxu0
        %1360 = vmatprep.mubr.f32.mxu0 0.0
        %1361 = vmatmul.mubr.f32.gmra.mrb[0].mxu0 %v1202
        %v1362 = vpop.f32.mrb[0].mxu0
        %v1363 = vadd.f32 %v785, %v1362
        %v1364 = vpop.f32.mrb[0].mxu0
        %1365 = vmatprep.mubr.f32.mxu0 0.0
        %1366 = vmatmul.mubr.f32.gmra.mrb[0].mxu0 %v1204
        %v1367 = vpop.f32.mrb[0].mxu0
        %v1368 = vadd.f32 %v785, %v1367
        %v1369 = vpop.f32.mrb[0].mxu0
        %1370 = vmatprep.mubr.f32.mxu0 0.0
        %1371 = vmatmul.mubr.f32.gmra.mrb[0].mxu0 %v1206
        %v1372 = vpop.f32.mrb[0].mxu0
        %v1373 = vadd.f32 %v785, %v1372
        %v1374 = vpop.f32.mrb[0].mxu0
        %1375 = vmatprep.mubr.f32.mxu0 0.0
        %1376 = vmatmul.mubr.f32.gmra.mrb[0].mxu0 %v1208
        %v1377 = vpop.f32.mrb[0].mxu0
        %v1378 = vadd.f32 %v785, %v1377
        %v1379 = vpop.f32.mrb[0].mxu0
        %1380 = vmatprep.mubr.f32.mxu0 0.0
        %1381 = vmatmul.mubr.f32.gmra.mrb[0].mxu0 %v1210
        %v1382 = vpop.f32.mrb[0].mxu0
        %v1383 = vadd.f32 %v785, %v1382
        %v1384 = vpop.f32.mrb[0].mxu0
        %1385 = vmatprep.mubr.f32.mxu0 0.0
        %1386 = vmatmul.mubr.f32.gmra.mrb[0].mxu0 %v1212
        %v1387 = vpop.f32.mrb[0].mxu0
        %v1388 = vadd.f32 %v785, %v1387
        %v1389 = vpop.f32.mrb[0].mxu0
        %1390 = vmatprep.mubr.f32.mxu0 0.0
        %1391 = vmatmul.mubr.f32.gmra.mrb[0].mxu0 %v1214
        %v1392 = vpop.f32.mrb[0].mxu0
        %v1393 = vadd.f32 %v785, %v1392
        %v1394 = vpop.f32.mrb[0].mxu0
        %1395 = vdwg.mxu0
        %v1396 = vmax.f32 %v1283, 0.0
        %v1397 = vmax.f32 %v1288, 0.0
        %v1398 = vmax.f32 %v1293, 0.0
        %v1399 = vmax.f32 %v1298, 0.0
        %v1400 = vmax.f32 %v1303, 0.0
        %v1401 = vmax.f32 %v1308, 0.0
        %v1402 = vmax.f32 %v1313, 0.0
        %v1403 = vmax.f32 %v1318, 0.0
        %v1404 = vmax.f32 %v1323, 0.0
        %v1405 = vmax.f32 %v1328, 0.0
        %v1406 = vmax.f32 %v1333, 0.0
        %v1407 = vmax.f32 %v1338, 0.0
        %v1408 = vmax.f32 %v1343, 0.0
        %v1409 = vmax.f32 %v1348, 0.0
        %v1410 = vmax.f32 %v1353, 0.0
        %v1411 = vmax.f32 %v1358, 0.0
        %v1412 = vmax.f32 %v1363, 0.0
        %v1413 = vmax.f32 %v1368, 0.0
        %v1414 = vmax.f32 %v1373, 0.0
        %v1415 = vmax.f32 %v1378, 0.0
        %v1416 = vmax.f32 %v1383, 0.0
        %v1417 = vmax.f32 %v1388, 0.0
        %v1418 = vmax.f32 %v1393, 0.0
        %v1442 = vcombine.high %v1396, %v1396
        %v1444 = vunpack.c.l.s4 1983009808
        %v1445 = vunpack.c.0.s8 %v1444
        %v1446 = vlaneseq
        %v1447 = vshrl.u32 %v1446, 7
        %v1448 = vsub.s32 %v1445, %v1447
        %v1449 = vrot.slane %v1396, %v1448
        %v1451 = vunpack.c.l.s4 1983009808
        %v1452 = vunpack.c.0.s8 %v1451
        %v1453 = vlaneseq
        %v1454 = vshrl.u32 %v1453, 7
        %v1455 = vsub.s32 %v1452, %v1454
        %v1456 = vrot.slane %v1442, %v1455
        %v1457 = vcombine.high %v1449, %v1449
        %v1458 = vcombine.high %v1456, %v1456
        %v1459 = vcombine.high %v1397, %v1397
        %v1461 = vunpack.c.l.s4 1983009808
        %v1462 = vunpack.c.0.s8 %v1461
        %v1463 = vlaneseq
        %v1464 = vshrl.u32 %v1463, 7
        %v1465 = vsub.s32 %v1462, %v1464
        %v1466 = vrot.slane %v1397, %v1465
        %v1468 = vunpack.c.l.s4 1983009808
        %v1469 = vunpack.c.0.s8 %v1468
        %v1470 = vlaneseq
        %v1471 = vshrl.u32 %v1470, 7
        %v1472 = vsub.s32 %v1469, %v1471
        %v1473 = vrot.slane %v1459, %v1472
        %v1474 = vcombine.high %v1466, %v1466
        %v1475 = vcombine.high %v1473, %v1473
        %v1476 = vcombine.high %v1398, %v1398
        %v1478 = vunpack.c.l.s4 1983009808
        %v1479 = vunpack.c.0.s8 %v1478
        %v1480 = vlaneseq
        %v1481 = vshrl.u32 %v1480, 7
        %v1482 = vsub.s32 %v1479, %v1481
        %v1483 = vrot.slane %v1398, %v1482
        %v1485 = vunpack.c.l.s4 1983009808
        %v1486 = vunpack.c.0.s8 %v1485
        %v1487 = vlaneseq
        %v1488 = vshrl.u32 %v1487, 7
        %v1489 = vsub.s32 %v1486, %v1488
        %v1490 = vrot.slane %v1476, %v1489
        %v1491 = vcombine.high %v1483, %v1483
        %v1492 = vcombine.high %v1490, %v1490
        %v1493 = vcombine.high %v1399, %v1399
        %v1495 = vunpack.c.l.s4 1983009808
        %v1496 = vunpack.c.0.s8 %v1495
        %v1497 = vlaneseq
        %v1498 = vshrl.u32 %v1497, 7
        %v1499 = vsub.s32 %v1496, %v1498
        %v1500 = vrot.slane %v1399, %v1499
        %v1502 = vunpack.c.l.s4 1983009808
        %v1503 = vunpack.c.0.s8 %v1502
        %v1504 = vlaneseq
        %v1505 = vshrl.u32 %v1504, 7
        %v1506 = vsub.s32 %v1503, %v1505
        %v1507 = vrot.slane %v1493, %v1506
        %v1508 = vcombine.high %v1500, %v1500
        %v1509 = vcombine.high %v1507, %v1507
        %v1510 = vcombine.high %v1400, %v1400
        %v1512 = vunpack.c.l.s4 1983009808
        %v1513 = vunpack.c.0.s8 %v1512
        %v1514 = vlaneseq
        %v1515 = vshrl.u32 %v1514, 7
        %v1516 = vsub.s32 %v1513, %v1515
        %v1517 = vrot.slane %v1400, %v1516
        %v1519 = vunpack.c.l.s4 1983009808
        %v1520 = vunpack.c.0.s8 %v1519
        %v1521 = vlaneseq
        %v1522 = vshrl.u32 %v1521, 7
        %v1523 = vsub.s32 %v1520, %v1522
        %v1524 = vrot.slane %v1510, %v1523
        %v1525 = vcombine.high %v1517, %v1517
        %v1526 = vcombine.high %v1524, %v1524
        %v1527 = vcombine.high %v1401, %v1401
        %v1529 = vunpack.c.l.s4 1983009808
        %v1530 = vunpack.c.0.s8 %v1529
        %v1531 = vlaneseq
        %v1532 = vshrl.u32 %v1531, 7
        %v1533 = vsub.s32 %v1530, %v1532
        %v1534 = vrot.slane %v1401, %v1533
        %v1536 = vunpack.c.l.s4 1983009808
        %v1537 = vunpack.c.0.s8 %v1536
        %v1538 = vlaneseq
        %v1539 = vshrl.u32 %v1538, 7
        %v1540 = vsub.s32 %v1537, %v1539
        %v1541 = vrot.slane %v1527, %v1540
        %v1542 = vcombine.high %v1534, %v1534
        %v1543 = vcombine.high %v1541, %v1541
        %v1544 = vcombine.high %v1402, %v1402
        %v1546 = vunpack.c.l.s4 1983009808
        %v1547 = vunpack.c.0.s8 %v1546
        %v1548 = vlaneseq
        %v1549 = vshrl.u32 %v1548, 7
        %v1550 = vsub.s32 %v1547, %v1549
        %v1551 = vrot.slane %v1402, %v1550
        %v1553 = vunpack.c.l.s4 1983009808
        %v1554 = vunpack.c.0.s8 %v1553
        %v1555 = vlaneseq
        %v1556 = vshrl.u32 %v1555, 7
        %v1557 = vsub.s32 %v1554, %v1556
        %v1558 = vrot.slane %v1544, %v1557
        %v1559 = vcombine.high %v1551, %v1551
        %v1560 = vcombine.high %v1558, %v1558
        %v1561 = vcombine.high %v1403, %v1403
        %v1563 = vunpack.c.l.s4 1983009808
        %v1564 = vunpack.c.0.s8 %v1563
        %v1565 = vlaneseq
        %v1566 = vshrl.u32 %v1565, 7
        %v1567 = vsub.s32 %v1564, %v1566
        %v1568 = vrot.slane %v1403, %v1567
        %v1570 = vunpack.c.l.s4 1983009808
        %v1571 = vunpack.c.0.s8 %v1570
        %v1572 = vlaneseq
        %v1573 = vshrl.u32 %v1572, 7
        %v1574 = vsub.s32 %v1571, %v1573
        %v1575 = vrot.slane %v1561, %v1574
        %v1576 = vcombine.high %v1568, %v1568
        %v1577 = vcombine.high %v1575, %v1575
        %v1578 = vcombine.high %v1404, %v1404
        %v1580 = vunpack.c.l.s4 1983009808
        %v1581 = vunpack.c.0.s8 %v1580
        %v1582 = vlaneseq
        %v1583 = vshrl.u32 %v1582, 7
        %v1584 = vsub.s32 %v1581, %v1583
        %v1585 = vrot.slane %v1404, %v1584
        %v1587 = vunpack.c.l.s4 1983009808
        %v1588 = vunpack.c.0.s8 %v1587
        %v1589 = vlaneseq
        %v1590 = vshrl.u32 %v1589, 7
        %v1591 = vsub.s32 %v1588, %v1590
        %v1592 = vrot.slane %v1578, %v1591
        %v1593 = vcombine.high %v1585, %v1585
        %v1594 = vcombine.high %v1592, %v1592
        %v1595 = vcombine.high %v1405, %v1405
        %v1597 = vunpack.c.l.s4 1983009808
        %v1598 = vunpack.c.0.s8 %v1597
        %v1599 = vlaneseq
        %v1600 = vshrl.u32 %v1599, 7
        %v1601 = vsub.s32 %v1598, %v1600
        %v1602 = vrot.slane %v1405, %v1601
        %v1604 = vunpack.c.l.s4 1983009808
        %v1605 = vunpack.c.0.s8 %v1604
        %v1606 = vlaneseq
        %v1607 = vshrl.u32 %v1606, 7
        %v1608 = vsub.s32 %v1605, %v1607
        %v1609 = vrot.slane %v1595, %v1608
        %v1610 = vcombine.high %v1602, %v1602
        %v1611 = vcombine.high %v1609, %v1609
        %v1612 = vcombine.high %v1406, %v1406
        %v1614 = vunpack.c.l.s4 1983009808
        %v1615 = vunpack.c.0.s8 %v1614
        %v1616 = vlaneseq
        %v1617 = vshrl.u32 %v1616, 7
        %v1618 = vsub.s32 %v1615, %v1617
        %v1619 = vrot.slane %v1406, %v1618
        %v1621 = vunpack.c.l.s4 1983009808
        %v1622 = vunpack.c.0.s8 %v1621
        %v1623 = vlaneseq
        %v1624 = vshrl.u32 %v1623, 7
        %v1625 = vsub.s32 %v1622, %v1624
        %v1626 = vrot.slane %v1612, %v1625
        %v1627 = vcombine.high %v1619, %v1619
        %v1628 = vcombine.high %v1626, %v1626
        %v1629 = vcombine.high %v1407, %v1407
        %v1631 = vunpack.c.l.s4 1983009808
        %v1632 = vunpack.c.0.s8 %v1631
        %v1633 = vlaneseq
        %v1634 = vshrl.u32 %v1633, 7
        %v1635 = vsub.s32 %v1632, %v1634
        %v1636 = vrot.slane %v1407, %v1635
        %v1638 = vunpack.c.l.s4 1983009808
        %v1639 = vunpack.c.0.s8 %v1638
        %v1640 = vlaneseq
        %v1641 = vshrl.u32 %v1640, 7
        %v1642 = vsub.s32 %v1639, %v1641
        %v1643 = vrot.slane %v1629, %v1642
        %v1644 = vcombine.high %v1636, %v1636
        %v1645 = vcombine.high %v1643, %v1643
        %v1646 = vcombine.high %v1408, %v1408
        %v1648 = vunpack.c.l.s4 1983009808
        %v1649 = vunpack.c.0.s8 %v1648
        %v1650 = vlaneseq
        %v1651 = vshrl.u32 %v1650, 7
        %v1652 = vsub.s32 %v1649, %v1651
        %v1653 = vrot.slane %v1408, %v1652
        %v1655 = vunpack.c.l.s4 1983009808
        %v1656 = vunpack.c.0.s8 %v1655
        %v1657 = vlaneseq
        %v1658 = vshrl.u32 %v1657, 7
        %v1659 = vsub.s32 %v1656, %v1658
        %v1660 = vrot.slane %v1646, %v1659
        %v1661 = vcombine.high %v1653, %v1653
        %v1662 = vcombine.high %v1660, %v1660
        %v1663 = vcombine.high %v1409, %v1409
        %v1665 = vunpack.c.l.s4 1983009808
        %v1666 = vunpack.c.0.s8 %v1665
        %v1667 = vlaneseq
        %v1668 = vshrl.u32 %v1667, 7
        %v1669 = vsub.s32 %v1666, %v1668
        %v1670 = vrot.slane %v1409, %v1669
        %v1672 = vunpack.c.l.s4 1983009808
        %v1673 = vunpack.c.0.s8 %v1672
        %v1674 = vlaneseq
        %v1675 = vshrl.u32 %v1674, 7
        %v1676 = vsub.s32 %v1673, %v1675
        %v1677 = vrot.slane %v1663, %v1676
        %v1678 = vcombine.high %v1670, %v1670
        %v1679 = vcombine.high %v1677, %v1677
        %v1680 = vcombine.high %v1410, %v1410
        %v1682 = vunpack.c.l.s4 1983009808
        %v1683 = vunpack.c.0.s8 %v1682
        %v1684 = vlaneseq
        %v1685 = vshrl.u32 %v1684, 7
        %v1686 = vsub.s32 %v1683, %v1685
        %v1687 = vrot.slane %v1410, %v1686
        %v1689 = vunpack.c.l.s4 1983009808
        %v1690 = vunpack.c.0.s8 %v1689
        %v1691 = vlaneseq
        %v1692 = vshrl.u32 %v1691, 7
        %v1693 = vsub.s32 %v1690, %v1692
        %v1694 = vrot.slane %v1680, %v1693
        %v1695 = vcombine.high %v1687, %v1687
        %v1696 = vcombine.high %v1694, %v1694
        %v1697 = vcombine.high %v1411, %v1411
        %v1699 = vunpack.c.l.s4 1983009808
        %v1700 = vunpack.c.0.s8 %v1699
        %v1701 = vlaneseq
        %v1702 = vshrl.u32 %v1701, 7
        %v1703 = vsub.s32 %v1700, %v1702
        %v1704 = vrot.slane %v1411, %v1703
        %v1706 = vunpack.c.l.s4 1983009808
        %v1707 = vunpack.c.0.s8 %v1706
        %v1708 = vlaneseq
        %v1709 = vshrl.u32 %v1708, 7
        %v1710 = vsub.s32 %v1707, %v1709
        %v1711 = vrot.slane %v1697, %v1710
        %v1712 = vcombine.high %v1704, %v1704
        %v1713 = vcombine.high %v1711, %v1711
        %v1714 = vcombine.high %v1412, %v1412
        %v1716 = vunpack.c.l.s4 1983009808
        %v1717 = vunpack.c.0.s8 %v1716
        %v1718 = vlaneseq
        %v1719 = vshrl.u32 %v1718, 7
        %v1720 = vsub.s32 %v1717, %v1719
        %v1721 = vrot.slane %v1412, %v1720
        %v1723 = vunpack.c.l.s4 1983009808
        %v1724 = vunpack.c.0.s8 %v1723
        %v1725 = vlaneseq
        %v1726 = vshrl.u32 %v1725, 7
        %v1727 = vsub.s32 %v1724, %v1726
        %v1728 = vrot.slane %v1714, %v1727
        %v1729 = vcombine.high %v1721, %v1721
        %v1730 = vcombine.high %v1728, %v1728
        %v1731 = vcombine.high %v1413, %v1413
        %v1733 = vunpack.c.l.s4 1983009808
        %v1734 = vunpack.c.0.s8 %v1733
        %v1735 = vlaneseq
        %v1736 = vshrl.u32 %v1735, 7
        %v1737 = vsub.s32 %v1734, %v1736
        %v1738 = vrot.slane %v1413, %v1737
        %v1740 = vunpack.c.l.s4 1983009808
        %v1741 = vunpack.c.0.s8 %v1740
        %v1742 = vlaneseq
        %v1743 = vshrl.u32 %v1742, 7
        %v1744 = vsub.s32 %v1741, %v1743
        %v1745 = vrot.slane %v1731, %v1744
        %v1746 = vcombine.high %v1738, %v1738
        %v1747 = vcombine.high %v1745, %v1745
        %v1748 = vcombine.high %v1414, %v1414
        %v1750 = vunpack.c.l.s4 1983009808
        %v1751 = vunpack.c.0.s8 %v1750
        %v1752 = vlaneseq
        %v1753 = vshrl.u32 %v1752, 7
        %v1754 = vsub.s32 %v1751, %v1753
        %v1755 = vrot.slane %v1414, %v1754
        %v1757 = vunpack.c.l.s4 1983009808
        %v1758 = vunpack.c.0.s8 %v1757
        %v1759 = vlaneseq
        %v1760 = vshrl.u32 %v1759, 7
        %v1761 = vsub.s32 %v1758, %v1760
        %v1762 = vrot.slane %v1748, %v1761
        %v1763 = vcombine.high %v1755, %v1755
        %v1764 = vcombine.high %v1762, %v1762
        %v1765 = vcombine.high %v1415, %v1415
        %v1767 = vunpack.c.l.s4 1983009808
        %v1768 = vunpack.c.0.s8 %v1767
        %v1769 = vlaneseq
        %v1770 = vshrl.u32 %v1769, 7
        %v1771 = vsub.s32 %v1768, %v1770
        %v1772 = vrot.slane %v1415, %v1771
        %v1774 = vunpack.c.l.s4 1983009808
        %v1775 = vunpack.c.0.s8 %v1774
        %v1776 = vlaneseq
        %v1777 = vshrl.u32 %v1776, 7
        %v1778 = vsub.s32 %v1775, %v1777
        %v1779 = vrot.slane %v1765, %v1778
        %v1780 = vcombine.high %v1772, %v1772
        %v1781 = vcombine.high %v1779, %v1779
        %v1782 = vcombine.high %v1416, %v1416
        %v1784 = vunpack.c.l.s4 1983009808
        %v1785 = vunpack.c.0.s8 %v1784
        %v1786 = vlaneseq
        %v1787 = vshrl.u32 %v1786, 7
        %v1788 = vsub.s32 %v1785, %v1787
        %v1789 = vrot.slane %v1416, %v1788
        %v1791 = vunpack.c.l.s4 1983009808
        %v1792 = vunpack.c.0.s8 %v1791
        %v1793 = vlaneseq
        %v1794 = vshrl.u32 %v1793, 7
        %v1795 = vsub.s32 %v1792, %v1794
        %v1796 = vrot.slane %v1782, %v1795
        %v1797 = vcombine.high %v1789, %v1789
        %v1798 = vcombine.high %v1796, %v1796
        %v1799 = vcombine.high %v1417, %v1417
        %v1801 = vunpack.c.l.s4 1983009808
        %v1802 = vunpack.c.0.s8 %v1801
        %v1803 = vlaneseq
        %v1804 = vshrl.u32 %v1803, 7
        %v1805 = vsub.s32 %v1802, %v1804
        %v1806 = vrot.slane %v1417, %v1805
        %v1808 = vunpack.c.l.s4 1983009808
        %v1809 = vunpack.c.0.s8 %v1808
        %v1810 = vlaneseq
        %v1811 = vshrl.u32 %v1810, 7
        %v1812 = vsub.s32 %v1809, %v1811
        %v1813 = vrot.slane %v1799, %v1812
        %v1814 = vcombine.high %v1806, %v1806
        %v1815 = vcombine.high %v1813, %v1813
        %v1817 = vunpack.c.l.s4 1983009808
        %v1818 = vunpack.c.0.s8 %v1817
        %v1819 = vlaneseq
        %v1820 = vshrl.u32 %v1819, 7
        %v1821 = vsub.s32 %v1818, %v1820
        %v1822 = vrot.slane %v1418, %v1821
        %v1823 = vcombine.high %v1822, %v1822
        %v1824 = vcombine.low %v1449, %v1457
        %v1825 = vcombine.low %v1456, %v1458
        %v1827 = vunpack.c.l.s4 1983009808
        %v1828 = vunpack.c.0.s8 %v1827
        %v1829 = vlaneseq
        %v1830 = vshrl.u32 %v1829, 7
        %v1831 = vsub.s32 %v1828, %v1830
        %v1832 = vrot.slane %v1824, %v1831
        %v1834 = vunpack.c.l.s4 1983009808
        %v1835 = vunpack.c.0.s8 %v1834
        %v1836 = vlaneseq
        %v1837 = vshrl.u32 %v1836, 7
        %v1838 = vsub.s32 %v1835, %v1837
        %v1839 = vrot.slane %v1825, %v1838
        %v1840 = vcombine.low %v1832, %v1839
        %v1841 = vcombine.low %v1466, %v1474
        %v1842 = vcombine.low %v1473, %v1475
        %v1844 = vunpack.c.l.s4 1983009808
        %v1845 = vunpack.c.0.s8 %v1844
        %v1846 = vlaneseq
        %v1847 = vshrl.u32 %v1846, 7
        %v1848 = vsub.s32 %v1845, %v1847
        %v1849 = vrot.slane %v1841, %v1848
        %v1851 = vunpack.c.l.s4 1983009808
        %v1852 = vunpack.c.0.s8 %v1851
        %v1853 = vlaneseq
        %v1854 = vshrl.u32 %v1853, 7
        %v1855 = vsub.s32 %v1852, %v1854
        %v1856 = vrot.slane %v1842, %v1855
        %v1857 = vcombine.low %v1849, %v1856
        %v1859 = vunpack.c.l.s4 1983009808
        %v1860 = vunpack.c.0.s8 %v1859
        %v1861 = vlaneseq
        %v1862 = vshrl.u32 %v1861, 7
        %v1863 = vsub.s32 %v1860, %v1862
        %v1864 = vrot.slane %v1483, %v1863
        %v1865 = vcombine.low %v1491, %v1490
        %v1866 = vcombine.low %v1492, %v1500
        %v1868 = vunpack.c.l.s4 1983009808
        %v1869 = vunpack.c.0.s8 %v1868
        %v1870 = vlaneseq
        %v1871 = vshrl.u32 %v1870, 7
        %v1872 = vsub.s32 %v1869, %v1871
        %v1873 = vrot.slane %v1865, %v1872
        %v1875 = vunpack.c.l.s4 1983009808
        %v1876 = vunpack.c.0.s8 %v1875
        %v1877 = vlaneseq
        %v1878 = vshrl.u32 %v1877, 7
        %v1879 = vsub.s32 %v1876, %v1878
        %v1880 = vrot.slane %v1866, %v1879
        %v1881 = vcombine.low %v1873, %v1880
        %v1882 = vcombine.low %v1508, %v1507
        %v1883 = vcombine.low %v1509, %v1517
        %v1885 = vunpack.c.l.s4 1983009808
        %v1886 = vunpack.c.0.s8 %v1885
        %v1887 = vlaneseq
        %v1888 = vshrl.u32 %v1887, 7
        %v1889 = vsub.s32 %v1886, %v1888
        %v1890 = vrot.slane %v1882, %v1889
        %v1892 = vunpack.c.l.s4 1983009808
        %v1893 = vunpack.c.0.s8 %v1892
        %v1894 = vlaneseq
        %v1895 = vshrl.u32 %v1894, 7
        %v1896 = vsub.s32 %v1893, %v1895
        %v1897 = vrot.slane %v1883, %v1896
        %v1898 = vcombine.low %v1890, %v1897
        %v1900 = vunpack.c.l.s4 1983009808
        %v1901 = vunpack.c.0.s8 %v1900
        %v1902 = vlaneseq
        %v1903 = vshrl.u32 %v1902, 7
        %v1904 = vsub.s32 %v1901, %v1903
        %v1905 = vrot.slane %v1525, %v1904
        %v1906 = vcombine.low %v1524, %v1526
        %v1907 = vcombine.low %v1534, %v1542
        %v1909 = vunpack.c.l.s4 1983009808
        %v1910 = vunpack.c.0.s8 %v1909
        %v1911 = vlaneseq
        %v1912 = vshrl.u32 %v1911, 7
        %v1913 = vsub.s32 %v1910, %v1912
        %v1914 = vrot.slane %v1906, %v1913
        %v1916 = vunpack.c.l.s4 1983009808
        %v1917 = vunpack.c.0.s8 %v1916
        %v1918 = vlaneseq
        %v1919 = vshrl.u32 %v1918, 7
        %v1920 = vsub.s32 %v1917, %v1919
        %v1921 = vrot.slane %v1907, %v1920
        %v1922 = vcombine.low %v1914, %v1921
        %v1923 = vcombine.low %v1541, %v1543
        %v1924 = vcombine.low %v1551, %v1559
        %v1926 = vunpack.c.l.s4 1983009808
        %v1927 = vunpack.c.0.s8 %v1926
        %v1928 = vlaneseq
        %v1929 = vshrl.u32 %v1928, 7
        %v1930 = vsub.s32 %v1927, %v1929
        %v1931 = vrot.slane %v1923, %v1930
        %v1933 = vunpack.c.l.s4 1983009808
        %v1934 = vunpack.c.0.s8 %v1933
        %v1935 = vlaneseq
        %v1936 = vshrl.u32 %v1935, 7
        %v1937 = vsub.s32 %v1934, %v1936
        %v1938 = vrot.slane %v1924, %v1937
        %v1939 = vcombine.low %v1931, %v1938
        %v1941 = vunpack.c.l.s4 1983009808
        %v1942 = vunpack.c.0.s8 %v1941
        %v1943 = vlaneseq
        %v1944 = vshrl.u32 %v1943, 7
        %v1945 = vsub.s32 %v1942, %v1944
        %v1946 = vrot.slane %v1558, %v1945
        %v1947 = vcombine.low %v1560, %v1568
        %v1948 = vcombine.low %v1576, %v1575
        %v1950 = vunpack.c.l.s4 1983009808
        %v1951 = vunpack.c.0.s8 %v1950
        %v1952 = vlaneseq
        %v1953 = vshrl.u32 %v1952, 7
        %v1954 = vsub.s32 %v1951, %v1953
        %v1955 = vrot.slane %v1947, %v1954
        %v1957 = vunpack.c.l.s4 1983009808
        %v1958 = vunpack.c.0.s8 %v1957
        %v1959 = vlaneseq
        %v1960 = vshrl.u32 %v1959, 7
        %v1961 = vsub.s32 %v1958, %v1960
        %v1962 = vrot.slane %v1948, %v1961
        %v1963 = vcombine.low %v1955, %v1962
        %v1964 = vcombine.low %v1577, %v1585
        %v1965 = vcombine.low %v1593, %v1592
        %v1967 = vunpack.c.l.s4 1983009808
        %v1968 = vunpack.c.0.s8 %v1967
        %v1969 = vlaneseq
        %v1970 = vshrl.u32 %v1969, 7
        %v1971 = vsub.s32 %v1968, %v1970
        %v1972 = vrot.slane %v1964, %v1971
        %v1974 = vunpack.c.l.s4 1983009808
        %v1975 = vunpack.c.0.s8 %v1974
        %v1976 = vlaneseq
        %v1977 = vshrl.u32 %v1976, 7
        %v1978 = vsub.s32 %v1975, %v1977
        %v1979 = vrot.slane %v1965, %v1978
        %v1980 = vcombine.low %v1972, %v1979
        %v1982 = vunpack.c.l.s4 1983009808
        %v1983 = vunpack.c.0.s8 %v1982
        %v1984 = vlaneseq
        %v1985 = vshrl.u32 %v1984, 7
        %v1986 = vsub.s32 %v1983, %v1985
        %v1987 = vrot.slane %v1594, %v1986
        %v1988 = vcombine.low %v1602, %v1610
        %v1989 = vcombine.low %v1609, %v1611
        %v1991 = vunpack.c.l.s4 1983009808
        %v1992 = vunpack.c.0.s8 %v1991
        %v1993 = vlaneseq
        %v1994 = vshrl.u32 %v1993, 7
        %v1995 = vsub.s32 %v1992, %v1994
        %v1996 = vrot.slane %v1988, %v1995
        %v1998 = vunpack.c.l.s4 1983009808
        %v1999 = vunpack.c.0.s8 %v1998
        %v2000 = vlaneseq
        %v2001 = vshrl.u32 %v2000, 7
        %v2002 = vsub.s32 %v1999, %v2001
        %v2003 = vrot.slane %v1989, %v2002
        %v2004 = vcombine.low %v1996, %v2003
        %v2005 = vcombine.low %v1619, %v1627
        %v2006 = vcombine.low %v1626, %v1628
        %v2008 = vunpack.c.l.s4 1983009808
        %v2009 = vunpack.c.0.s8 %v2008
        %v2010 = vlaneseq
        %v2011 = vshrl.u32 %v2010, 7
        %v2012 = vsub.s32 %v2009, %v2011
        %v2013 = vrot.slane %v2005, %v2012
        %v2015 = vunpack.c.l.s4 1983009808
        %v2016 = vunpack.c.0.s8 %v2015
        %v2017 = vlaneseq
        %v2018 = vshrl.u32 %v2017, 7
        %v2019 = vsub.s32 %v2016, %v2018
        %v2020 = vrot.slane %v2006, %v2019
        %v2021 = vcombine.low %v2013, %v2020
        %v2023 = vunpack.c.l.s4 1983009808
        %v2024 = vunpack.c.0.s8 %v2023
        %v2025 = vlaneseq
        %v2026 = vshrl.u32 %v2025, 7
        %v2027 = vsub.s32 %v2024, %v2026
        %v2028 = vrot.slane %v1636, %v2027
        %v2029 = vcombine.low %v1644, %v1643
        %v2030 = vcombine.low %v1645, %v1653
        %v2032 = vunpack.c.l.s4 1983009808
        %v2033 = vunpack.c.0.s8 %v2032
        %v2034 = vlaneseq
        %v2035 = vshrl.u32 %v2034, 7
        %v2036 = vsub.s32 %v2033, %v2035
        %v2037 = vrot.slane %v2029, %v2036
        %v2039 = vunpack.c.l.s4 1983009808
        %v2040 = vunpack.c.0.s8 %v2039
        %v2041 = vlaneseq
        %v2042 = vshrl.u32 %v2041, 7
        %v2043 = vsub.s32 %v2040, %v2042
        %v2044 = vrot.slane %v2030, %v2043
        %v2045 = vcombine.low %v2037, %v2044
        %v2046 = vcombine.low %v1661, %v1660
        %v2047 = vcombine.low %v1662, %v1670
        %v2049 = vunpack.c.l.s4 1983009808
        %v2050 = vunpack.c.0.s8 %v2049
        %v2051 = vlaneseq
        %v2052 = vshrl.u32 %v2051, 7
        %v2053 = vsub.s32 %v2050, %v2052
        %v2054 = vrot.slane %v2046, %v2053
        %v2056 = vunpack.c.l.s4 1983009808
        %v2057 = vunpack.c.0.s8 %v2056
        %v2058 = vlaneseq
        %v2059 = vshrl.u32 %v2058, 7
        %v2060 = vsub.s32 %v2057, %v2059
        %v2061 = vrot.slane %v2047, %v2060
        %v2062 = vcombine.low %v2054, %v2061
        %v2064 = vunpack.c.l.s4 1983009808
        %v2065 = vunpack.c.0.s8 %v2064
        %v2066 = vlaneseq
        %v2067 = vshrl.u32 %v2066, 7
        %v2068 = vsub.s32 %v2065, %v2067
        %v2069 = vrot.slane %v1678, %v2068
        %v2070 = vcombine.low %v1677, %v1679
        %v2071 = vcombine.low %v1687, %v1695
        %v2073 = vunpack.c.l.s4 1983009808
        %v2074 = vunpack.c.0.s8 %v2073
        %v2075 = vlaneseq
        %v2076 = vshrl.u32 %v2075, 7
        %v2077 = vsub.s32 %v2074, %v2076
        %v2078 = vrot.slane %v2070, %v2077
        %v2080 = vunpack.c.l.s4 1983009808
        %v2081 = vunpack.c.0.s8 %v2080
        %v2082 = vlaneseq
        %v2083 = vshrl.u32 %v2082, 7
        %v2084 = vsub.s32 %v2081, %v2083
        %v2085 = vrot.slane %v2071, %v2084
        %v2086 = vcombine.low %v2078, %v2085
        %v2087 = vcombine.low %v1694, %v1696
        %v2088 = vcombine.low %v1704, %v1712
        %v2090 = vunpack.c.l.s4 1983009808
        %v2091 = vunpack.c.0.s8 %v2090
        %v2092 = vlaneseq
        %v2093 = vshrl.u32 %v2092, 7
        %v2094 = vsub.s32 %v2091, %v2093
        %v2095 = vrot.slane %v2087, %v2094
        %v2097 = vunpack.c.l.s4 1983009808
        %v2098 = vunpack.c.0.s8 %v2097
        %v2099 = vlaneseq
        %v2100 = vshrl.u32 %v2099, 7
        %v2101 = vsub.s32 %v2098, %v2100
        %v2102 = vrot.slane %v2088, %v2101
        %v2103 = vcombine.low %v2095, %v2102
        %v2105 = vunpack.c.l.s4 1983009808
        %v2106 = vunpack.c.0.s8 %v2105
        %v2107 = vlaneseq
        %v2108 = vshrl.u32 %v2107, 7
        %v2109 = vsub.s32 %v2106, %v2108
        %v2110 = vrot.slane %v1711, %v2109
        %v2111 = vcombine.low %v1713, %v1721
        %v2112 = vcombine.low %v1729, %v1728
        %v2114 = vunpack.c.l.s4 1983009808
        %v2115 = vunpack.c.0.s8 %v2114
        %v2116 = vlaneseq
        %v2117 = vshrl.u32 %v2116, 7
        %v2118 = vsub.s32 %v2115, %v2117
        %v2119 = vrot.slane %v2111, %v2118
        %v2121 = vunpack.c.l.s4 1983009808
        %v2122 = vunpack.c.0.s8 %v2121
        %v2123 = vlaneseq
        %v2124 = vshrl.u32 %v2123, 7
        %v2125 = vsub.s32 %v2122, %v2124
        %v2126 = vrot.slane %v2112, %v2125
        %v2127 = vcombine.low %v2119, %v2126
        %v2128 = vcombine.low %v1730, %v1738
        %v2129 = vcombine.low %v1746, %v1745
        %v2131 = vunpack.c.l.s4 1983009808
        %v2132 = vunpack.c.0.s8 %v2131
        %v2133 = vlaneseq
        %v2134 = vshrl.u32 %v2133, 7
        %v2135 = vsub.s32 %v2132, %v2134
        %v2136 = vrot.slane %v2128, %v2135
        %v2138 = vunpack.c.l.s4 1983009808
        %v2139 = vunpack.c.0.s8 %v2138
        %v2140 = vlaneseq
        %v2141 = vshrl.u32 %v2140, 7
        %v2142 = vsub.s32 %v2139, %v2141
        %v2143 = vrot.slane %v2129, %v2142
        %v2144 = vcombine.low %v2136, %v2143
        %v2146 = vunpack.c.l.s4 1983009808
        %v2147 = vunpack.c.0.s8 %v2146
        %v2148 = vlaneseq
        %v2149 = vshrl.u32 %v2148, 7
        %v2150 = vsub.s32 %v2147, %v2149
        %v2151 = vrot.slane %v1747, %v2150
        %v2152 = vcombine.low %v1755, %v1763
        %v2153 = vcombine.low %v1762, %v1764
        %v2155 = vunpack.c.l.s4 1983009808
        %v2156 = vunpack.c.0.s8 %v2155
        %v2157 = vlaneseq
        %v2158 = vshrl.u32 %v2157, 7
        %v2159 = vsub.s32 %v2156, %v2158
        %v2160 = vrot.slane %v2152, %v2159
        %v2162 = vunpack.c.l.s4 1983009808
        %v2163 = vunpack.c.0.s8 %v2162
        %v2164 = vlaneseq
        %v2165 = vshrl.u32 %v2164, 7
        %v2166 = vsub.s32 %v2163, %v2165
        %v2167 = vrot.slane %v2153, %v2166
        %v2168 = vcombine.low %v2160, %v2167
        %v2169 = vcombine.low %v1772, %v1780
        %v2170 = vcombine.low %v1779, %v1781
        %v2172 = vunpack.c.l.s4 1983009808
        %v2173 = vunpack.c.0.s8 %v2172
        %v2174 = vlaneseq
        %v2175 = vshrl.u32 %v2174, 7
        %v2176 = vsub.s32 %v2173, %v2175
        %v2177 = vrot.slane %v2169, %v2176
        %v2179 = vunpack.c.l.s4 1983009808
        %v2180 = vunpack.c.0.s8 %v2179
        %v2181 = vlaneseq
        %v2182 = vshrl.u32 %v2181, 7
        %v2183 = vsub.s32 %v2180, %v2182
        %v2184 = vrot.slane %v2170, %v2183
        %v2185 = vcombine.low %v2177, %v2184
        %v2187 = vunpack.c.l.s4 1983009808
        %v2188 = vunpack.c.0.s8 %v2187
        %v2189 = vlaneseq
        %v2190 = vshrl.u32 %v2189, 7
        %v2191 = vsub.s32 %v2188, %v2190
        %v2192 = vrot.slane %v1789, %v2191
        %v2193 = vcombine.low %v1797, %v1796
        %v2194 = vcombine.low %v1798, %v1806
        %v2196 = vunpack.c.l.s4 1983009808
        %v2197 = vunpack.c.0.s8 %v2196
        %v2198 = vlaneseq
        %v2199 = vshrl.u32 %v2198, 7
        %v2200 = vsub.s32 %v2197, %v2199
        %v2201 = vrot.slane %v2193, %v2200
        %v2203 = vunpack.c.l.s4 1983009808
        %v2204 = vunpack.c.0.s8 %v2203
        %v2205 = vlaneseq
        %v2206 = vshrl.u32 %v2205, 7
        %v2207 = vsub.s32 %v2204, %v2206
        %v2208 = vrot.slane %v2194, %v2207
        %v2209 = vcombine.low %v2201, %v2208
        %v2210 = vcombine.low %v1814, %v1813
        %v2211 = vcombine.low %v1815, %v1822
        %v2213 = vunpack.c.l.s4 1983009808
        %v2214 = vunpack.c.0.s8 %v2213
        %v2215 = vlaneseq
        %v2216 = vshrl.u32 %v2215, 7
        %v2217 = vsub.s32 %v2214, %v2216
        %v2218 = vrot.slane %v2210, %v2217
        %v2220 = vunpack.c.l.s4 1983009808
        %v2221 = vunpack.c.0.s8 %v2220
        %v2222 = vlaneseq
        %v2223 = vshrl.u32 %v2222, 7
        %v2224 = vsub.s32 %v2221, %v2223
        %v2225 = vrot.slane %v2211, %v2224
        %v2226 = vcombine.low %v2218, %v2225
        %v2228 = vunpack.c.l.s4 1983009808
        %v2229 = vunpack.c.0.s8 %v2228
        %v2230 = vlaneseq
        %v2231 = vshrl.u32 %v2230, 7
        %v2232 = vsub.s32 %v2229, %v2231
        %v2233 = vrot.slane %v1823, %v2232
        %2264 = vst [vmem:[#allocation2] sm:$0xff] %v1840
        %2265 = vst [vmem:[#allocation2 + $0x8] sm:$0xff] %v1857
        %2266 = vst [vmem:[#allocation2 + $0x10] sm:$0x3] %v1864
        %2267 = vst [vmem:[#allocation2 + $0x18] sm:$0xff] %v1881
        %2268 = vst [vmem:[#allocation2 + $0x20] sm:$0xff] %v1898
        %2269 = vst [vmem:[#allocation2 + $0x28] sm:$0x3] %v1905
        %2270 = vst [vmem:[#allocation2 + $0x30] sm:$0xff] %v1922
        %2271 = vst [vmem:[#allocation2 + $0x38] sm:$0xff] %v1939
        %2272 = vst [vmem:[#allocation2 + $0x40] sm:$0x3] %v1946
        %2273 = vst [vmem:[#allocation2 + $0x48] sm:$0xff] %v1963
        %2274 = vst [vmem:[#allocation2 + $0x50] sm:$0xff] %v1980
        %2275 = vst [vmem:[#allocation2 + $0x58] sm:$0x3] %v1987
        %2276 = vst [vmem:[#allocation2 + $0x60] sm:$0xff] %v2004
        %2277 = vst [vmem:[#allocation2 + $0x68] sm:$0xff] %v2021
        %2278 = vst [vmem:[#allocation2 + $0x70] sm:$0x3] %v2028
        %2279 = vst [vmem:[#allocation2 + $0x78] sm:$0xff] %v2045
        %2280 = vst [vmem:[#allocation2 + $0x80] sm:$0xff] %v2062
        %2281 = vst [vmem:[#allocation2 + $0x88] sm:$0x3] %v2069
        %2282 = vst [vmem:[#allocation2 + $0x90] sm:$0xff] %v2086
        %2283 = vst [vmem:[#allocation2 + $0x98] sm:$0xff] %v2103
        %2284 = vst [vmem:[#allocation2 + $0xa0] sm:$0x3] %v2110
        %2285 = vst [vmem:[#allocation2 + $0xa8] sm:$0xff] %v2127
        %2286 = vst [vmem:[#allocation2 + $0xb0] sm:$0xff] %v2144
        %2287 = vst [vmem:[#allocation2 + $0xb8] sm:$0x3] %v2151
        %2288 = vst [vmem:[#allocation2 + $0xc0] sm:$0xff] %v2168
        %2289 = vst [vmem:[#allocation2 + $0xc8] sm:$0xff] %v2185
        %2290 = vst [vmem:[#allocation2 + $0xd0] sm:$0x3] %v2192
        %2291 = vst [vmem:[#allocation2 + $0xd8] sm:$0xff] %v2209
        %2292 = vst [vmem:[#allocation2 + $0xe0] sm:$0xff] %v2226
        %2293 = vst [vmem:[#allocation2 + $0xe8] sm:$0x3] %v2233
        %2294 = vst [vmem:[#allocation2] sm:$0x1] 0.0
        %2295 = vst [vmem:[#allocation2 + $0x18] sm:$0x1] 0.0
        %2296 = vst [vmem:[#allocation2 + $0x30] sm:$0x1] 0.0
        %2297 = vst [vmem:[#allocation2 + $0x48] sm:$0x1] 0.0
        %2298 = vst [vmem:[#allocation2 + $0x60] sm:$0x1] 0.0
        %2299 = vst [vmem:[#allocation2 + $0x78] sm:$0x1] 0.0
        %2300 = vst [vmem:[#allocation2 + $0x90] sm:$0x1] 0.0
        %2301 = vst [vmem:[#allocation2 + $0xa8] sm:$0x1] 0.0
        %2302 = vst [vmem:[#allocation2 + $0xc0] sm:$0x1] 0.0
        %2303 = vst [vmem:[#allocation2 + $0xd8] sm:$0x1] 0.0
        %2304 = vst [vmem:[#allocation2 + $0x11] sm:$0x1] 0.0
        %2305 = vst [vmem:[#allocation2 + $0x29] sm:$0x1] 0.0
        %2306 = vst [vmem:[#allocation2 + $0x41] sm:$0x1] 0.0
        %2307 = vst [vmem:[#allocation2 + $0x59] sm:$0x1] 0.0
        %2308 = vst [vmem:[#allocation2 + $0x71] sm:$0x1] 0.0
        %2309 = vst [vmem:[#allocation2 + $0x89] sm:$0x1] 0.0
        %2310 = vst [vmem:[#allocation2 + $0xa1] sm:$0x1] 0.0
        %2311 = vst [vmem:[#allocation2 + $0xb9] sm:$0x1] 0.0
        %2312 = vst [vmem:[#allocation2 + $0xd1] sm:$0x1] 0.0
        %2313 = vst [vmem:[#allocation2 + $0xe9] sm:$0x1] 0.0
        %p2314 = scmp.eq.s32.totalorder %s26, 0
        // Predicated region
        $region49: #{tpu_custom_call.1} parent=47 // pred_check
          %p2315 = pneg %p2314
        $region50: #{tpu_custom_call.1} parent=47 // pred_check_branch
          %2317 = sbr.rel (%p2315) target = $region52
        $region51: #{tpu_custom_call.1} parent=47 // pred_region
          %2318 = vst [vmem:[#allocation2] sm:$0xff] 0.0
          %2319 = vst [vmem:[#allocation2 + $0x8] sm:$0xff] 0.0
          %2320 = vst [vmem:[#allocation2 + $0x10] sm:$0x3] 0.0
        $region52: #{tpu_custom_call.1} parent=47 // pred_fallthru
          _
        %p2321 = scmp.eq.s32.totalorder %s26, 1
        // Predicated region
        $region53: #{tpu_custom_call.1} parent=47 // pred_check
          %p2322 = pneg %p2321
        $region54: #{tpu_custom_call.1} parent=47 // pred_check_branch
          %2324 = sbr.rel (%p2322) target = $region56
        $region55: #{tpu_custom_call.1} parent=47 // pred_region
          %s2325 = scalar_lea.vmem [#allocation2], 216
          %2326 = vst [vmem:[%s2325] sm:$0xff] 0.0
          %2327 = vst [vmem:[%s2325 + $0x8] sm:$0xff] 0.0
          %2328 = vst [vmem:[%s2325 + $0x10] sm:$0x3] 0.0
        $region56: #{tpu_custom_call.1} parent=47 // pred_fallthru
          _
        %v2329 = vld [vmem:[#allocation2] sm:$0xff]
        %v2330 = vld [vmem:[#allocation2 + $0x8] sm:$0xff]
        %v2331 = vld [vmem:[#allocation2 + $0x10] sm:$0x3]
        %v2332 = vld [vmem:[#allocation2 + $0x18] sm:$0xff]
        %v2333 = vld [vmem:[#allocation2 + $0x20] sm:$0xff]
        %v2334 = vld [vmem:[#allocation2 + $0x28] sm:$0x3]
        %v2335 = vld [vmem:[#allocation2 + $0x30] sm:$0xff]
        %v2336 = vld [vmem:[#allocation2 + $0x38] sm:$0xff]
        %v2337 = vld [vmem:[#allocation2 + $0x40] sm:$0x3]
        %v2338 = vld [vmem:[#allocation2 + $0x48] sm:$0xff]
        %v2339 = vld [vmem:[#allocation2 + $0x50] sm:$0xff]
        %v2340 = vld [vmem:[#allocation2 + $0x58] sm:$0x3]
        %v2341 = vld [vmem:[#allocation2 + $0x60] sm:$0xff]
        %v2342 = vld [vmem:[#allocation2 + $0x68] sm:$0xff]
        %v2343 = vld [vmem:[#allocation2 + $0x70] sm:$0x3]
        %v2344 = vld [vmem:[#allocation2 + $0x78] sm:$0xff]
        %v2345 = vld [vmem:[#allocation2 + $0x80] sm:$0xff]
        %v2346 = vld [vmem:[#allocation2 + $0x88] sm:$0x3]
        %v2347 = vld [vmem:[#allocation2 + $0x90] sm:$0xff]
        %v2348 = vld [vmem:[#allocation2 + $0x98] sm:$0xff]
        %v2349 = vld [vmem:[#allocation2 + $0xa0] sm:$0x3]
        %v2350 = vld [vmem:[#allocation2 + $0xa8] sm:$0xff]
        %v2351 = vld [vmem:[#allocation2 + $0xb0] sm:$0xff]
        %v2352 = vld [vmem:[#allocation2 + $0xb8] sm:$0x3]
        %v2353 = vld [vmem:[#allocation2 + $0xc0] sm:$0xff]
        %v2354 = vld [vmem:[#allocation2 + $0xc8] sm:$0xff]
        %v2355 = vld [vmem:[#allocation2 + $0xd0] sm:$0x3]
        %v2356 = vld [vmem:[#allocation2 + $0xd8] sm:$0xff]
        %v2357 = vld [vmem:[#allocation2 + $0xe0] sm:$0xff]
        %v2358 = vld [vmem:[#allocation2 + $0xe8] sm:$0x3]
        %v2359 = vld [vmem:[%s3] sm:$0xff]
        %v2360 = vld [vmem:[%s3 + $0x8] sm:$0x1]
        %v2361 = vlaneseq
        %v2362 = vshrl.u32 %v2361, 7
        %v2363 = vsub.s32 0, %v2362
        %v2364 = vrot.slane %v2359, %v2363
        %v2365 = vmul.f32 %v2329, %v2364
        %v2366 = vmul.f32 %v2330, %v2364
        %v2367 = vmul.f32 %v2332, %v2364
        %v2368 = vmul.f32 %v2333, %v2364
        %v2369 = vmul.f32 %v2335, %v2364
        %v2370 = vmul.f32 %v2336, %v2364
        %v2371 = vmul.f32 %v2338, %v2364
        %v2372 = vmul.f32 %v2339, %v2364
        %v2373 = vmul.f32 %v2341, %v2364
        %v2374 = vmul.f32 %v2342, %v2364
        %v2375 = vmul.f32 %v2344, %v2364
        %v2376 = vmul.f32 %v2345, %v2364
        %v2377 = vmul.f32 %v2347, %v2364
        %v2378 = vmul.f32 %v2348, %v2364
        %v2379 = vmul.f32 %v2350, %v2364
        %v2380 = vmul.f32 %v2351, %v2364
        %v2381 = vadd.f32 %v2365, 0.0
        %v2382 = vadd.f32 %v2366, 0.0
        %v2383 = vadd.f32 %v2367, 0.0
        %v2384 = vadd.f32 %v2368, 0.0
        %v2385 = vadd.f32 %v2369, 0.0
        %v2386 = vadd.f32 %v2370, 0.0
        %v2387 = vadd.f32 %v2371, 0.0
        %v2388 = vadd.f32 %v2372, 0.0
        %v2389 = vadd.f32 %v2373, 0.0
        %v2390 = vadd.f32 %v2374, 0.0
        %v2391 = vadd.f32 %v2375, 0.0
        %v2392 = vadd.f32 %v2376, 0.0
        %v2393 = vadd.f32 %v2377, 0.0
        %v2394 = vadd.f32 %v2378, 0.0
        %v2395 = vadd.f32 %v2379, 0.0
        %v2396 = vadd.f32 %v2380, 0.0
        %v2397 = vlaneseq
        %v2398 = vshrl.u32 %v2397, 7
        %v2399 = vsub.s32 1, %v2398
        %v2400 = vrot.slane %v2359, %v2399
        %v2401 = vmul.f32 %v2329, %v2400
        %v2402 = vmul.f32 %v2330, %v2400
        %v2403 = vmul.f32 %v2331, %v2400
        %v2404 = vmul.f32 %v2332, %v2400
        %v2405 = vmul.f32 %v2333, %v2400
        %v2406 = vmul.f32 %v2334, %v2400
        %v2407 = vmul.f32 %v2335, %v2400
        %v2408 = vmul.f32 %v2336, %v2400
        %v2409 = vmul.f32 %v2337, %v2400
        %v2410 = vmul.f32 %v2338, %v2400
        %v2411 = vmul.f32 %v2339, %v2400
        %v2412 = vmul.f32 %v2340, %v2400
        %v2413 = vmul.f32 %v2341, %v2400
        %v2414 = vmul.f32 %v2342, %v2400
        %v2415 = vmul.f32 %v2343, %v2400
        %v2416 = vmul.f32 %v2344, %v2400
        %v2417 = vmul.f32 %v2345, %v2400
        %v2418 = vmul.f32 %v2346, %v2400
        %v2419 = vmul.f32 %v2347, %v2400
        %v2420 = vmul.f32 %v2348, %v2400
        %v2421 = vmul.f32 %v2349, %v2400
        %v2422 = vmul.f32 %v2350, %v2400
        %v2423 = vmul.f32 %v2351, %v2400
        %v2424 = vmul.f32 %v2352, %v2400
        %vm2449 = vcmask 1046528
        %v2450 = vrot.slane %v2401, 1
        %v2451 = vrot.slane %v2402, 1
        %v2452 = vsel %vm2449, %v2450, %v2451
        %v2453 = vrot.slane %v2403, 1
        %v2454 = vsel %vm2449, %v2451, %v2453
        %v2455 = vrot.slane %v2404, 1
        %v2456 = vrot.slane %v2405, 1
        %v2457 = vsel %vm2449, %v2455, %v2456
        %v2458 = vrot.slane %v2406, 1
        %v2459 = vsel %vm2449, %v2456, %v2458
        %v2460 = vrot.slane %v2407, 1
        %v2461 = vrot.slane %v2408, 1
        %v2462 = vsel %vm2449, %v2460, %v2461
        %v2463 = vrot.slane %v2409, 1
        %v2464 = vsel %vm2449, %v2461, %v2463
        %v2465 = vrot.slane %v2410, 1
        %v2466 = vrot.slane %v2411, 1
        %v2467 = vsel %vm2449, %v2465, %v2466
        %v2468 = vrot.slane %v2412, 1
        %v2469 = vsel %vm2449, %v2466, %v2468
        %v2470 = vrot.slane %v2413, 1
        %v2471 = vrot.slane %v2414, 1
        %v2472 = vsel %vm2449, %v2470, %v2471
        %v2473 = vrot.slane %v2415, 1
        %v2474 = vsel %vm2449, %v2471, %v2473
        %v2475 = vrot.slane %v2416, 1
        %v2476 = vrot.slane %v2417, 1
        %v2477 = vsel %vm2449, %v2475, %v2476
        %v2478 = vrot.slane %v2418, 1
        %v2479 = vsel %vm2449, %v2476, %v2478
        %v2480 = vrot.slane %v2419, 1
        %v2481 = vrot.slane %v2420, 1
        %v2482 = vsel %vm2449, %v2480, %v2481
        %v2483 = vrot.slane %v2421, 1
        %v2484 = vsel %vm2449, %v2481, %v2483
        %v2485 = vrot.slane %v2422, 1
        %v2486 = vrot.slane %v2423, 1
        %v2487 = vsel %vm2449, %v2485, %v2486
        %v2488 = vrot.slane %v2424, 1
        %v2489 = vsel %vm2449, %v2486, %v2488
        %v2506 = vadd.f32 %v2381, %v2452
        %v2507 = vadd.f32 %v2382, %v2454
        %v2508 = vadd.f32 %v2383, %v2457
        %v2509 = vadd.f32 %v2384, %v2459
        %v2510 = vadd.f32 %v2385, %v2462
        %v2511 = vadd.f32 %v2386, %v2464
        %v2512 = vadd.f32 %v2387, %v2467
        %v2513 = vadd.f32 %v2388, %v2469
        %v2514 = vadd.f32 %v2389, %v2472
        %v2515 = vadd.f32 %v2390, %v2474
        %v2516 = vadd.f32 %v2391, %v2477
        %v2517 = vadd.f32 %v2392, %v2479
        %v2518 = vadd.f32 %v2393, %v2482
        %v2519 = vadd.f32 %v2394, %v2484
        %v2520 = vadd.f32 %v2395, %v2487
        %v2521 = vadd.f32 %v2396, %v2489
        %v2522 = vlaneseq
        %v2523 = vshrl.u32 %v2522, 7
        %v2524 = vsub.s32 2, %v2523
        %v2525 = vrot.slane %v2359, %v2524
        %v2526 = vmul.f32 %v2329, %v2525
        %v2527 = vmul.f32 %v2330, %v2525
        %v2528 = vmul.f32 %v2331, %v2525
        %v2529 = vmul.f32 %v2332, %v2525
        %v2530 = vmul.f32 %v2333, %v2525
        %v2531 = vmul.f32 %v2334, %v2525
        %v2532 = vmul.f32 %v2335, %v2525
        %v2533 = vmul.f32 %v2336, %v2525
        %v2534 = vmul.f32 %v2337, %v2525
        %v2535 = vmul.f32 %v2338, %v2525
        %v2536 = vmul.f32 %v2339, %v2525
        %v2537 = vmul.f32 %v2340, %v2525
        %v2538 = vmul.f32 %v2341, %v2525
        %v2539 = vmul.f32 %v2342, %v2525
        %v2540 = vmul.f32 %v2343, %v2525
        %v2541 = vmul.f32 %v2344, %v2525
        %v2542 = vmul.f32 %v2345, %v2525
        %v2543 = vmul.f32 %v2346, %v2525
        %v2544 = vmul.f32 %v2347, %v2525
        %v2545 = vmul.f32 %v2348, %v2525
        %v2546 = vmul.f32 %v2349, %v2525
        %v2547 = vmul.f32 %v2350, %v2525
        %v2548 = vmul.f32 %v2351, %v2525
        %v2549 = vmul.f32 %v2352, %v2525
        %vm2574 = vcmask 1045504
        %v2575 = vrot.slane %v2526, 2
        %v2576 = vrot.slane %v2527, 2
        %v2577 = vsel %vm2574, %v2575, %v2576
        %v2578 = vrot.slane %v2528, 2
        %v2579 = vsel %vm2574, %v2576, %v2578
        %v2580 = vrot.slane %v2529, 2
        %v2581 = vrot.slane %v2530, 2
        %v2582 = vsel %vm2574, %v2580, %v2581
        %v2583 = vrot.slane %v2531, 2
        %v2584 = vsel %vm2574, %v2581, %v2583
        %v2585 = vrot.slane %v2532, 2
        %v2586 = vrot.slane %v2533, 2
        %v2587 = vsel %vm2574, %v2585, %v2586
        %v2588 = vrot.slane %v2534, 2
        %v2589 = vsel %vm2574, %v2586, %v2588
        %v2590 = vrot.slane %v2535, 2
        %v2591 = vrot.slane %v2536, 2
        %v2592 = vsel %vm2574, %v2590, %v2591
        %v2593 = vrot.slane %v2537, 2
        %v2594 = vsel %vm2574, %v2591, %v2593
        %v2595 = vrot.slane %v2538, 2
        %v2596 = vrot.slane %v2539, 2
        %v2597 = vsel %vm2574, %v2595, %v2596
        %v2598 = vrot.slane %v2540, 2
        %v2599 = vsel %vm2574, %v2596, %v2598
        %v2600 = vrot.slane %v2541, 2
        %v2601 = vrot.slane %v2542, 2
        %v2602 = vsel %vm2574, %v2600, %v2601
        %v2603 = vrot.slane %v2543, 2
        %v2604 = vsel %vm2574, %v2601, %v2603
        %v2605 = vrot.slane %v2544, 2
        %v2606 = vrot.slane %v2545, 2
        %v2607 = vsel %vm2574, %v2605, %v2606
        %v2608 = vrot.slane %v2546, 2
        %v2609 = vsel %vm2574, %v2606, %v2608
        %v2610 = vrot.slane %v2547, 2
        %v2611 = vrot.slane %v2548, 2
        %v2612 = vsel %vm2574, %v2610, %v2611
        %v2613 = vrot.slane %v2549, 2
        %v2614 = vsel %vm2574, %v2611, %v2613
        %v2631 = vadd.f32 %v2506, %v2577
        %v2632 = vadd.f32 %v2507, %v2579
        %v2633 = vadd.f32 %v2508, %v2582
        %v2634 = vadd.f32 %v2509, %v2584
        %v2635 = vadd.f32 %v2510, %v2587
        %v2636 = vadd.f32 %v2511, %v2589
        %v2637 = vadd.f32 %v2512, %v2592
        %v2638 = vadd.f32 %v2513, %v2594
        %v2639 = vadd.f32 %v2514, %v2597
        %v2640 = vadd.f32 %v2515, %v2599
        %v2641 = vadd.f32 %v2516, %v2602
        %v2642 = vadd.f32 %v2517, %v2604
        %v2643 = vadd.f32 %v2518, %v2607
        %v2644 = vadd.f32 %v2519, %v2609
        %v2645 = vadd.f32 %v2520, %v2612
        %v2646 = vadd.f32 %v2521, %v2614
        %v2647 = vlaneseq
        %v2648 = vshrl.u32 %v2647, 7
        %v2649 = vsub.s32 3, %v2648
        %v2650 = vrot.slane %v2359, %v2649
        %v2651 = vmul.f32 %v2332, %v2650
        %v2652 = vmul.f32 %v2333, %v2650
        %v2653 = vmul.f32 %v2335, %v2650
        %v2654 = vmul.f32 %v2336, %v2650
        %v2655 = vmul.f32 %v2338, %v2650
        %v2656 = vmul.f32 %v2339, %v2650
        %v2657 = vmul.f32 %v2341, %v2650
        %v2658 = vmul.f32 %v2342, %v2650
        %v2659 = vmul.f32 %v2344, %v2650
        %v2660 = vmul.f32 %v2345, %v2650
        %v2661 = vmul.f32 %v2347, %v2650
        %v2662 = vmul.f32 %v2348, %v2650
        %v2663 = vmul.f32 %v2350, %v2650
        %v2664 = vmul.f32 %v2351, %v2650
        %v2665 = vmul.f32 %v2353, %v2650
        %v2666 = vmul.f32 %v2354, %v2650
        %v2667 = vadd.f32 %v2631, %v2651
        %v2668 = vadd.f32 %v2632, %v2652
        %v2669 = vadd.f32 %v2633, %v2653
        %v2670 = vadd.f32 %v2634, %v2654
        %v2671 = vadd.f32 %v2635, %v2655
        %v2672 = vadd.f32 %v2636, %v2656
        %v2673 = vadd.f32 %v2637, %v2657
        %v2674 = vadd.f32 %v2638, %v2658
        %v2675 = vadd.f32 %v2639, %v2659
        %v2676 = vadd.f32 %v2640, %v2660
        %v2677 = vadd.f32 %v2641, %v2661
        %v2678 = vadd.f32 %v2642, %v2662
        %v2679 = vadd.f32 %v2643, %v2663
        %v2680 = vadd.f32 %v2644, %v2664
        %v2681 = vadd.f32 %v2645, %v2665
        %v2682 = vadd.f32 %v2646, %v2666
        %v2683 = vlaneseq
        %v2684 = vshrl.u32 %v2683, 7
        %v2685 = vsub.s32 4, %v2684
        %v2686 = vrot.slane %v2359, %v2685
        %v2687 = vmul.f32 %v2332, %v2686
        %v2688 = vmul.f32 %v2333, %v2686
        %v2689 = vmul.f32 %v2334, %v2686
        %v2690 = vmul.f32 %v2335, %v2686
        %v2691 = vmul.f32 %v2336, %v2686
        %v2692 = vmul.f32 %v2337, %v2686
        %v2693 = vmul.f32 %v2338, %v2686
        %v2694 = vmul.f32 %v2339, %v2686
        %v2695 = vmul.f32 %v2340, %v2686
        %v2696 = vmul.f32 %v2341, %v2686
        %v2697 = vmul.f32 %v2342, %v2686
        %v2698 = vmul.f32 %v2343, %v2686
        %v2699 = vmul.f32 %v2344, %v2686
        %v2700 = vmul.f32 %v2345, %v2686
        %v2701 = vmul.f32 %v2346, %v2686
        %v2702 = vmul.f32 %v2347, %v2686
        %v2703 = vmul.f32 %v2348, %v2686
        %v2704 = vmul.f32 %v2349, %v2686
        %v2705 = vmul.f32 %v2350, %v2686
        %v2706 = vmul.f32 %v2351, %v2686
        %v2707 = vmul.f32 %v2352, %v2686
        %v2708 = vmul.f32 %v2353, %v2686
        %v2709 = vmul.f32 %v2354, %v2686
        %v2710 = vmul.f32 %v2355, %v2686
        %v2735 = vrot.slane %v2687, 1
        %v2736 = vrot.slane %v2688, 1
        %v2737 = vsel %vm2449, %v2735, %v2736
        %v2738 = vrot.slane %v2689, 1
        %v2739 = vsel %vm2449, %v2736, %v2738
        %v2740 = vrot.slane %v2690, 1
        %v2741 = vrot.slane %v2691, 1
        %v2742 = vsel %vm2449, %v2740, %v2741
        %v2743 = vrot.slane %v2692, 1
        %v2744 = vsel %vm2449, %v2741, %v2743
        %v2745 = vrot.slane %v2693, 1
        %v2746 = vrot.slane %v2694, 1
        %v2747 = vsel %vm2449, %v2745, %v2746
        %v2748 = vrot.slane %v2695, 1
        %v2749 = vsel %vm2449, %v2746, %v2748
        %v2750 = vrot.slane %v2696, 1
        %v2751 = vrot.slane %v2697, 1
        %v2752 = vsel %vm2449, %v2750, %v2751
        %v2753 = vrot.slane %v2698, 1
        %v2754 = vsel %vm2449, %v2751, %v2753
        %v2755 = vrot.slane %v2699, 1
        %v2756 = vrot.slane %v2700, 1
        %v2757 = vsel %vm2449, %v2755, %v2756
        %v2758 = vrot.slane %v2701, 1
        %v2759 = vsel %vm2449, %v2756, %v2758
        %v2760 = vrot.slane %v2702, 1
        %v2761 = vrot.slane %v2703, 1
        %v2762 = vsel %vm2449, %v2760, %v2761
        %v2763 = vrot.slane %v2704, 1
        %v2764 = vsel %vm2449, %v2761, %v2763
        %v2765 = vrot.slane %v2705, 1
        %v2766 = vrot.slane %v2706, 1
        %v2767 = vsel %vm2449, %v2765, %v2766
        %v2768 = vrot.slane %v2707, 1
        %v2769 = vsel %vm2449, %v2766, %v2768
        %v2770 = vrot.slane %v2708, 1
        %v2771 = vrot.slane %v2709, 1
        %v2772 = vsel %vm2449, %v2770, %v2771
        %v2773 = vrot.slane %v2710, 1
        %v2774 = vsel %vm2449, %v2771, %v2773
        %v2791 = vadd.f32 %v2667, %v2737
        %v2792 = vadd.f32 %v2668, %v2739
        %v2793 = vadd.f32 %v2669, %v2742
        %v2794 = vadd.f32 %v2670, %v2744
        %v2795 = vadd.f32 %v2671, %v2747
        %v2796 = vadd.f32 %v2672, %v2749
        %v2797 = vadd.f32 %v2673, %v2752
        %v2798 = vadd.f32 %v2674, %v2754
        %v2799 = vadd.f32 %v2675, %v2757
        %v2800 = vadd.f32 %v2676, %v2759
        %v2801 = vadd.f32 %v2677, %v2762
        %v2802 = vadd.f32 %v2678, %v2764
        %v2803 = vadd.f32 %v2679, %v2767
        %v2804 = vadd.f32 %v2680, %v2769
        %v2805 = vadd.f32 %v2681, %v2772
        %v2806 = vadd.f32 %v2682, %v2774
        %v2807 = vlaneseq
        %v2808 = vshrl.u32 %v2807, 7
        %v2809 = vsub.s32 5, %v2808
        %v2810 = vrot.slane %v2359, %v2809
        %v2811 = vmul.f32 %v2332, %v2810
        %v2812 = vmul.f32 %v2333, %v2810
        %v2813 = vmul.f32 %v2334, %v2810
        %v2814 = vmul.f32 %v2335, %v2810
        %v2815 = vmul.f32 %v2336, %v2810
        %v2816 = vmul.f32 %v2337, %v2810
        %v2817 = vmul.f32 %v2338, %v2810
        %v2818 = vmul.f32 %v2339, %v2810
        %v2819 = vmul.f32 %v2340, %v2810
        %v2820 = vmul.f32 %v2341, %v2810
        %v2821 = vmul.f32 %v2342, %v2810
        %v2822 = vmul.f32 %v2343, %v2810
        %v2823 = vmul.f32 %v2344, %v2810
        %v2824 = vmul.f32 %v2345, %v2810
        %v2825 = vmul.f32 %v2346, %v2810
        %v2826 = vmul.f32 %v2347, %v2810
        %v2827 = vmul.f32 %v2348, %v2810
        %v2828 = vmul.f32 %v2349, %v2810
        %v2829 = vmul.f32 %v2350, %v2810
        %v2830 = vmul.f32 %v2351, %v2810
        %v2831 = vmul.f32 %v2352, %v2810
        %v2832 = vmul.f32 %v2353, %v2810
        %v2833 = vmul.f32 %v2354, %v2810
        %v2834 = vmul.f32 %v2355, %v2810
        %v2859 = vrot.slane %v2811, 2
        %v2860 = vrot.slane %v2812, 2
        %v2861 = vsel %vm2574, %v2859, %v2860
        %v2862 = vrot.slane %v2813, 2
        %v2863 = vsel %vm2574, %v2860, %v2862
        %v2864 = vrot.slane %v2814, 2
        %v2865 = vrot.slane %v2815, 2
        %v2866 = vsel %vm2574, %v2864, %v2865
        %v2867 = vrot.slane %v2816, 2
        %v2868 = vsel %vm2574, %v2865, %v2867
        %v2869 = vrot.slane %v2817, 2
        %v2870 = vrot.slane %v2818, 2
        %v2871 = vsel %vm2574, %v2869, %v2870
        %v2872 = vrot.slane %v2819, 2
        %v2873 = vsel %vm2574, %v2870, %v2872
        %v2874 = vrot.slane %v2820, 2
        %v2875 = vrot.slane %v2821, 2
        %v2876 = vsel %vm2574, %v2874, %v2875
        %v2877 = vrot.slane %v2822, 2
        %v2878 = vsel %vm2574, %v2875, %v2877
        %v2879 = vrot.slane %v2823, 2
        %v2880 = vrot.slane %v2824, 2
        %v2881 = vsel %vm2574, %v2879, %v2880
        %v2882 = vrot.slane %v2825, 2
        %v2883 = vsel %vm2574, %v2880, %v2882
        %v2884 = vrot.slane %v2826, 2
        %v2885 = vrot.slane %v2827, 2
        %v2886 = vsel %vm2574, %v2884, %v2885
        %v2887 = vrot.slane %v2828, 2
        %v2888 = vsel %vm2574, %v2885, %v2887
        %v2889 = vrot.slane %v2829, 2
        %v2890 = vrot.slane %v2830, 2
        %v2891 = vsel %vm2574, %v2889, %v2890
        %v2892 = vrot.slane %v2831, 2
        %v2893 = vsel %vm2574, %v2890, %v2892
        %v2894 = vrot.slane %v2832, 2
        %v2895 = vrot.slane %v2833, 2
        %v2896 = vsel %vm2574, %v2894, %v2895
        %v2897 = vrot.slane %v2834, 2
        %v2898 = vsel %vm2574, %v2895, %v2897
        %v2915 = vadd.f32 %v2791, %v2861
        %v2916 = vadd.f32 %v2792, %v2863
        %v2917 = vadd.f32 %v2793, %v2866
        %v2918 = vadd.f32 %v2794, %v2868
        %v2919 = vadd.f32 %v2795, %v2871
        %v2920 = vadd.f32 %v2796, %v2873
        %v2921 = vadd.f32 %v2797, %v2876
        %v2922 = vadd.f32 %v2798, %v2878
        %v2923 = vadd.f32 %v2799, %v2881
        %v2924 = vadd.f32 %v2800, %v2883
        %v2925 = vadd.f32 %v2801, %v2886
        %v2926 = vadd.f32 %v2802, %v2888
        %v2927 = vadd.f32 %v2803, %v2891
        %v2928 = vadd.f32 %v2804, %v2893
        %v2929 = vadd.f32 %v2805, %v2896
        %v2930 = vadd.f32 %v2806, %v2898
        %v2931 = vlaneseq
        %v2932 = vshrl.u32 %v2931, 7
        %v2933 = vsub.s32 6, %v2932
        %v2934 = vrot.slane %v2359, %v2933
        %v2935 = vmul.f32 %v2335, %v2934
        %v2936 = vmul.f32 %v2336, %v2934
        %v2937 = vmul.f32 %v2338, %v2934
        %v2938 = vmul.f32 %v2339, %v2934
        %v2939 = vmul.f32 %v2341, %v2934
        %v2940 = vmul.f32 %v2342, %v2934
        %v2941 = vmul.f32 %v2344, %v2934
        %v2942 = vmul.f32 %v2345, %v2934
        %v2943 = vmul.f32 %v2347, %v2934
        %v2944 = vmul.f32 %v2348, %v2934
        %v2945 = vmul.f32 %v2350, %v2934
        %v2946 = vmul.f32 %v2351, %v2934
        %v2947 = vmul.f32 %v2353, %v2934
        %v2948 = vmul.f32 %v2354, %v2934
        %v2949 = vmul.f32 %v2356, %v2934
        %v2950 = vmul.f32 %v2357, %v2934
        %v2951 = vadd.f32 %v2915, %v2935
        %v2952 = vadd.f32 %v2916, %v2936
        %v2953 = vadd.f32 %v2917, %v2937
        %v2954 = vadd.f32 %v2918, %v2938
        %v2955 = vadd.f32 %v2919, %v2939
        %v2956 = vadd.f32 %v2920, %v2940
        %v2957 = vadd.f32 %v2921, %v2941
        %v2958 = vadd.f32 %v2922, %v2942
        %v2959 = vadd.f32 %v2923, %v2943
        %v2960 = vadd.f32 %v2924, %v2944
        %v2961 = vadd.f32 %v2925, %v2945
        %v2962 = vadd.f32 %v2926, %v2946
        %v2963 = vadd.f32 %v2927, %v2947
        %v2964 = vadd.f32 %v2928, %v2948
        %v2965 = vadd.f32 %v2929, %v2949
        %v2966 = vadd.f32 %v2930, %v2950
        %v2967 = vlaneseq
        %v2968 = vshrl.u32 %v2967, 7
        %v2969 = vsub.s32 7, %v2968
        %v2970 = vrot.slane %v2359, %v2969
        %v2971 = vmul.f32 %v2335, %v2970
        %v2972 = vmul.f32 %v2336, %v2970
        %v2973 = vmul.f32 %v2337, %v2970
        %v2974 = vmul.f32 %v2338, %v2970
        %v2975 = vmul.f32 %v2339, %v2970
        %v2976 = vmul.f32 %v2340, %v2970
        %v2977 = vmul.f32 %v2341, %v2970
        %v2978 = vmul.f32 %v2342, %v2970
        %v2979 = vmul.f32 %v2343, %v2970
        %v2980 = vmul.f32 %v2344, %v2970
        %v2981 = vmul.f32 %v2345, %v2970
        %v2982 = vmul.f32 %v2346, %v2970
        %v2983 = vmul.f32 %v2347, %v2970
        %v2984 = vmul.f32 %v2348, %v2970
        %v2985 = vmul.f32 %v2349, %v2970
        %v2986 = vmul.f32 %v2350, %v2970
        %v2987 = vmul.f32 %v2351, %v2970
        %v2988 = vmul.f32 %v2352, %v2970
        %v2989 = vmul.f32 %v2353, %v2970
        %v2990 = vmul.f32 %v2354, %v2970
        %v2991 = vmul.f32 %v2355, %v2970
        %v2992 = vmul.f32 %v2356, %v2970
        %v2993 = vmul.f32 %v2357, %v2970
        %v2994 = vmul.f32 %v2358, %v2970
        %v3019 = vrot.slane %v2971, 1
        %v3020 = vrot.slane %v2972, 1
        %v3021 = vsel %vm2449, %v3019, %v3020
        %v3022 = vrot.slane %v2973, 1
        %v3023 = vsel %vm2449, %v3020, %v3022
        %v3024 = vrot.slane %v2974, 1
        %v3025 = vrot.slane %v2975, 1
        %v3026 = vsel %vm2449, %v3024, %v3025
        %v3027 = vrot.slane %v2976, 1
        %v3028 = vsel %vm2449, %v3025, %v3027
        %v3029 = vrot.slane %v2977, 1
        %v3030 = vrot.slane %v2978, 1
        %v3031 = vsel %vm2449, %v3029, %v3030
        %v3032 = vrot.slane %v2979, 1
        %v3033 = vsel %vm2449, %v3030, %v3032
        %v3034 = vrot.slane %v2980, 1
        %v3035 = vrot.slane %v2981, 1
        %v3036 = vsel %vm2449, %v3034, %v3035
        %v3037 = vrot.slane %v2982, 1
        %v3038 = vsel %vm2449, %v3035, %v3037
        %v3039 = vrot.slane %v2983, 1
        %v3040 = vrot.slane %v2984, 1
        %v3041 = vsel %vm2449, %v3039, %v3040
        %v3042 = vrot.slane %v2985, 1
        %v3043 = vsel %vm2449, %v3040, %v3042
        %v3044 = vrot.slane %v2986, 1
        %v3045 = vrot.slane %v2987, 1
        %v3046 = vsel %vm2449, %v3044, %v3045
        %v3047 = vrot.slane %v2988, 1
        %v3048 = vsel %vm2449, %v3045, %v3047
        %v3049 = vrot.slane %v2989, 1
        %v3050 = vrot.slane %v2990, 1
        %v3051 = vsel %vm2449, %v3049, %v3050
        %v3052 = vrot.slane %v2991, 1
        %v3053 = vsel %vm2449, %v3050, %v3052
        %v3054 = vrot.slane %v2992, 1
        %v3055 = vrot.slane %v2993, 1
        %v3056 = vsel %vm2449, %v3054, %v3055
        %v3057 = vrot.slane %v2994, 1
        %v3058 = vsel %vm2449, %v3055, %v3057
        %v3075 = vadd.f32 %v2951, %v3021
        %v3076 = vadd.f32 %v2952, %v3023
        %v3077 = vadd.f32 %v2953, %v3026
        %v3078 = vadd.f32 %v2954, %v3028
        %v3079 = vadd.f32 %v2955, %v3031
        %v3080 = vadd.f32 %v2956, %v3033
        %v3081 = vadd.f32 %v2957, %v3036
        %v3082 = vadd.f32 %v2958, %v3038
        %v3083 = vadd.f32 %v2959, %v3041
        %v3084 = vadd.f32 %v2960, %v3043
        %v3085 = vadd.f32 %v2961, %v3046
        %v3086 = vadd.f32 %v2962, %v3048
        %v3087 = vadd.f32 %v2963, %v3051
        %v3088 = vadd.f32 %v2964, %v3053
        %v3089 = vadd.f32 %v2965, %v3056
        %v3090 = vadd.f32 %v2966, %v3058
        %v3091 = vlaneseq
        %v3092 = vshrl.u32 %v3091, 7
        %v3093 = vsub.s32 0, %v3092
        %v3094 = vrot.slane %v2360, %v3093
        %v3095 = vmul.f32 %v2335, %v3094
        %v3096 = vmul.f32 %v2336, %v3094
        %v3097 = vmul.f32 %v2337, %v3094
        %v3098 = vmul.f32 %v2338, %v3094
        %v3099 = vmul.f32 %v2339, %v3094
        %v3100 = vmul.f32 %v2340, %v3094
        %v3101 = vmul.f32 %v2341, %v3094
        %v3102 = vmul.f32 %v2342, %v3094
        %v3103 = vmul.f32 %v2343, %v3094
        %v3104 = vmul.f32 %v2344, %v3094
        %v3105 = vmul.f32 %v2345, %v3094
        %v3106 = vmul.f32 %v2346, %v3094
        %v3107 = vmul.f32 %v2347, %v3094
        %v3108 = vmul.f32 %v2348, %v3094
        %v3109 = vmul.f32 %v2349, %v3094
        %v3110 = vmul.f32 %v2350, %v3094
        %v3111 = vmul.f32 %v2351, %v3094
        %v3112 = vmul.f32 %v2352, %v3094
        %v3113 = vmul.f32 %v2353, %v3094
        %v3114 = vmul.f32 %v2354, %v3094
        %v3115 = vmul.f32 %v2355, %v3094
        %v3116 = vmul.f32 %v2356, %v3094
        %v3117 = vmul.f32 %v2357, %v3094
        %v3118 = vmul.f32 %v2358, %v3094
        %v3143 = vrot.slane %v3095, 2
        %v3144 = vrot.slane %v3096, 2
        %v3145 = vsel %vm2574, %v3143, %v3144
        %v3146 = vrot.slane %v3097, 2
        %v3147 = vsel %vm2574, %v3144, %v3146
        %v3148 = vrot.slane %v3098, 2
        %v3149 = vrot.slane %v3099, 2
        %v3150 = vsel %vm2574, %v3148, %v3149
        %v3151 = vrot.slane %v3100, 2
        %v3152 = vsel %vm2574, %v3149, %v3151
        %v3153 = vrot.slane %v3101, 2
        %v3154 = vrot.slane %v3102, 2
        %v3155 = vsel %vm2574, %v3153, %v3154
        %v3156 = vrot.slane %v3103, 2
        %v3157 = vsel %vm2574, %v3154, %v3156
        %v3158 = vrot.slane %v3104, 2
        %v3159 = vrot.slane %v3105, 2
        %v3160 = vsel %vm2574, %v3158, %v3159
        %v3161 = vrot.slane %v3106, 2
        %v3162 = vsel %vm2574, %v3159, %v3161
        %v3163 = vrot.slane %v3107, 2
        %v3164 = vrot.slane %v3108, 2
        %v3165 = vsel %vm2574, %v3163, %v3164
        %v3166 = vrot.slane %v3109, 2
        %v3167 = vsel %vm2574, %v3164, %v3166
        %v3168 = vrot.slane %v3110, 2
        %v3169 = vrot.slane %v3111, 2
        %v3170 = vsel %vm2574, %v3168, %v3169
        %v3171 = vrot.slane %v3112, 2
        %v3172 = vsel %vm2574, %v3169, %v3171
        %v3173 = vrot.slane %v3113, 2
        %v3174 = vrot.slane %v3114, 2
        %v3175 = vsel %vm2574, %v3173, %v3174
        %v3176 = vrot.slane %v3115, 2
        %v3177 = vsel %vm2574, %v3174, %v3176
        %v3178 = vrot.slane %v3116, 2
        %v3179 = vrot.slane %v3117, 2
        %v3180 = vsel %vm2574, %v3178, %v3179
        %v3181 = vrot.slane %v3118, 2
        %v3182 = vsel %vm2574, %v3179, %v3181
        %v3199 = vadd.f32 %v3075, %v3145
        %v3200 = vadd.f32 %v3076, %v3147
        %v3201 = vadd.f32 %v3077, %v3150
        %v3202 = vadd.f32 %v3078, %v3152
        %v3203 = vadd.f32 %v3079, %v3155
        %v3204 = vadd.f32 %v3080, %v3157
        %v3205 = vadd.f32 %v3081, %v3160
        %v3206 = vadd.f32 %v3082, %v3162
        %v3207 = vadd.f32 %v3083, %v3165
        %v3208 = vadd.f32 %v3084, %v3167
        %v3209 = vadd.f32 %v3085, %v3170
        %v3210 = vadd.f32 %v3086, %v3172
        %v3211 = vadd.f32 %v3087, %v3175
        %v3212 = vadd.f32 %v3088, %v3177
        %v3213 = vadd.f32 %v3089, %v3180
        %v3214 = vadd.f32 %v3090, %v3182
        %v3215 = vld [vmem:[%s4] sm:$0x1]
        %v3217 = vlaneseq
        %v3218 = vshrl.u32 %v3217, 7
        %v3219 = vsub.s32 0, %v3218
        %v3220 = vrot.slane %v3215, %v3219
        %v3222 = vadd.f32 %v3199, %v3220
        %v3223 = vadd.f32 %v3200, %v3220
        %v3224 = vadd.f32 %v3201, %v3220
        %v3225 = vadd.f32 %v3202, %v3220
        %v3226 = vadd.f32 %v3203, %v3220
        %v3227 = vadd.f32 %v3204, %v3220
        %v3228 = vadd.f32 %v3205, %v3220
        %v3229 = vadd.f32 %v3206, %v3220
        %v3230 = vadd.f32 %v3207, %v3220
        %v3231 = vadd.f32 %v3208, %v3220
        %v3232 = vadd.f32 %v3209, %v3220
        %v3233 = vadd.f32 %v3210, %v3220
        %v3234 = vadd.f32 %v3211, %v3220
        %v3235 = vadd.f32 %v3212, %v3220
        %v3236 = vadd.f32 %v3213, %v3220
        %v3237 = vadd.f32 %v3214, %v3220
        %v3238 = vmax.f32 %v3222, 0.0
        %v3239 = vmax.f32 %v3223, 0.0
        %v3240 = vmax.f32 %v3224, 0.0
        %v3241 = vmax.f32 %v3225, 0.0
        %v3242 = vmax.f32 %v3226, 0.0
        %v3243 = vmax.f32 %v3227, 0.0
        %v3244 = vmax.f32 %v3228, 0.0
        %v3245 = vmax.f32 %v3229, 0.0
        %v3246 = vmax.f32 %v3230, 0.0
        %v3247 = vmax.f32 %v3231, 0.0
        %v3248 = vmax.f32 %v3232, 0.0
        %v3249 = vmax.f32 %v3233, 0.0
        %v3250 = vmax.f32 %v3234, 0.0
        %v3251 = vmax.f32 %v3235, 0.0
        %v3252 = vmax.f32 %v3236, 0.0
        %v3253 = vmax.f32 %v3237, 0.0
        %v3254 = vld [vmem:[%s5] sm:$0xff]
        %v3255 = vld [vmem:[%s5 + $0x8] sm:$0xff]
        %v3256 = vld [vmem:[%s5 + $0x10] sm:$0xff]
        %v3257 = vld [vmem:[%s5 + $0x18] sm:$0xff]
        %v3258 = vld [vmem:[%s5 + $0x20] sm:$0xff]
        %v3259 = vld [vmem:[%s5 + $0x28] sm:$0xff]
        %v3260 = vld [vmem:[%s5 + $0x30] sm:$0xff]
        %v3261 = vld [vmem:[%s5 + $0x38] sm:$0xff]
        %v3262 = vld [vmem:[%s5 + $0x40] sm:$0xff]
        %v3263 = vld [vmem:[%s5 + $0x48] sm:$0xff]
        %v3264 = vld [vmem:[%s5 + $0x50] sm:$0xff]
        %v3265 = vld [vmem:[%s5 + $0x58] sm:$0xff]
        %v3266 = vld [vmem:[%s5 + $0x60] sm:$0xff]
        %v3267 = vld [vmem:[%s5 + $0x68] sm:$0xff]
        %v3268 = vld [vmem:[%s5 + $0x70] sm:$0xff]
        %v3269 = vld [vmem:[%s5 + $0x78] sm:$0xff]
        %v3270 = vld [vmem:[%s6] sm:$0x1]
        %v3272 = vlaneseq
        %v3273 = vshrl.u32 %v3272, 7
        %v3274 = vsub.s32 0, %v3273
        %v3275 = vrot.slane %v3270, %v3274
        %3277 = vmatprep.subr.mxu0 0.0
        %3278 = vmatpush1.msra.mxu0 %v3254
        %3279 = vmatprep.subr.mxu0 0.0
        %3280 = vmatpush1.msra.mxu0 %v3255
        %3281 = vmatprep.subr.mxu0 0.0
        %3282 = vmatpush1.msra.mxu0 %v3256
        %3283 = vmatprep.subr.mxu0 0.0
        %3284 = vmatpush1.msra.mxu0 %v3257
        %3285 = vmatprep.subr.mxu0 0.0
        %3286 = vmatpush1.msra.mxu0 %v3258
        %3287 = vmatprep.subr.mxu0 0.0
        %3288 = vmatpush1.msra.mxu0 %v3259
        %3289 = vmatprep.subr.mxu0 0.0
        %3290 = vmatpush1.msra.mxu0 %v3260
        %3291 = vmatprep.subr.mxu0 0.0
        %3292 = vmatpush1.msra.mxu0 %v3261
        %3293 = vmatprep.subr.mxu0 0.0
        %3294 = vmatpush1.msra.mxu0 %v3262
        %3295 = vmatprep.subr.mxu0 0.0
        %3296 = vmatpush1.msra.mxu0 %v3263
        %3297 = vmatprep.subr.mxu0 0.0
        %3298 = vmatpush1.msra.mxu0 %v3264
        %3299 = vmatprep.subr.mxu0 0.0
        %3300 = vmatpush1.msra.mxu0 %v3265
        %3301 = vmatprep.subr.mxu0 0.0
        %3302 = vmatpush1.msra.mxu0 %v3266
        %3303 = vmatprep.subr.mxu0 0.0
        %3304 = vmatpush1.msra.mxu0 %v3267
        %3305 = vmatprep.subr.mxu0 0.0
        %3306 = vmatpush1.msra.mxu0 %v3268
        %3307 = vmatprep.subr.mxu0 0.0
        %3308 = vmatpush1.msra.mxu0 %v3269
        %3309 = vmatprep.subr.mxu0 0.0
        %3310 = vmatpush1.msra.mxu0 0.0
        %3311 = vmatprep.subr.mxu0 0.0
        %3312 = vmatpush1.msra.mxu0 0.0
        %3313 = vmatprep.subr.mxu0 0.0
        %3314 = vmatpush1.msra.mxu0 0.0
        %3315 = vmatprep.subr.mxu0 0.0
        %3316 = vmatpush1.msra.mxu0 0.0
        %3317 = vmatprep.subr.mxu0 0.0
        %3318 = vmatpush1.msra.mxu0 0.0
        %3319 = vmatprep.subr.mxu0 0.0
        %3320 = vmatpush1.msra.mxu0 0.0
        %3321 = vmatprep.subr.mxu0 0.0
        %3322 = vmatpush1.msra.mxu0 0.0
        %3323 = vmatprep.subr.mxu0 0.0
        %3324 = vmatpush1.msra.mxu0 0.0
        %3325 = vmatprep.subr.mxu0 0.0
        %3326 = vmatpush1.msra.mxu0 0.0
        %3327 = vmatprep.subr.mxu0 0.0
        %3328 = vmatpush1.msra.mxu0 0.0
        %3329 = vmatprep.subr.mxu0 0.0
        %3330 = vmatpush1.msra.mxu0 0.0
        %3331 = vmatprep.subr.mxu0 0.0
        %3332 = vmatpush1.msra.mxu0 0.0
        %3333 = vmatprep.subr.mxu0 0.0
        %3334 = vmatpush1.msra.mxu0 0.0
        %3335 = vmatprep.subr.mxu0 0.0
        %3336 = vmatpush1.msra.mxu0 0.0
        %3337 = vmatprep.subr.mxu0 0.0
        %3338 = vmatpush1.msra.mxu0 0.0
        %3339 = vmatprep.subr.mxu0 0.0
        %3340 = vmatpush1.msra.mxu0 0.0
        %3341 = vmatprep.mubr.f32.mxu0 0.0
        %3342 = vmatmul.mubr.f32.gmra.mrb[0].mxu0 %v3238
        %v3343 = vpop.f32.mrb[0].mxu0
        %v3344 = vadd.f32 %v3275, %v3343
        %v3345 = vpop.f32.mrb[0].mxu0
        %3346 = vmatprep.mubr.f32.mxu0 0.0
        %3347 = vmatmul.mubr.f32.gmra.mrb[0].mxu0 %v3239
        %v3348 = vpop.f32.mrb[0].mxu0
        %v3349 = vadd.f32 %v3275, %v3348
        %v3350 = vpop.f32.mrb[0].mxu0
        %3351 = vmatprep.mubr.f32.mxu0 0.0
        %3352 = vmatmul.mubr.f32.gmra.mrb[0].mxu0 %v3240
        %v3353 = vpop.f32.mrb[0].mxu0
        %v3354 = vadd.f32 %v3275, %v3353
        %v3355 = vpop.f32.mrb[0].mxu0
        %3356 = vmatprep.mubr.f32.mxu0 0.0
        %3357 = vmatmul.mubr.f32.gmra.mrb[0].mxu0 %v3241
        %v3358 = vpop.f32.mrb[0].mxu0
        %v3359 = vadd.f32 %v3275, %v3358
        %v3360 = vpop.f32.mrb[0].mxu0
        %3361 = vmatprep.mubr.f32.mxu0 0.0
        %3362 = vmatmul.mubr.f32.gmra.mrb[0].mxu0 %v3242
        %v3363 = vpop.f32.mrb[0].mxu0
        %v3364 = vadd.f32 %v3275, %v3363
        %v3365 = vpop.f32.mrb[0].mxu0
        %3366 = vmatprep.mubr.f32.mxu0 0.0
        %3367 = vmatmul.mubr.f32.gmra.mrb[0].mxu0 %v3243
        %v3368 = vpop.f32.mrb[0].mxu0
        %v3369 = vadd.f32 %v3275, %v3368
        %v3370 = vpop.f32.mrb[0].mxu0
        %3371 = vmatprep.mubr.f32.mxu0 0.0
        %3372 = vmatmul.mubr.f32.gmra.mrb[0].mxu0 %v3244
        %v3373 = vpop.f32.mrb[0].mxu0
        %v3374 = vadd.f32 %v3275, %v3373
        %v3375 = vpop.f32.mrb[0].mxu0
        %3376 = vmatprep.mubr.f32.mxu0 0.0
        %3377 = vmatmul.mubr.f32.gmra.mrb[0].mxu0 %v3245
        %v3378 = vpop.f32.mrb[0].mxu0
        %v3379 = vadd.f32 %v3275, %v3378
        %v3380 = vpop.f32.mrb[0].mxu0
        %3381 = vmatprep.mubr.f32.mxu0 0.0
        %3382 = vmatmul.mubr.f32.gmra.mrb[0].mxu0 %v3246
        %v3383 = vpop.f32.mrb[0].mxu0
        %v3384 = vadd.f32 %v3275, %v3383
        %v3385 = vpop.f32.mrb[0].mxu0
        %3386 = vmatprep.mubr.f32.mxu0 0.0
        %3387 = vmatmul.mubr.f32.gmra.mrb[0].mxu0 %v3247
        %v3388 = vpop.f32.mrb[0].mxu0
        %v3389 = vadd.f32 %v3275, %v3388
        %v3390 = vpop.f32.mrb[0].mxu0
        %3391 = vmatprep.mubr.f32.mxu0 0.0
        %3392 = vmatmul.mubr.f32.gmra.mrb[0].mxu0 %v3248
        %v3393 = vpop.f32.mrb[0].mxu0
        %v3394 = vadd.f32 %v3275, %v3393
        %v3395 = vpop.f32.mrb[0].mxu0
        %3396 = vmatprep.mubr.f32.mxu0 0.0
        %3397 = vmatmul.mubr.f32.gmra.mrb[0].mxu0 %v3249
        %v3398 = vpop.f32.mrb[0].mxu0
        %v3399 = vadd.f32 %v3275, %v3398
        %v3400 = vpop.f32.mrb[0].mxu0
        %3401 = vmatprep.mubr.f32.mxu0 0.0
        %3402 = vmatmul.mubr.f32.gmra.mrb[0].mxu0 %v3250
        %v3403 = vpop.f32.mrb[0].mxu0
        %v3404 = vadd.f32 %v3275, %v3403
        %v3405 = vpop.f32.mrb[0].mxu0
        %3406 = vmatprep.mubr.f32.mxu0 0.0
        %3407 = vmatmul.mubr.f32.gmra.mrb[0].mxu0 %v3251
        %v3408 = vpop.f32.mrb[0].mxu0
        %v3409 = vadd.f32 %v3275, %v3408
        %v3410 = vpop.f32.mrb[0].mxu0
        %3411 = vmatprep.mubr.f32.mxu0 0.0
        %3412 = vmatmul.mubr.f32.gmra.mrb[0].mxu0 %v3252
        %v3413 = vpop.f32.mrb[0].mxu0
        %v3414 = vadd.f32 %v3275, %v3413
        %v3415 = vpop.f32.mrb[0].mxu0
        %3416 = vmatprep.mubr.f32.mxu0 0.0
        %3417 = vmatmul.mubr.f32.gmra.mrb[0].mxu0 %v3253
        %v3418 = vpop.f32.mrb[0].mxu0
        %v3419 = vadd.f32 %v3275, %v3418
        %v3420 = vpop.f32.mrb[0].mxu0
        %3421 = vdwg.mxu0
        %v3422 = vrot.slane %v309, 1
        %v3423 = vrot.slane %v310, 1
        %v3424 = vsel %vm2449, %v3422, %v3423
        %v3425 = vrot.slane %v311, 1
        %v3426 = vsel %vm2449, %v3423, %v3425
        %v3427 = vrot.slane %v312, 1
        %v3428 = vrot.slane %v313, 1
        %v3429 = vsel %vm2449, %v3427, %v3428
        %v3430 = vrot.slane %v314, 1
        %v3431 = vsel %vm2449, %v3428, %v3430
        %v3432 = vrot.slane %v315, 1
        %v3433 = vrot.slane %v316, 1
        %v3434 = vsel %vm2449, %v3432, %v3433
        %v3435 = vrot.slane %v317, 1
        %v3436 = vsel %vm2449, %v3433, %v3435
        %v3437 = vrot.slane %v318, 1
        %v3438 = vrot.slane %v319, 1
        %v3439 = vsel %vm2449, %v3437, %v3438
        %v3440 = vrot.slane %v320, 1
        %v3441 = vsel %vm2449, %v3438, %v3440
        %v3442 = vrot.slane %v321, 1
        %v3443 = vrot.slane %v322, 1
        %v3444 = vsel %vm2449, %v3442, %v3443
        %v3445 = vrot.slane %v323, 1
        %v3446 = vsel %vm2449, %v3443, %v3445
        %v3447 = vrot.slane %v324, 1
        %v3448 = vrot.slane %v325, 1
        %v3449 = vsel %vm2449, %v3447, %v3448
        %v3450 = vrot.slane %v326, 1
        %v3451 = vsel %vm2449, %v3448, %v3450
        %v3452 = vrot.slane %v327, 1
        %v3453 = vrot.slane %v328, 1
        %v3454 = vsel %vm2449, %v3452, %v3453
        %v3455 = vrot.slane %v329, 1
        %v3456 = vsel %vm2449, %v3453, %v3455
        %v3457 = vrot.slane %v330, 1
        %v3458 = vrot.slane %v331, 1
        %v3459 = vsel %vm2449, %v3457, %v3458
        %v3460 = vrot.slane %v332, 1
        %v3461 = vsel %vm2449, %v3458, %v3460
        %v3478 = vadd.f32 %v3344, %v3424
        %v3479 = vadd.f32 %v3349, %v3426
        %v3480 = vadd.f32 %v3354, %v3429
        %v3481 = vadd.f32 %v3359, %v3431
        %v3482 = vadd.f32 %v3364, %v3434
        %v3483 = vadd.f32 %v3369, %v3436
        %v3484 = vadd.f32 %v3374, %v3439
        %v3485 = vadd.f32 %v3379, %v3441
        %v3486 = vadd.f32 %v3384, %v3444
        %v3487 = vadd.f32 %v3389, %v3446
        %v3488 = vadd.f32 %v3394, %v3449
        %v3489 = vadd.f32 %v3399, %v3451
        %v3490 = vadd.f32 %v3404, %v3454
        %v3491 = vadd.f32 %v3409, %v3456
        %v3492 = vadd.f32 %v3414, %v3459
        %v3493 = vadd.f32 %v3419, %v3461
        %3494 = vst.msk [vmem:[%s295] sm:$0xff] %vm1169, %v3478
        %3495 = vst.msk [vmem:[%s295 + $0x8] sm:$0xff] %vm1169, %v3479
        %3496 = vst.msk [vmem:[%s295 + $0x10] sm:$0xff] %vm1169, %v3480
        %3497 = vst.msk [vmem:[%s295 + $0x18] sm:$0xff] %vm1169, %v3481
        %3498 = vst.msk [vmem:[%s295 + $0x20] sm:$0xff] %vm1169, %v3482
        %3499 = vst.msk [vmem:[%s295 + $0x28] sm:$0xff] %vm1169, %v3483
        %3500 = vst.msk [vmem:[%s295 + $0x30] sm:$0xff] %vm1169, %v3484
        %3501 = vst.msk [vmem:[%s295 + $0x38] sm:$0xff] %vm1169, %v3485
        %3502 = vst.msk [vmem:[%s295 + $0x40] sm:$0xff] %vm1169, %v3486
        %3503 = vst.msk [vmem:[%s295 + $0x48] sm:$0xff] %vm1169, %v3487
        %3504 = vst.msk [vmem:[%s295 + $0x50] sm:$0xff] %vm1169, %v3488
        %3505 = vst.msk [vmem:[%s295 + $0x58] sm:$0xff] %vm1169, %v3489
        %3506 = vst.msk [vmem:[%s295 + $0x60] sm:$0xff] %vm1169, %v3490
        %3507 = vst.msk [vmem:[%s295 + $0x68] sm:$0xff] %vm1169, %v3491
        %3508 = vst.msk [vmem:[%s295 + $0x70] sm:$0xff] %vm1169, %v3492
        %3509 = vst.msk [vmem:[%s295 + $0x78] sm:$0xff] %vm1169, %v3493
        %s3510 = sand.u32 %s197, 1
        %s3511 = scalar_lea.sflag [#allocation4], %s3510
        %s3512 = sand.u32 %s197, 1
        %s3513 = smul.addr %s3512, 128
        %s3514 = scalar_lea.vmem [#allocation3], %s3513
        // Predicated region
        $region57: #{tpu_custom_call.1} parent=47 // pred_check
          %p3515 = pneg %p207
        $region58: #{tpu_custom_call.1} parent=47 // pred_check_branch
          %3517 = sbr.rel (%p3515) target = $region60
        $region59: #{tpu_custom_call.1} parent=47 // pred_region
          %s3518 = smul.u32 8, %s26
          %s3520 = ssub.s32 2048, 2048
          %3521 = vsyncadd %s3511, %s3520
          %s3522 = smul.addr %s3518, 2
          %s3523 = smul.addr %s25, 32
          %s3524 = sadd.s32 %s3522, %s3523
          %s3525 = smul.addr %s3524, 128
          %s3526 = scalar_lea.hbm %s7, %s3525
          %s3527 = sshll.u32 %s3514, 4
          %s3528 = int_to_ptr.vmem [resolvable:$true] %s3527
          %3533 = dma.vmem_to_hbm [thread:$0]  %s3528, 2048, %s3526, %s3511, 128, 128, 8
        $region60: #{tpu_custom_call.1} parent=47 // pred_fallthru
          _
      $region48: #{tpu_custom_call.1} parent=5 // pred_fallthru
        _
      %p3534 = scmp.le.s32.totalorder 2, %s16
      // Predicated region
      $region61: #{tpu_custom_call.1} parent=5 // pred_check
        %p3535 = pneg %p3534
      $region62: #{tpu_custom_call.1} parent=5 // pred_check_branch
        %3537 = sbr.rel (%p3535) target = $region64
      $region63: #{tpu_custom_call.1} parent=5 // pred_region
        %s3538 = ssub.s32 %s16, 2
        // Predicated region
        $region65: #{tpu_custom_call.1} parent=63 // pred_check
          %p3539 = pneg %p213
        $region66: #{tpu_custom_call.1} parent=63 // pred_check_branch
          %3541 = sbr.rel (%p3539) target = $region68
        $region67: #{tpu_custom_call.1} parent=63 // pred_region
          %s3542 = sand.u32 %s198, 1
          %s3543 = scalar_lea.sflag [#allocation4], %s3542
          %s3544 = sand.u32 %s198, 1
          %s3545 = smul.addr %s3544, 128
          %s3546 = scalar_lea.vmem [#allocation3], %s3545
          %3547 = dma.done %s3543, 2048
        $region68: #{tpu_custom_call.1} parent=63 // pred_fallthru
          _
      $region64: #{tpu_custom_call.1} parent=5 // pred_fallthru
        _
    $region6: #{tpu_custom_call.1} parent=1 // loop_footer
      %s20 = sadd.s32 1, %s16
    $region7: #{tpu_custom_call.1} parent=1 // loop_footer_branch
      %15 = sbr.rel target = $region3
    $region8: #{tpu_custom_call.1} parent=1 // loop_exit
      _
    %3548 = vsyncpa [#allocation4], 1
    %s3549 = scalar_lea.sflag [#allocation4], 1
    %3550 = vsyncpa %s3549, 1

</llo_original>
